<compile_context>
chip_gen: v7x
topology: tpu7x:2x2x1
jax: 0.10.0
libtpu: 0.0.40
codegen_flags: <defaults>
</compile_context>

<pallas_src>
import functools
import math

import jax
import jax.numpy as jnp
from jax.experimental import pallas as pl
from jax.experimental.pallas import tpu as pltpu


# ---------------------------------------------------------------------------
# helpers
# ---------------------------------------------------------------------------

def _round_up(x, m):
    return (x + m - 1) // m * m


def _row_tiling(n, max_tile=2048):
    """Pick a row tile for (n, C) pointwise kernels.

    Returns (tile, padded_n).  Prefers an exact divisor of n (no padding),
    requires tile % 8 == 0, and caps the tile so the grid has >= 2 steps
    whenever n allows it (keeps both v7x TensorCores busy) while the block
    VMEM footprint stays far below the v7x 64 MiB budget.
    """
    cap = min(max_tile, n)
    if n >= 16:
        cap = min(cap, n // 2)
    cap -= cap % 8
    for t in range(cap, 7, -8):
        if n % t == 0:
            return t, n
    # No clean divisor: pad the row count up to a multiple of the tile
    # instead of silently falling back to a full-extent block.
    t = min(max_tile, max(8, _round_up((n + 1) // 2, 8)))
    return t, _round_up(n, t)


def _pad_rows(x, n_pad):
    n = x.shape[0]
    if n_pad == n:
        return x
    return jnp.pad(x, ((0, n_pad - n), (0, 0)))


def _gelu_exact(y):
    # PyTorch F.gelu default = exact erf-based GELU (keep erf for parity).
    return 0.5 * y * (1.0 + jax.lax.erf(y * (1.0 / math.sqrt(2.0))))


# ---------------------------------------------------------------------------
# Pallas kernels
# ---------------------------------------------------------------------------

def _fc0_broadcast_kernel(x_ref, w_ref, b_ref, o_ref, *, cin):
    # Tiny-Cin linear as VPU broadcast multiply-adds (avoids a K=1 MXU dot).
    x = x_ref[...]
    w = w_ref[...]
    acc = x[:, 0:1] * w[0:1, :] + b_ref[...]
    for c in range(1, cin):
        acc = acc + x[:, c:c + 1] * w[c:c + 1, :]
    o_ref[...] = acc.astype(o_ref.dtype)


def _linear_kernel(x_ref, w_ref, b_ref, o_ref, *, apply_gelu):
    y = jnp.dot(x_ref[...], w_ref[...], preferred_element_type=jnp.float32)
    y = y + b_ref[...]
    if apply_gelu:
        y = _gelu_exact(y)
    o_ref[...] = y.astype(o_ref.dtype)


def _linear_residual_gelu_kernel(x_ref, w_ref, b_ref, r_ref, o_ref):
    # gelu( x @ w + b + residual ) -- fuses the 1x1 conv, the spectral-branch
    # add and the activation of one FNO layer.
    y = jnp.dot(x_ref[...], w_ref[...], preferred_element_type=jnp.float32)
    y = y + b_ref[...] + r_ref[...]
    o_ref[...] = _gelu_exact(y).astype(o_ref.dtype)


def _mlp_head_kernel(x_ref, w1_ref, b1_ref, w2_ref, b2_ref, o_ref, h_ref):
    # fc2( gelu( fc1(x) ) ) fused; (tm, 128) intermediate held in VMEM scratch.
    h = jnp.dot(x_ref[...], w1_ref[...], preferred_element_type=jnp.float32)
    h_ref[...] = _gelu_exact(h + b1_ref[...])
    y = jnp.dot(h_ref[...], w2_ref[...], preferred_element_type=jnp.float32)
    o_ref[...] = (y + b2_ref[...]).astype(o_ref.dtype)


def _spectral_modes_kernel(x_ref, w_ref, o_ref, *, n_modes):
    # All retained Fourier modes processed in a single grid step.  The complex
    # matmul is expressed as one real block matmul per mode:
    #   [xr | xi] (B, 2C)  @  [[wr, wi], [-wi, wr]] (2C, 2Co)  ->  [or | oi].
    # Statically unrolled over the (tiny) mode count.
    for m in range(n_modes):
        o_ref[m] = jnp.dot(
            x_ref[m], w_ref[m],
            preferred_element_type=jnp.float32).astype(o_ref.dtype)


# ---------------------------------------------------------------------------
# Pallas-call wrappers
# ---------------------------------------------------------------------------

def fc0_pointwise(x, w, b):
    """x: (N, Cin) with small Cin; w: (Cin, Cout); b: (Cout,) -> (N, Cout)."""
    N, Cin = x.shape
    Cout = w.shape[1]
    tm, n_pad = _row_tiling(N)
    xp = _pad_rows(x, n_pad)
    b2 = b.reshape(1, Cout)
    if Cin < 8:
        kernel = functools.partial(_fc0_broadcast_kernel, cin=Cin)
    else:
        kernel = functools.partial(_linear_kernel, apply_gelu=False)
    out = pl.pallas_call(
        kernel,
        out_shape=jax.ShapeDtypeStruct((n_pad, Cout), x.dtype),
        grid_spec=pltpu.PrefetchScalarGridSpec(
            num_scalar_prefetch=0,
            grid=(n_pad // tm,),
            in_specs=[
                pl.BlockSpec((tm, Cin), lambda i: (i, 0)),
                pl.BlockSpec((Cin, Cout), lambda i: (0, 0)),
                pl.BlockSpec((1, Cout), lambda i: (0, 0)),
            ],
            out_specs=pl.BlockSpec((tm, Cout), lambda i: (i, 0)),
        ),
        compiler_params=pltpu.CompilerParams(dimension_semantics=("parallel",)),
    )(xp, w, b2)
    return out[:N]


def linear_residual_gelu(x, w, b, residual):
    """gelu(x @ w + b + residual); x, residual: (N, C)."""
    N, Cin = x.shape
    Cout = w.shape[1]
    tm, n_pad = _row_tiling(N)
    xp = _pad_rows(x, n_pad)
    rp = _pad_rows(residual, n_pad)
    b2 = b.reshape(1, Cout)
    out = pl.pallas_call(
        _linear_residual_gelu_kernel,
        out_shape=jax.ShapeDtypeStruct((n_pad, Cout), x.dtype),
        grid_spec=pltpu.PrefetchScalarGridSpec(
            num_scalar_prefetch=0,
            grid=(n_pad // tm,),
            in_specs=[
                pl.BlockSpec((tm, Cin), lambda i: (i, 0)),
                pl.BlockSpec((Cin, Cout), lambda i: (0, 0)),
                pl.BlockSpec((1, Cout), lambda i: (0, 0)),
                pl.BlockSpec((tm, Cout), lambda i: (i, 0)),
            ],
            out_specs=pl.BlockSpec((tm, Cout), lambda i: (i, 0)),
        ),
        compiler_params=pltpu.CompilerParams(dimension_semantics=("parallel",)),
    )(xp, w, b2, rp)
    return out[:N]


def mlp_head(x, w1, b1, w2, b2):
    """Fused fc2(gelu(fc1(x))); x: (N, Cin) -> (N, Cout)."""
    N, Cin = x.shape
    Hid = w1.shape[1]
    Cout = w2.shape[1]
    tm, n_pad = _row_tiling(N)
    xp = _pad_rows(x, n_pad)
    b1r = b1.reshape(1, Hid)
    b2r = b2.reshape(1, Cout)
    out = pl.pallas_call(
        _mlp_head_kernel,
        out_shape=jax.ShapeDtypeStruct((n_pad, Cout), x.dtype),
        grid_spec=pltpu.PrefetchScalarGridSpec(
            num_scalar_prefetch=0,
            grid=(n_pad // tm,),
            in_specs=[
                pl.BlockSpec((tm, Cin), lambda i: (i, 0)),
                pl.BlockSpec((Cin, Hid), lambda i: (0, 0)),
                pl.BlockSpec((1, Hid), lambda i: (0, 0)),
                pl.BlockSpec((Hid, Cout), lambda i: (0, 0)),
                pl.BlockSpec((1, Cout), lambda i: (0, 0)),
            ],
            out_specs=pl.BlockSpec((tm, Cout), lambda i: (i, 0)),
            scratch_shapes=[pltpu.VMEM((tm, Hid), jnp.float32)],
        ),
        compiler_params=pltpu.CompilerParams(dimension_semantics=("parallel",)),
    )(xp, w1, b1r, w2, b2r)
    return out[:N]


def spectral_mode_matmul(x_blk, w_blk):
    """Block-complex matmul over all retained modes in one grid step.

    x_blk: (M, B, 2*Cin) = [xr | xi];  w_blk: (M, 2*Cin, 2*Cout) block weight.
    Returns (M, B, 2*Cout) = [or | oi].
    """
    M, B, K2 = x_blk.shape
    Co2 = w_blk.shape[2]
    kernel = functools.partial(_spectral_modes_kernel, n_modes=M)
    return pl.pallas_call(
        kernel,
        out_shape=jax.ShapeDtypeStruct((M, B, Co2), jnp.float32),
        grid_spec=pltpu.PrefetchScalarGridSpec(
            num_scalar_prefetch=0,
            grid=(1,),
            in_specs=[
                pl.BlockSpec((M, B, K2), lambda i: (0, 0, 0)),
                pl.BlockSpec((M, K2, Co2), lambda i: (0, 0, 0)),
            ],
            out_specs=pl.BlockSpec((M, B, Co2), lambda i: (0, 0, 0)),
        ),
        compiler_params=pltpu.CompilerParams(dimension_semantics=("arbitrary",)),
    )(x_blk, w_blk)


# ---------------------------------------------------------------------------
# FNO building blocks
# ---------------------------------------------------------------------------

def spectral_conv2d_nhwc(x_nhwc, w1):
    """SpectralConv2d.forward on channels-last input.

    x_nhwc: (B, H, W, C);  w1: (C, Co, m1, m2, 2).  Returns (B, H, W, Co).
    Only the low-frequency [:m1, :m2] corner is mixed, exactly as in the
    reference forward (weights2 is defined there but never used).
    """
    B, H, W, C = x_nhwc.shape
    Co, m1, m2 = w1.shape[1], w1.shape[2], w1.shape[3]

    # TODO(synk): rfft2/irfft2 have no Pallas TPU primitive; they stay in XLA.
    x_ft = jnp.fft.rfft2(x_nhwc, axes=(1, 2))          # (B, H, W//2+1, C) c64
    x_modes = x_ft[:, :m1, :m2, :]                     # (B, m1, m2, C)

    # Tiny (M, B, C) real/imag planes -> [xr | xi].
    xr = jnp.transpose(jnp.real(x_modes), (1, 2, 0, 3)).reshape(m1 * m2, B, C)
    xi = jnp.transpose(jnp.imag(x_modes), (1, 2, 0, 3)).reshape(m1 * m2, B, C)
    x_blk = jnp.concatenate([xr, xi], axis=-1).astype(jnp.float32)  # (M,B,2C)

    # (C, Co, m1, m2) -> (M, C, Co); block weight [[wr, wi], [-wi, wr]].
    wr = jnp.transpose(w1[..., 0], (2, 3, 0, 1)).reshape(m1 * m2, C, Co)
    wi = jnp.transpose(w1[..., 1], (2, 3, 0, 1)).reshape(m1 * m2, C, Co)
    w_blk = jnp.concatenate(
        [jnp.concatenate([wr, wi], axis=-1),
         jnp.concatenate([-wi, wr], axis=-1)], axis=1)              # (M,2C,2Co)

    out_blk = spectral_mode_matmul(x_blk, w_blk)                    # (M,B,2Co)
    out_r, out_i = out_blk[..., :Co], out_blk[..., Co:]
    out_modes = (out_r + 1j * out_i).astype(jnp.complex64)
    out_modes = out_modes.reshape(m1, m2, B, Co).transpose(2, 0, 1, 3)

    # Pad (not zeros + scatter) up to the full half-spectrum, then inverse FFT.
    out_ft = jnp.pad(out_modes,
                     ((0, 0), (0, H - m1), (0, W // 2 + 1 - m2), (0, 0)))
    return jnp.fft.irfft2(out_ft, s=(H, W), axes=(1, 2)).astype(jnp.float32)


def init_params(key, modes1, modes2, width, in_channels, out_channels, n_layers):
    """Deterministic synthetic parameters (PyTorch shapes, matmul layout).

    Linear / 1x1-conv weights are stored pre-transposed as (Cin, Cout) so the
    kernels compute x @ w + b.
    """
    ks = jax.random.split(key, 3 + n_layers)

    def lin(k, fan_in, fan_out):
        kw, kb = jax.random.split(k)
        bound = 1.0 / math.sqrt(fan_in)
        w = jax.random.uniform(kw, (fan_in, fan_out), jnp.float32, -bound, bound)
        b = jax.random.uniform(kb, (fan_out,), jnp.float32, -bound, bound)
        return w, b

    p = {}
    p["fc0_w"], p["fc0_b"] = lin(ks[0], in_channels, width)
    p["fc1_w"], p["fc1_b"] = lin(ks[1], width, 128)
    p["fc2_w"], p["fc2_b"] = lin(ks[2], 128, out_channels)

    scale = 1.0 / (width * width)
    spec_w1, conv_w, conv_b = [], [], []
    for i in range(n_layers):
        k1, k2 = jax.random.split(ks[3 + i])
        # SpectralConv2d also defines weights2 but never uses it in forward,
        # so it is not materialized here.
        spec_w1.append(
            scale * jax.random.uniform(
                k1, (width, width, modes1, modes2, 2), jnp.float32))
        w, b = lin(k2, width, width)
        conv_w.append(w)
        conv_b.append(b)
    p["spec_w1"] = spec_w1
    p["conv_w"] = conv_w
    p["conv_b"] = conv_b
    return p


def fno2d_forward(params, x, n_layers):
    """FNO2d.forward.  x: (B, Cin, H, W) or (B, H, W).  Returns (B, Cout, H, W)."""
    if x.ndim == 3:
        x = x[:, None, :, :]
    B, Cin, H, W = x.shape
    width = params["fc0_w"].shape[1]
    N = B * H * W

    # Single NCHW -> NHWC layout change at the boundary; everything below is
    # channels-last, viewed as (N, C) row matrices (reshapes only, no copies).
    x_flat = jnp.transpose(x, (0, 2, 3, 1)).reshape(N, Cin)
    x_flat = fc0_pointwise(x_flat, params["fc0_w"], params["fc0_b"])  # (N,width)

    for i in range(n_layers):
        x_nhwc = x_flat.reshape(B, H, W, width)
        x1_flat = spectral_conv2d_nhwc(
            x_nhwc, params["spec_w1"][i]).reshape(N, width)
        # x = gelu( conv1x1(x) + spectral(x) )  -- fused Pallas kernel
        x_flat = linear_residual_gelu(
            x_flat, params["conv_w"][i], params["conv_b"][i], x1_flat)

    out_flat = mlp_head(x_flat, params["fc1_w"], params["fc1_b"],
                        params["fc2_w"], params["fc2_b"])             # (N,Cout)
    return out_flat.reshape(B, H, W, -1).transpose(0, 3, 1, 2)


# ---------------------------------------------------------------------------
# Main
# ---------------------------------------------------------------------------

if __name__ == "__main__":
    modes1 = modes2 = 4
    width = 32
    in_channels = 1
    out_channels = 1
    n_layers = 4
    B, H, W = 2, 16, 16

    key = jax.random.PRNGKey(0)
    k_param, k_x = jax.random.split(key)
    params = init_params(k_param, modes1, modes2, width,
                         in_channels, out_channels, n_layers)
    x = jax.random.normal(k_x, (B, in_channels, H, W), dtype=jnp.float32)

    fwd = jax.jit(functools.partial(fno2d_forward, n_layers=n_layers))
    out = jax.block_until_ready(fwd(params, x))

    assert out.shape == (B, out_channels, H, W), out.shape
    assert out.dtype == jnp.float32
    assert bool(jnp.all(jnp.isfinite(out)))
    print("KERNEL_OK")
</pallas_src>

<mosaic_0001>
module attributes {stable_mosaic.version = 11 : i64} {
  func.func @_fc0_broadcast_kernel(%arg0: i32, %arg1: memref<256x1xf32, #tpu.memory_space<vmem>>, %arg2: memref<1x32xf32, #tpu.memory_space<vmem>>, %arg3: memref<1x32xf32, #tpu.memory_space<vmem>>, %arg4: memref<256x32xf32, #tpu.memory_space<vmem>>) attributes {dimension_semantics = [#tpu.dimension_semantics<parallel>], iteration_bounds = array<i64: 2>, scalar_prefetch = 0 : i64, scratch_operands = 0 : i64, tpu.core_type = #tpu.core_type<tc>, window_params = [{transform_indices = @transform_0, window_bounds = array<i64: 256, 1>}, {pipeline_mode = #tpu.pipeline_mode<synchronous>, transform_indices = @transform_1, window_bounds = array<i64: 1, 32>}, {pipeline_mode = #tpu.pipeline_mode<synchronous>, transform_indices = @transform_2, window_bounds = array<i64: 1, 32>}, {transform_indices = @transform_3, window_bounds = array<i64: 256, 32>}]} {
    %c0 = arith.constant 0 : index
    %c0_0 = arith.constant 0 : index
    %0 = vector.load %arg1[%c0, %c0_0] : memref<256x1xf32, #tpu.memory_space<vmem>>, vector<256x1xf32>
    %c0_1 = arith.constant 0 : index
    %c0_2 = arith.constant 0 : index
    %1 = vector.load %arg2[%c0_1, %c0_2] : memref<1x32xf32, #tpu.memory_space<vmem>>, vector<1x32xf32>
    %2 = vector.broadcast %0 : vector<256x1xf32> to vector<256x32xf32>
    %3 = vector.broadcast %1 : vector<1x32xf32> to vector<256x32xf32>
    %4 = arith.mulf %2, %3 : vector<256x32xf32>
    %c0_3 = arith.constant 0 : index
    %c0_4 = arith.constant 0 : index
    %5 = vector.load %arg3[%c0_3, %c0_4] : memref<1x32xf32, #tpu.memory_space<vmem>>, vector<1x32xf32>
    %6 = vector.broadcast %5 : vector<1x32xf32> to vector<256x32xf32>
    %7 = arith.addf %4, %6 : vector<256x32xf32>
    %c0_5 = arith.constant 0 : index
    %c0_6 = arith.constant 0 : index
    %8 = vector.load %arg4[%c0_5, %c0_6] : memref<256x32xf32, #tpu.memory_space<vmem>>, vector<256x32xf32>
    tpu.vector_store %arg4[%c0_5, %c0_6], %7 {strides = array<i32>} : memref<256x32xf32, #tpu.memory_space<vmem>>, vector<256x32xf32>,
    return
  }
  func.func @transform_0(%arg0: i32) -> (i32, i32) {
    %c0_i32 = arith.constant 0 : i32
    %c0_i32_0 = arith.constant 0 : i32
    return %arg0, %c0_i32 : i32, i32
  }
  func.func @transform_1(%arg0: i32) -> (i32, i32) {
    %c0_i32 = arith.constant 0 : i32
    %c0_i32_0 = arith.constant 0 : i32
    %c0_i32_1 = arith.constant 0 : i32
    return %c0_i32, %c0_i32_0 : i32, i32
  }
  func.func @transform_2(%arg0: i32) -> (i32, i32) {
    %c0_i32 = arith.constant 0 : i32
    %c0_i32_0 = arith.constant 0 : i32
    %c0_i32_1 = arith.constant 0 : i32
    return %c0_i32, %c0_i32_0 : i32, i32
  }
  func.func @transform_3(%arg0: i32) -> (i32, i32) {
    %c0_i32 = arith.constant 0 : i32
    %c0_i32_0 = arith.constant 0 : i32
    return %arg0, %c0_i32 : i32, i32
  }
}

module attributes {stable_mosaic.version = 11 : i64} {
  func.func @_spectral_modes_kernel(%arg0: i32, %arg1: memref<16x2x64xf32, #tpu.memory_space<vmem>>, %arg2: memref<16x64x64xf32, #tpu.memory_space<vmem>>, %arg3: memref<16x2x64xf32, #tpu.memory_space<vmem>>) attributes {dimension_semantics = [#tpu.dimension_semantics<arbitrary>], iteration_bounds = array<i64: 1>, scalar_prefetch = 0 : i64, scratch_operands = 0 : i64, tpu.core_type = #tpu.core_type<tc>, window_params = [{pipeline_mode = #tpu.pipeline_mode<synchronous>, transform_indices = @transform_0, window_bounds = array<i64: 16, 2, 64>}, {pipeline_mode = #tpu.pipeline_mode<synchronous>, transform_indices = @transform_1, window_bounds = array<i64: 16, 64, 64>}, {pipeline_mode = #tpu.pipeline_mode<synchronous>, transform_indices = @transform_2, window_bounds = array<i64: 16, 2, 64>}]} {
    %c0 = arith.constant 0 : index
    %c0_0 = arith.constant 0 : index
    %c0_1 = arith.constant 0 : index
    %0 = vector.load %arg1[%c0, %c0_0, %c0_1] : memref<16x2x64xf32, #tpu.memory_space<vmem>>, vector<1x2x64xf32>
    %1 = vector.shape_cast %0 : vector<1x2x64xf32> to vector<2x64xf32>
    %c0_2 = arith.constant 0 : index
    %c0_3 = arith.constant 0 : index
    %c0_4 = arith.constant 0 : index
    %2 = vector.load %arg2[%c0_2, %c0_3, %c0_4] : memref<16x64x64xf32, #tpu.memory_space<vmem>>, vector<1x64x64xf32>
    %3 = vector.shape_cast %2 : vector<1x64x64xf32> to vector<64x64xf32>
    %cst = arith.constant dense<0.000000e+00> : vector<2x64xf32>
    %4 = tpu.matmul %1, %3, %cst {dimension_numbers = #tpu.dot_dimension_numbers<[1], [0], [0], [1], [0, 0, 1, 1], [], []>} : vector<2x64xf32>, vector<64x64xf32>, vector<2x64xf32> -> vector<2x64xf32>
    %c0_5 = arith.constant 0 : index
    %c0_6 = arith.constant 0 : index
    %c0_7 = arith.constant 0 : index
    %5 = vector.load %arg3[%c0_5, %c0_6, %c0_7] : memref<16x2x64xf32, #tpu.memory_space<vmem>>, vector<1x2x64xf32>
    %6 = vector.shape_cast %5 : vector<1x2x64xf32> to vector<2x64xf32>
    %7 = vector.shape_cast %4 : vector<2x64xf32> to vector<1x2x64xf32>
    tpu.vector_store %arg3[%c0_5, %c0_6, %c0_7], %7 {strides = array<i32>} : memref<16x2x64xf32, #tpu.memory_space<vmem>>, vector<1x2x64xf32>,
    %c1 = arith.constant 1 : index
    %c0_8 = arith.constant 0 : index
    %c0_9 = arith.constant 0 : index
    %8 = vector.load %arg1[%c1, %c0_8, %c0_9] : memref<16x2x64xf32, #tpu.memory_space<vmem>>, vector<1x2x64xf32>
    %9 = vector.shape_cast %8 : vector<1x2x64xf32> to vector<2x64xf32>
    %c1_10 = arith.constant 1 : index
    %c0_11 = arith.constant 0 : index
    %c0_12 = arith.constant 0 : index
    %10 = vector.load %arg2[%c1_10, %c0_11, %c0_12] : memref<16x64x64xf32, #tpu.memory_space<vmem>>, vector<1x64x64xf32>
    %11 = vector.shape_cast %10 : vector<1x64x64xf32> to vector<64x64xf32>
    %cst_13 = arith.constant dense<0.000000e+00> : vector<2x64xf32>
    %12 = tpu.matmul %9, %11, %cst_13 {dimension_numbers = #tpu.dot_dimension_numbers<[1], [0], [0], [1], [0, 0, 1, 1], [], []>} : vector<2x64xf32>, vector<64x64xf32>, vector<2x64xf32> -> vector<2x64xf32>
    %c1_14 = arith.constant 1 : index
    %c0_15 = arith.constant 0 : index
    %c0_16 = arith.constant 0 : index
    %13 = vector.load %arg3[%c1_14, %c0_15, %c0_16] : memref<16x2x64xf32, #tpu.memory_space<vmem>>, vector<1x2x64xf32>
    %14 = vector.shape_cast %13 : vector<1x2x64xf32> to vector<2x64xf32>
    %15 = vector.shape_cast %12 : vector<2x64xf32> to vector<1x2x64xf32>
    tpu.vector_store %arg3[%c1_14, %c0_15, %c0_16], %15 {strides = array<i32>} : memref<16x2x64xf32, #tpu.memory_space<vmem>>, vector<1x2x64xf32>,
    %c2 = arith.constant 2 : index
    %c0_17 = arith.constant 0 : index
    %c0_18 = arith.constant 0 : index
    %16 = vector.load %arg1[%c2, %c0_17, %c0_18] : memref<16x2x64xf32, #tpu.memory_space<vmem>>, vector<1x2x64xf32>
    %17 = vector.shape_cast %16 : vector<1x2x64xf32> to vector<2x64xf32>
    %c2_19 = arith.constant 2 : index
    %c0_20 = arith.constant 0 : index
    %c0_21 = arith.constant 0 : index
    %18 = vector.load %arg2[%c2_19, %c0_20, %c0_21] : memref<16x64x64xf32, #tpu.memory_space<vmem>>, vector<1x64x64xf32>
    %19 = vector.shape_cast %18 : vector<1x64x64xf32> to vector<64x64xf32>
    %cst_22 = arith.constant dense<0.000000e+00> : vector<2x64xf32>
    %20 = tpu.matmul %17, %19, %cst_22 {dimension_numbers = #tpu.dot_dimension_numbers<[1], [0], [0], [1], [0, 0, 1, 1], [], []>} : vector<2x64xf32>, vector<64x64xf32>, vector<2x64xf32> -> vector<2x64xf32>
    %c2_23 = arith.constant 2 : index
    %c0_24 = arith.constant 0 : index
    %c0_25 = arith.constant 0 : index
    %21 = vector.load %arg3[%c2_23, %c0_24, %c0_25] : memref<16x2x64xf32, #tpu.memory_space<vmem>>, vector<1x2x64xf32>
    %22 = vector.shape_cast %21 : vector<1x2x64xf32> to vector<2x64xf32>
    %23 = vector.shape_cast %20 : vector<2x64xf32> to vector<1x2x64xf32>
    tpu.vector_store %arg3[%c2_23, %c0_24, %c0_25], %23 {strides = array<i32>} : memref<16x2x64xf32, #tpu.memory_space<vmem>>, vector<1x2x64xf32>,
    %c3 = arith.constant 3 : index
    %c0_26 = arith.constant 0 : index
    %c0_27 = arith.constant 0 : index
    %24 = vector.load %arg1[%c3, %c0_26, %c0_27] : memref<16x2x64xf32, #tpu.memory_space<vmem>>, vector<1x2x64xf32>
    %25 = vector.shape_cast %24 : vector<1x2x64xf32> to vector<2x64xf32>
    %c3_28 = arith.constant 3 : index
    %c0_29 = arith.constant 0 : index
    %c0_30 = arith.constant 0 : index
    %26 = vector.load %arg2[%c3_28, %c0_29, %c0_30] : memref<16x64x64xf32, #tpu.memory_space<vmem>>, vector<1x64x64xf32>
    %27 = vector.shape_cast %26 : vector<1x64x64xf32> to vector<64x64xf32>
    %cst_31 = arith.constant dense<0.000000e+00> : vector<2x64xf32>
    %28 = tpu.matmul %25, %27, %cst_31 {dimension_numbers = #tpu.dot_dimension_numbers<[1], [0], [0], [1], [0, 0, 1, 1], [], []>} : vector<2x64xf32>, vector<64x64xf32>, vector<2x64xf32> -> vector<2x64xf32>
    %c3_32 = arith.constant 3 : index
    %c0_33 = arith.constant 0 : index
    %c0_34 = arith.constant 0 : index
    %29 = vector.load %arg3[%c3_32, %c0_33, %c0_34] : memref<16x2x64xf32, #tpu.memory_space<vmem>>, vector<1x2x64xf32>
    %30 = vector.shape_cast %29 : vector<1x2x64xf32> to vector<2x64xf32>
    %31 = vector.shape_cast %28 : vector<2x64xf32> to vector<1x2x64xf32>
    tpu.vector_store %arg3[%c3_32, %c0_33, %c0_34], %31 {strides = array<i32>} : memref<16x2x64xf32, #tpu.memory_space<vmem>>, vector<1x2x64xf32>,
    %c4 = arith.constant 4 : index
    %c0_35 = arith.constant 0 : index
    %c0_36 = arith.constant 0 : index
    %32 = vector.load %arg1[%c4, %c0_35, %c0_36] : memref<16x2x64xf32, #tpu.memory_space<vmem>>, vector<1x2x64xf32>
    %33 = vector.shape_cast %32 : vector<1x2x64xf32> to vector<2x64xf32>
    %c4_37 = arith.constant 4 : index
    %c0_38 = arith.constant 0 : index
    %c0_39 = arith.constant 0 : index
    %34 = vector.load %arg2[%c4_37, %c0_38, %c0_39] : memref<16x64x64xf32, #tpu.memory_space<vmem>>, vector<1x64x64xf32>
    %35 = vector.shape_cast %34 : vector<1x64x64xf32> to vector<64x64xf32>
    %cst_40 = arith.constant dense<0.000000e+00> : vector<2x64xf32>
    %36 = tpu.matmul %33, %35, %cst_40 {dimension_numbers = #tpu.dot_dimension_numbers<[1], [0], [0], [1], [0, 0, 1, 1], [], []>} : vector<2x64xf32>, vector<64x64xf32>, vector<2x64xf32> -> vector<2x64xf32>
    %c4_41 = arith.constant 4 : index
    %c0_42 = arith.constant 0 : index
    %c0_43 = arith.constant 0 : index
    %37 = vector.load %arg3[%c4_41, %c0_42, %c0_43] : memref<16x2x64xf32, #tpu.memory_space<vmem>>, vector<1x2x64xf32>
    %38 = vector.shape_cast %37 : vector<1x2x64xf32> to vector<2x64xf32>
    %39 = vector.shape_cast %36 : vector<2x64xf32> to vector<1x2x64xf32>
    tpu.vector_store %arg3[%c4_41, %c0_42, %c0_43], %39 {strides = array<i32>} : memref<16x2x64xf32, #tpu.memory_space<vmem>>, vector<1x2x64xf32>,
    %c5 = arith.constant 5 : index
    %c0_44 = arith.constant 0 : index
    %c0_45 = arith.constant 0 : index
    %40 = vector.load %arg1[%c5, %c0_44, %c0_45] : memref<16x2x64xf32, #tpu.memory_space<vmem>>, vector<1x2x64xf32>
    %41 = vector.shape_cast %40 : vector<1x2x64xf32> to vector<2x64xf32>
    %c5_46 = arith.constant 5 : index
    %c0_47 = arith.constant 0 : index
    %c0_48 = arith.constant 0 : index
    %42 = vector.load %arg2[%c5_46, %c0_47, %c0_48] : memref<16x64x64xf32, #tpu.memory_space<vmem>>, vector<1x64x64xf32>
    %43 = vector.shape_cast %42 : vector<1x64x64xf32> to vector<64x64xf32>
    %cst_49 = arith.constant dense<0.000000e+00> : vector<2x64xf32>
    %44 = tpu.matmul %41, %43, %cst_49 {dimension_numbers = #tpu.dot_dimension_numbers<[1], [0], [0], [1], [0, 0, 1, 1], [], []>} : vector<2x64xf32>, vector<64x64xf32>, vector<2x64xf32> -> vector<2x64xf32>
    %c5_50 = arith.constant 5 : index
    %c0_51 = arith.constant 0 : index
    %c0_52 = arith.constant 0 : index
    %45 = vector.load %arg3[%c5_50, %c0_51, %c0_52] : memref<16x2x64xf32, #tpu.memory_space<vmem>>, vector<1x2x64xf32>
    %46 = vector.shape_cast %45 : vector<1x2x64xf32> to vector<2x64xf32>
    %47 = vector.shape_cast %44 : vector<2x64xf32> to vector<1x2x64xf32>
    tpu.vector_store %arg3[%c5_50, %c0_51, %c0_52], %47 {strides = array<i32>} : memref<16x2x64xf32, #tpu.memory_space<vmem>>, vector<1x2x64xf32>,
    %c6 = arith.constant 6 : index
    %c0_53 = arith.constant 0 : index
    %c0_54 = arith.constant 0 : index
    %48 = vector.load %arg1[%c6, %c0_53, %c0_54] : memref<16x2x64xf32, #tpu.memory_space<vmem>>, vector<1x2x64xf32>
    %49 = vector.shape_cast %48 : vector<1x2x64xf32> to vector<2x64xf32>
    %c6_55 = arith.constant 6 : index
    %c0_56 = arith.constant 0 : index
    %c0_57 = arith.constant 0 : index
    %50 = vector.load %arg2[%c6_55, %c0_56, %c0_57] : memref<16x64x64xf32, #tpu.memory_space<vmem>>, vector<1x64x64xf32>
    %51 = vector.shape_cast %50 : vector<1x64x64xf32> to vector<64x64xf32>
    %cst_58 = arith.constant dense<0.000000e+00> : vector<2x64xf32>
    %52 = tpu.matmul %49, %51, %cst_58 {dimension_numbers = #tpu.dot_dimension_numbers<[1], [0], [0], [1], [0, 0, 1, 1], [], []>} : vector<2x64xf32>, vector<64x64xf32>, vector<2x64xf32> -> vector<2x64xf32>
    %c6_59 = arith.constant 6 : index
    %c0_60 = arith.constant 0 : index
    %c0_61 = arith.constant 0 : index
    %53 = vector.load %arg3[%c6_59, %c0_60, %c0_61] : memref<16x2x64xf32, #tpu.memory_space<vmem>>, vector<1x2x64xf32>
    %54 = vector.shape_cast %53 : vector<1x2x64xf32> to vector<2x64xf32>
    %55 = vector.shape_cast %52 : vector<2x64xf32> to vector<1x2x64xf32>
    tpu.vector_store %arg3[%c6_59, %c0_60, %c0_61], %55 {strides = array<i32>} : memref<16x2x64xf32, #tpu.memory_space<vmem>>, vector<1x2x64xf32>,
    %c7 = arith.constant 7 : index
    %c0_62 = arith.constant 0 : index
    %c0_63 = arith.constant 0 : index
    %56 = vector.load %arg1[%c7, %c0_62, %c0_63] : memref<16x2x64xf32, #tpu.memory_space<vmem>>, vector<1x2x64xf32>
    %57 = vector.shape_cast %56 : vector<1x2x64xf32> to vector<2x64xf32>
    %c7_64 = arith.constant 7 : index
    %c0_65 = arith.constant 0 : index
    %c0_66 = arith.constant 0 : index
    %58 = vector.load %arg2[%c7_64, %c0_65, %c0_66] : memref<16x64x64xf32, #tpu.memory_space<vmem>>, vector<1x64x64xf32>
    %59 = vector.shape_cast %58 : vector<1x64x64xf32> to vector<64x64xf32>
    %cst_67 = arith.constant dense<0.000000e+00> : vector<2x64xf32>
    %60 = tpu.matmul %57, %59, %cst_67 {dimension_numbers = #tpu.dot_dimension_numbers<[1], [0], [0], [1], [0, 0, 1, 1], [], []>} : vector<2x64xf32>, vector<64x64xf32>, vector<2x64xf32> -> vector<2x64xf32>
    %c7_68 = arith.constant 7 : index
    %c0_69 = arith.constant 0 : index
    %c0_70 = arith.constant 0 : index
    %61 = vector.load %arg3[%c7_68, %c0_69, %c0_70] : memref<16x2x64xf32, #tpu.memory_space<vmem>>, vector<1x2x64xf32>
    %62 = vector.shape_cast %61 : vector<1x2x64xf32> to vector<2x64xf32>
    %63 = vector.shape_cast %60 : vector<2x64xf32> to vector<1x2x64xf32>
    tpu.vector_store %arg3[%c7_68, %c0_69, %c0_70], %63 {strides = array<i32>} : memref<16x2x64xf32, #tpu.memory_space<vmem>>, vector<1x2x64xf32>,
    %c8 = arith.constant 8 : index
    %c0_71 = arith.constant 0 : index
    %c0_72 = arith.constant 0 : index
    %64 = vector.load %arg1[%c8, %c0_71, %c0_72] : memref<16x2x64xf32, #tpu.memory_space<vmem>>, vector<1x2x64xf32>
    %65 = vector.shape_cast %64 : vector<1x2x64xf32> to vector<2x64xf32>
    %c8_73 = arith.constant 8 : index
    %c0_74 = arith.constant 0 : index
    %c0_75 = arith.constant 0 : index
    %66 = vector.load %arg2[%c8_73, %c0_74, %c0_75] : memref<16x64x64xf32, #tpu.memory_space<vmem>>, vector<1x64x64xf32>
    %67 = vector.shape_cast %66 : vector<1x64x64xf32> to vector<64x64xf32>
    %cst_76 = arith.constant dense<0.000000e+00> : vector<2x64xf32>
    %68 = tpu.matmul %65, %67, %cst_76 {dimension_numbers = #tpu.dot_dimension_numbers<[1], [0], [0], [1], [0, 0, 1, 1], [], []>} : vector<2x64xf32>, vector<64x64xf32>, vector<2x64xf32> -> vector<2x64xf32>
    %c8_77 = arith.constant 8 : index
    %c0_78 = arith.constant 0 : index
    %c0_79 = arith.constant 0 : index
    %69 = vector.load %arg3[%c8_77, %c0_78, %c0_79] : memref<16x2x64xf32, #tpu.memory_space<vmem>>, vector<1x2x64xf32>
    %70 = vector.shape_cast %69 : vector<1x2x64xf32> to vector<2x64xf32>
    %71 = vector.shape_cast %68 : vector<2x64xf32> to vector<1x2x64xf32>
    tpu.vector_store %arg3[%c8_77, %c0_78, %c0_79], %71 {strides = array<i32>} : memref<16x2x64xf32, #tpu.memory_space<vmem>>, vector<1x2x64xf32>,
    %c9 = arith.constant 9 : index
    %c0_80 = arith.constant 0 : index
    %c0_81 = arith.constant 0 : index
    %72 = vector.load %arg1[%c9, %c0_80, %c0_81] : memref<16x2x64xf32, #tpu.memory_space<vmem>>, vector<1x2x64xf32>
    %73 = vector.shape_cast %72 : vector<1x2x64xf32> to vector<2x64xf32>
    %c9_82 = arith.constant 9 : index
    %c0_83 = arith.constant 0 : index
    %c0_84 = arith.constant 0 : index
    %74 = vector.load %arg2[%c9_82, %c0_83, %c0_84] : memref<16x64x64xf32, #tpu.memory_space<vmem>>, vector<1x64x64xf32>
    %75 = vector.shape_cast %74 : vector<1x64x64xf32> to vector<64x64xf32>
    %cst_85 = arith.constant dense<0.000000e+00> : vector<2x64xf32>
    %76 = tpu.matmul %73, %75, %cst_85 {dimension_numbers = #tpu.dot_dimension_numbers<[1], [0], [0], [1], [0, 0, 1, 1], [], []>} : vector<2x64xf32>, vector<64x64xf32>, vector<2x64xf32> -> vector<2x64xf32>
    %c9_86 = arith.constant 9 : index
    %c0_87 = arith.constant 0 : index
    %c0_88 = arith.constant 0 : index
    %77 = vector.load %arg3[%c9_86, %c0_87, %c0_88] : memref<16x2x64xf32, #tpu.memory_space<vmem>>, vector<1x2x64xf32>
    %78 = vector.shape_cast %77 : vector<1x2x64xf32> to vector<2x64xf32>
    %79 = vector.shape_cast %76 : vector<2x64xf32> to vector<1x2x64xf32>
    tpu.vector_store %arg3[%c9_86, %c0_87, %c0_88], %79 {strides = array<i32>} : memref<16x2x64xf32, #tpu.memory_space<vmem>>, vector<1x2x64xf32>,
    %c10 = arith.constant 10 : index
    %c0_89 = arith.constant 0 : index
    %c0_90 = arith.constant 0 : index
    %80 = vector.load %arg1[%c10, %c0_89, %c0_90] : memref<16x2x64xf32, #tpu.memory_space<vmem>>, vector<1x2x64xf32>
    %81 = vector.shape_cast %80 : vector<1x2x64xf32> to vector<2x64xf32>
    %c10_91 = arith.constant 10 : index
    %c0_92 = arith.constant 0 : index
    %c0_93 = arith.constant 0 : index
    %82 = vector.load %arg2[%c10_91, %c0_92, %c0_93] : memref<16x64x64xf32, #tpu.memory_space<vmem>>, vector<1x64x64xf32>
    %83 = vector.shape_cast %82 : vector<1x64x64xf32> to vector<64x64xf32>
    %cst_94 = arith.constant dense<0.000000e+00> : vector<2x64xf32>
    %84 = tpu.matmul %81, %83, %cst_94 {dimension_numbers = #tpu.dot_dimension_numbers<[1], [0], [0], [1], [0, 0, 1, 1], [], []>} : vector<2x64xf32>, vector<64x64xf32>, vector<2x64xf32> -> vector<2x64xf32>
    %c10_95 = arith.constant 10 : index
    %c0_96 = arith.constant 0 : index
    %c0_97 = arith.constant 0 : index
    %85 = vector.load %arg3[%c10_95, %c0_96, %c0_97] : memref<16x2x64xf32, #tpu.memory_space<vmem>>, vector<1x2x64xf32>
    %86 = vector.shape_cast %85 : vector<1x2x64xf32> to vector<2x64xf32>
    %87 = vector.shape_cast %84 : vector<2x64xf32> to vector<1x2x64xf32>
    tpu.vector_store %arg3[%c10_95, %c0_96, %c0_97], %87 {strides = array<i32>} : memref<16x2x64xf32, #tpu.memory_space<vmem>>, vector<1x2x64xf32>,
    %c11 = arith.constant 11 : index
    %c0_98 = arith.constant 0 : index
    %c0_99 = arith.constant 0 : index
    %88 = vector.load %arg1[%c11, %c0_98, %c0_99] : memref<16x2x64xf32, #tpu.memory_space<vmem>>, vector<1x2x64xf32>
    %89 = vector.shape_cast %88 : vector<1x2x64xf32> to vector<2x64xf32>
    %c11_100 = arith.constant 11 : index
    %c0_101 = arith.constant 0 : index
    %c0_102 = arith.constant 0 : index
    %90 = vector.load %arg2[%c11_100, %c0_101, %c0_102] : memref<16x64x64xf32, #tpu.memory_space<vmem>>, vector<1x64x64xf32>
    %91 = vector.shape_cast %90 : vector<1x64x64xf32> to vector<64x64xf32>
    %cst_103 = arith.constant dense<0.000000e+00> : vector<2x64xf32>
    %92 = tpu.matmul %89, %91, %cst_103 {dimension_numbers = #tpu.dot_dimension_numbers<[1], [0], [0], [1], [0, 0, 1, 1], [], []>} : vector<2x64xf32>, vector<64x64xf32>, vector<2x64xf32> -> vector<2x64xf32>
    %c11_104 = arith.constant 11 : index
    %c0_105 = arith.constant 0 : index
    %c0_106 = arith.constant 0 : index
    %93 = vector.load %arg3[%c11_104, %c0_105, %c0_106] : memref<16x2x64xf32, #tpu.memory_space<vmem>>, vector<1x2x64xf32>
    %94 = vector.shape_cast %93 : vector<1x2x64xf32> to vector<2x64xf32>
    %95 = vector.shape_cast %92 : vector<2x64xf32> to vector<1x2x64xf32>
    tpu.vector_store %arg3[%c11_104, %c0_105, %c0_106], %95 {strides = array<i32>} : memref<16x2x64xf32, #tpu.memory_space<vmem>>, vector<1x2x64xf32>,
    %c12 = arith.constant 12 : index
    %c0_107 = arith.constant 0 : index
    %c0_108 = arith.constant 0 : index
    %96 = vector.load %arg1[%c12, %c0_107, %c0_108] : memref<16x2x64xf32, #tpu.memory_space<vmem>>, vector<1x2x64xf32>
    %97 = vector.shape_cast %96 : vector<1x2x64xf32> to vector<2x64xf32>
    %c12_109 = arith.constant 12 : index
    %c0_110 = arith.constant 0 : index
    %c0_111 = arith.constant 0 : index
    %98 = vector.load %arg2[%c12_109, %c0_110, %c0_111] : memref<16x64x64xf32, #tpu.memory_space<vmem>>, vector<1x64x64xf32>
    %99 = vector.shape_cast %98 : vector<1x64x64xf32> to vector<64x64xf32>
    %cst_112 = arith.constant dense<0.000000e+00> : vector<2x64xf32>
    %100 = tpu.matmul %97, %99, %cst_112 {dimension_numbers = #tpu.dot_dimension_numbers<[1], [0], [0], [1], [0, 0, 1, 1], [], []>} : vector<2x64xf32>, vector<64x64xf32>, vector<2x64xf32> -> vector<2x64xf32>
    %c12_113 = arith.constant 12 : index
    %c0_114 = arith.constant 0 : index
    %c0_115 = arith.constant 0 : index
    %101 = vector.load %arg3[%c12_113, %c0_114, %c0_115] : memref<16x2x64xf32, #tpu.memory_space<vmem>>, vector<1x2x64xf32>
    %102 = vector.shape_cast %101 : vector<1x2x64xf32> to vector<2x64xf32>
    %103 = vector.shape_cast %100 : vector<2x64xf32> to vector<1x2x64xf32>
    tpu.vector_store %arg3[%c12_113, %c0_114, %c0_115], %103 {strides = array<i32>} : memref<16x2x64xf32, #tpu.memory_space<vmem>>, vector<1x2x64xf32>,
    %c13 = arith.constant 13 : index
    %c0_116 = arith.constant 0 : index
    %c0_117 = arith.constant 0 : index
    %104 = vector.load %arg1[%c13, %c0_116, %c0_117] : memref<16x2x64xf32, #tpu.memory_space<vmem>>, vector<1x2x64xf32>
    %105 = vector.shape_cast %104 : vector<1x2x64xf32> to vector<2x64xf32>
    %c13_118 = arith.constant 13 : index
    %c0_119 = arith.constant 0 : index
    %c0_120 = arith.constant 0 : index
    %106 = vector.load %arg2[%c13_118, %c0_119, %c0_120] : memref<16x64x64xf32, #tpu.memory_space<vmem>>, vector<1x64x64xf32>
    %107 = vector.shape_cast %106 : vector<1x64x64xf32> to vector<64x64xf32>
    %cst_121 = arith.constant dense<0.000000e+00> : vector<2x64xf32>
    %108 = tpu.matmul %105, %107, %cst_121 {dimension_numbers = #tpu.dot_dimension_numbers<[1], [0], [0], [1], [0, 0, 1, 1], [], []>} : vector<2x64xf32>, vector<64x64xf32>, vector<2x64xf32> -> vector<2x64xf32>
    %c13_122 = arith.constant 13 : index
    %c0_123 = arith.constant 0 : index
    %c0_124 = arith.constant 0 : index
    %109 = vector.load %arg3[%c13_122, %c0_123, %c0_124] : memref<16x2x64xf32, #tpu.memory_space<vmem>>, vector<1x2x64xf32>
    %110 = vector.shape_cast %109 : vector<1x2x64xf32> to vector<2x64xf32>
    %111 = vector.shape_cast %108 : vector<2x64xf32> to vector<1x2x64xf32>
    tpu.vector_store %arg3[%c13_122, %c0_123, %c0_124], %111 {strides = array<i32>} : memref<16x2x64xf32, #tpu.memory_space<vmem>>, vector<1x2x64xf32>,
    %c14 = arith.constant 14 : index
    %c0_125 = arith.constant 0 : index
    %c0_126 = arith.constant 0 : index
    %112 = vector.load %arg1[%c14, %c0_125, %c0_126] : memref<16x2x64xf32, #tpu.memory_space<vmem>>, vector<1x2x64xf32>
    %113 = vector.shape_cast %112 : vector<1x2x64xf32> to vector<2x64xf32>
    %c14_127 = arith.constant 14 : index
    %c0_128 = arith.constant 0 : index
    %c0_129 = arith.constant 0 : index
    %114 = vector.load %arg2[%c14_127, %c0_128, %c0_129] : memref<16x64x64xf32, #tpu.memory_space<vmem>>, vector<1x64x64xf32>
    %115 = vector.shape_cast %114 : vector<1x64x64xf32> to vector<64x64xf32>
    %cst_130 = arith.constant dense<0.000000e+00> : vector<2x64xf32>
    %116 = tpu.matmul %113, %115, %cst_130 {dimension_numbers = #tpu.dot_dimension_numbers<[1], [0], [0], [1], [0, 0, 1, 1], [], []>} : vector<2x64xf32>, vector<64x64xf32>, vector<2x64xf32> -> vector<2x64xf32>
    %c14_131 = arith.constant 14 : index
    %c0_132 = arith.constant 0 : index
    %c0_133 = arith.constant 0 : index
    %117 = vector.load %arg3[%c14_131, %c0_132, %c0_133] : memref<16x2x64xf32, #tpu.memory_space<vmem>>, vector<1x2x64xf32>
    %118 = vector.shape_cast %117 : vector<1x2x64xf32> to vector<2x64xf32>
    %119 = vector.shape_cast %116 : vector<2x64xf32> to vector<1x2x64xf32>
    tpu.vector_store %arg3[%c14_131, %c0_132, %c0_133], %119 {strides = array<i32>} : memref<16x2x64xf32, #tpu.memory_space<vmem>>, vector<1x2x64xf32>,
    %c15 = arith.constant 15 : index
    %c0_134 = arith.constant 0 : index
    %c0_135 = arith.constant 0 : index
    %120 = vector.load %arg1[%c15, %c0_134, %c0_135] : memref<16x2x64xf32, #tpu.memory_space<vmem>>, vector<1x2x64xf32>
    %121 = vector.shape_cast %120 : vector<1x2x64xf32> to vector<2x64xf32>
    %c15_136 = arith.constant 15 : index
    %c0_137 = arith.constant 0 : index
    %c0_138 = arith.constant 0 : index
    %122 = vector.load %arg2[%c15_136, %c0_137, %c0_138] : memref<16x64x64xf32, #tpu.memory_space<vmem>>, vector<1x64x64xf32>
    %123 = vector.shape_cast %122 : vector<1x64x64xf32> to vector<64x64xf32>
    %cst_139 = arith.constant dense<0.000000e+00> : vector<2x64xf32>
    %124 = tpu.matmul %121, %123, %cst_139 {dimension_numbers = #tpu.dot_dimension_numbers<[1], [0], [0], [1], [0, 0, 1, 1], [], []>} : vector<2x64xf32>, vector<64x64xf32>, vector<2x64xf32> -> vector<2x64xf32>
    %c15_140 = arith.constant 15 : index
    %c0_141 = arith.constant 0 : index
    %c0_142 = arith.constant 0 : index
    %125 = vector.load %arg3[%c15_140, %c0_141, %c0_142] : memref<16x2x64xf32, #tpu.memory_space<vmem>>, vector<1x2x64xf32>
    %126 = vector.shape_cast %125 : vector<1x2x64xf32> to vector<2x64xf32>
    %127 = vector.shape_cast %124 : vector<2x64xf32> to vector<1x2x64xf32>
    tpu.vector_store %arg3[%c15_140, %c0_141, %c0_142], %127 {strides = array<i32>} : memref<16x2x64xf32, #tpu.memory_space<vmem>>, vector<1x2x64xf32>,
    return
  }
  func.func @transform_0(%arg0: i32) -> (i32, i32, i32) {
    %c0_i32 = arith.constant 0 : i32
    %c0_i32_0 = arith.constant 0 : i32
    %c0_i32_1 = arith.constant 0 : i32
    %c0_i32_2 = arith.constant 0 : i32
    return %c0_i32, %c0_i32_0, %c0_i32_1 : i32, i32, i32
  }
  func.func @transform_1(%arg0: i32) -> (i32, i32, i32) {
    %c0_i32 = arith.constant 0 : i32
    %c0_i32_0 = arith.constant 0 : i32
    %c0_i32_1 = arith.constant 0 : i32
    %c0_i32_2 = arith.constant 0 : i32
    return %c0_i32, %c0_i32_0, %c0_i32_1 : i32, i32, i32
  }
  func.func @transform_2(%arg0: i32) -> (i32, i32, i32) {
    %c0_i32 = arith.constant 0 : i32
    %c0_i32_0 = arith.constant 0 : i32
    %c0_i32_1 = arith.constant 0 : i32
    %c0_i32_2 = arith.constant 0 : i32
    return %c0_i32, %c0_i32_0, %c0_i32_1 : i32, i32, i32
  }
}

module attributes {stable_mosaic.version = 11 : i64} {
  func.func @_linear_residual_gelu_kernel(%arg0: i32, %arg1: memref<256x32xf32, #tpu.memory_space<vmem>>, %arg2: memref<32x32xf32, #tpu.memory_space<vmem>>, %arg3: memref<1x32xf32, #tpu.memory_space<vmem>>, %arg4: memref<256x32xf32, #tpu.memory_space<vmem>>, %arg5: memref<256x32xf32, #tpu.memory_space<vmem>>) attributes {dimension_semantics = [#tpu.dimension_semantics<parallel>], iteration_bounds = array<i64: 2>, scalar_prefetch = 0 : i64, scratch_operands = 0 : i64, tpu.core_type = #tpu.core_type<tc>, window_params = [{transform_indices = @transform_0, window_bounds = array<i64: 256, 32>}, {pipeline_mode = #tpu.pipeline_mode<synchronous>, transform_indices = @transform_1, window_bounds = array<i64: 32, 32>}, {pipeline_mode = #tpu.pipeline_mode<synchronous>, transform_indices = @transform_2, window_bounds = array<i64: 1, 32>}, {transform_indices = @transform_3, window_bounds = array<i64: 256, 32>}, {transform_indices = @transform_4, window_bounds = array<i64: 256, 32>}]} {
    %c0 = arith.constant 0 : index
    %c0_0 = arith.constant 0 : index
    %0 = vector.load %arg1[%c0, %c0_0] : memref<256x32xf32, #tpu.memory_space<vmem>>, vector<256x32xf32>
    %c0_1 = arith.constant 0 : index
    %c0_2 = arith.constant 0 : index
    %1 = vector.load %arg2[%c0_1, %c0_2] : memref<32x32xf32, #tpu.memory_space<vmem>>, vector<32x32xf32>
    %cst = arith.constant dense<0.000000e+00> : vector<256x32xf32>
    %2 = tpu.matmul %0, %1, %cst {dimension_numbers = #tpu.dot_dimension_numbers<[1], [0], [0], [1], [0, 0, 1, 1], [], []>} : vector<256x32xf32>, vector<32x32xf32>, vector<256x32xf32> -> vector<256x32xf32>
    %c0_3 = arith.constant 0 : index
    %c0_4 = arith.constant 0 : index
    %3 = vector.load %arg3[%c0_3, %c0_4] : memref<1x32xf32, #tpu.memory_space<vmem>>, vector<1x32xf32>
    %4 = vector.broadcast %3 : vector<1x32xf32> to vector<256x32xf32>
    %5 = arith.addf %2, %4 : vector<256x32xf32>
    %c0_5 = arith.constant 0 : index
    %c0_6 = arith.constant 0 : index
    %6 = vector.load %arg4[%c0_5, %c0_6] : memref<256x32xf32, #tpu.memory_space<vmem>>, vector<256x32xf32>
    %7 = arith.addf %5, %6 : vector<256x32xf32>
    %cst_7 = arith.constant 5.000000e-01 : f32
    %8 = vector.broadcast %cst_7 : f32 to vector<256x32xf32>
    %9 = arith.mulf %8, %7 : vector<256x32xf32>
    %cst_8 = arith.constant 0.707106769 : f32
    %10 = vector.broadcast %cst_8 : f32 to vector<256x32xf32>
    %11 = arith.mulf %7, %10 : vector<256x32xf32>
    %12 = math.erf %11 : vector<256x32xf32>
    %cst_9 = arith.constant 1.000000e+00 : f32
    %13 = vector.broadcast %cst_9 : f32 to vector<256x32xf32>
    %14 = arith.addf %13, %12 : vector<256x32xf32>
    %15 = arith.mulf %9, %14 : vector<256x32xf32>
    %c0_10 = arith.constant 0 : index
    %c0_11 = arith.constant 0 : index
    %16 = vector.load %arg5[%c0_10, %c0_11] : memref<256x32xf32, #tpu.memory_space<vmem>>, vector<256x32xf32>
    tpu.vector_store %arg5[%c0_10, %c0_11], %15 {strides = array<i32>} : memref<256x32xf32, #tpu.memory_space<vmem>>, vector<256x32xf32>,
    return
  }
  func.func @transform_0(%arg0: i32) -> (i32, i32) {
    %c0_i32 = arith.constant 0 : i32
    %c0_i32_0 = arith.constant 0 : i32
    return %arg0, %c0_i32 : i32, i32
  }
  func.func @transform_1(%arg0: i32) -> (i32, i32) {
    %c0_i32 = arith.constant 0 : i32
    %c0_i32_0 = arith.constant 0 : i32
    %c0_i32_1 = arith.constant 0 : i32
    return %c0_i32, %c0_i32_0 : i32, i32
  }
  func.func @transform_2(%arg0: i32) -> (i32, i32) {
    %c0_i32 = arith.constant 0 : i32
    %c0_i32_0 = arith.constant 0 : i32
    %c0_i32_1 = arith.constant 0 : i32
    return %c0_i32, %c0_i32_0 : i32, i32
  }
  func.func @transform_3(%arg0: i32) -> (i32, i32) {
    %c0_i32 = arith.constant 0 : i32
    %c0_i32_0 = arith.constant 0 : i32
    return %arg0, %c0_i32 : i32, i32
  }
  func.func @transform_4(%arg0: i32) -> (i32, i32) {
    %c0_i32 = arith.constant 0 : i32
    %c0_i32_0 = arith.constant 0 : i32
    return %arg0, %c0_i32 : i32, i32
  }
}

module attributes {stable_mosaic.version = 11 : i64} {
  func.func @_mlp_head_kernel(%arg0: i32, %arg1: memref<256x32xf32, #tpu.memory_space<vmem>>, %arg2: memref<32x128xf32, #tpu.memory_space<vmem>>, %arg3: memref<1x128xf32, #tpu.memory_space<vmem>>, %arg4: memref<128x1xf32, #tpu.memory_space<vmem>>, %arg5: memref<1x1xf32, #tpu.memory_space<vmem>>, %arg6: memref<256x1xf32, #tpu.memory_space<vmem>>, %arg7: memref<256x128xf32, #tpu.memory_space<vmem>>) attributes {dimension_semantics = [#tpu.dimension_semantics<parallel>], iteration_bounds = array<i64: 2>, scalar_prefetch = 0 : i64, scratch_operands = 1 : i64, tpu.core_type = #tpu.core_type<tc>, window_params = [{transform_indices = @transform_0, window_bounds = array<i64: 256, 32>}, {pipeline_mode = #tpu.pipeline_mode<synchronous>, transform_indices = @transform_1, window_bounds = array<i64: 32, 128>}, {pipeline_mode = #tpu.pipeline_mode<synchronous>, transform_indices = @transform_2, window_bounds = array<i64: 1, 128>}, {pipeline_mode = #tpu.pipeline_mode<synchronous>, transform_indices = @transform_3, window_bounds = array<i64: 128, 1>}, {pipeline_mode = #tpu.pipeline_mode<synchronous>, transform_indices = @transform_4, window_bounds = array<i64: 1, 1>}, {transform_indices = @transform_5, window_bounds = array<i64: 256, 1>}]} {
    %c0 = arith.constant 0 : index
    %c0_0 = arith.constant 0 : index
    %0 = vector.load %arg1[%c0, %c0_0] : memref<256x32xf32, #tpu.memory_space<vmem>>, vector<256x32xf32>
    %c0_1 = arith.constant 0 : index
    %c0_2 = arith.constant 0 : index
    %1 = vector.load %arg2[%c0_1, %c0_2] : memref<32x128xf32, #tpu.memory_space<vmem>>, vector<32x128xf32>
    %cst = arith.constant dense<0.000000e+00> : vector<256x128xf32>
    %2 = tpu.matmul %0, %1, %cst {dimension_numbers = #tpu.dot_dimension_numbers<[1], [0], [0], [1], [0, 0, 1, 1], [], []>} : vector<256x32xf32>, vector<32x128xf32>, vector<256x128xf32> -> vector<256x128xf32>
    %c0_3 = arith.constant 0 : index
    %c0_4 = arith.constant 0 : index
    %3 = vector.load %arg3[%c0_3, %c0_4] : memref<1x128xf32, #tpu.memory_space<vmem>>, vector<1x128xf32>
    %4 = vector.broadcast %3 : vector<1x128xf32> to vector<256x128xf32>
    %5 = arith.addf %2, %4 : vector<256x128xf32>
    %cst_5 = arith.constant 5.000000e-01 : f32
    %6 = vector.broadcast %cst_5 : f32 to vector<256x128xf32>
    %7 = arith.mulf %6, %5 : vector<256x128xf32>
    %cst_6 = arith.constant 0.707106769 : f32
    %8 = vector.broadcast %cst_6 : f32 to vector<256x128xf32>
    %9 = arith.mulf %5, %8 : vector<256x128xf32>
    %10 = math.erf %9 : vector<256x128xf32>
    %cst_7 = arith.constant 1.000000e+00 : f32
    %11 = vector.broadcast %cst_7 : f32 to vector<256x128xf32>
    %12 = arith.addf %11, %10 : vector<256x128xf32>
    %13 = arith.mulf %7, %12 : vector<256x128xf32>
    %c0_8 = arith.constant 0 : index
    %c0_9 = arith.constant 0 : index
    %14 = vector.load %arg7[%c0_8, %c0_9] : memref<256x128xf32, #tpu.memory_space<vmem>>, vector<256x128xf32>
    tpu.vector_store %arg7[%c0_8, %c0_9], %13 {strides = array<i32>} : memref<256x128xf32, #tpu.memory_space<vmem>>, vector<256x128xf32>,
    %c0_10 = arith.constant 0 : index
    %c0_11 = arith.constant 0 : index
    %15 = vector.load %arg7[%c0_10, %c0_11] : memref<256x128xf32, #tpu.memory_space<vmem>>, vector<256x128xf32>
    %c0_12 = arith.constant 0 : index
    %c0_13 = arith.constant 0 : index
    %16 = vector.load %arg4[%c0_12, %c0_13] : memref<128x1xf32, #tpu.memory_space<vmem>>, vector<128x1xf32>
    %cst_14 = arith.constant dense<0.000000e+00> : vector<256x1xf32>
    %17 = tpu.matmul %15, %16, %cst_14 {dimension_numbers = #tpu.dot_dimension_numbers<[1], [0], [0], [1], [0, 0, 1, 1], [], []>} : vector<256x128xf32>, vector<128x1xf32>, vector<256x1xf32> -> vector<256x1xf32>
    %c0_15 = arith.constant 0 : index
    %c0_16 = arith.constant 0 : index
    %18 = vector.load %arg5[%c0_15, %c0_16] : memref<1x1xf32, #tpu.memory_space<vmem>>, vector<1x1xf32>
    %19 = vector.broadcast %18 : vector<1x1xf32> to vector<256x1xf32>
    %20 = arith.addf %17, %19 : vector<256x1xf32>
    %c0_17 = arith.constant 0 : index
    %c0_18 = arith.constant 0 : index
    %21 = vector.load %arg6[%c0_17, %c0_18] : memref<256x1xf32, #tpu.memory_space<vmem>>, vector<256x1xf32>
    tpu.vector_store %arg6[%c0_17, %c0_18], %20 {strides = array<i32>} : memref<256x1xf32, #tpu.memory_space<vmem>>, vector<256x1xf32>,
    return
  }
  func.func @transform_0(%arg0: i32) -> (i32, i32) {
    %c0_i32 = arith.constant 0 : i32
    %c0_i32_0 = arith.constant 0 : i32
    return %arg0, %c0_i32 : i32, i32
  }
  func.func @transform_1(%arg0: i32) -> (i32, i32) {
    %c0_i32 = arith.constant 0 : i32
    %c0_i32_0 = arith.constant 0 : i32
    %c0_i32_1 = arith.constant 0 : i32
    return %c0_i32, %c0_i32_0 : i32, i32
  }
  func.func @transform_2(%arg0: i32) -> (i32, i32) {
    %c0_i32 = arith.constant 0 : i32
    %c0_i32_0 = arith.constant 0 : i32
    %c0_i32_1 = arith.constant 0 : i32
    return %c0_i32, %c0_i32_0 : i32, i32
  }
  func.func @transform_3(%arg0: i32) -> (i32, i32) {
    %c0_i32 = arith.constant 0 : i32
    %c0_i32_0 = arith.constant 0 : i32
    %c0_i32_1 = arith.constant 0 : i32
    return %c0_i32, %c0_i32_0 : i32, i32
  }
  func.func @transform_4(%arg0: i32) -> (i32, i32) {
    %c0_i32 = arith.constant 0 : i32
    %c0_i32_0 = arith.constant 0 : i32
    %c0_i32_1 = arith.constant 0 : i32
    return %c0_i32, %c0_i32_0 : i32, i32
  }
  func.func @transform_5(%arg0: i32) -> (i32, i32) {
    %c0_i32 = arith.constant 0 : i32
    %c0_i32_0 = arith.constant 0 : i32
    return %arg0, %c0_i32 : i32, i32
  }
}

</mosaic_0001>

<llo_original>
// kernel: fno2d_forward.10
$region0: #{fno2d_forward.10}
  #allocation0 [shape = 'u32[]', space=smem, size = 0x4, offset = 0x4, fixed_abs, tag = 'smem constant byte address 0x4 - core index']
  #allocation1 [shape = 'u32[144,128]{1,0:T(1,128)}', space=vmem, size = 0x12000, scoped, tag = 'internal scratch']
  %s0 = inlined_call_operand.vmem [shape: f32[512,1], index: 0, kind: input, shape index: {}]
  %s1 = inlined_call_operand.vmem [shape: f32[1,32], index: 1, kind: input, shape index: {}]
  %s2 = inlined_call_operand.vmem [shape: f32[1,32], index: 2, kind: input, shape index: {}]
  %s3 = inlined_call_operand.vmem [shape: f32[512,32], index: 3, kind: output, shape index: {}]
  %s4 = sld [smem:[#allocation0]]
  $region45: #{fno2d_forward.10} parent=0
    _
  %s6 = ssub.s32 1, %s4
  %s7 = scalar_select 0, %s6, %s4
  loop: start=0, step=1, limit=4
  $region2: #{fno2d_forward.10} parent=0 // loop_pre_header
    _
  $region3: #{fno2d_forward.10} parent=0 // loop_header
    %s9 = sphi 0, %s13
    %p10 = scmp.ge.s32.totalorder %s9, 4
    %s19 = sphi 0, %s21
    %s22 = sphi 0, %s19
    %s23 = sphi 0, %s22
    %s39 = sphi 0, %s23
    %s43 = sphi 0, %s43
    %s45 = sphi 0, %s43
    %s46 = sphi 0, %s45
    %s60 = sphi 0, %s46
    %s64 = sphi 0, %s64
    %s66 = sphi 0, %s64
    %s67 = sphi 0, %s66
    %s81 = sphi 0, %s67
    %s87 = sphi 0, %s89
    %s90 = sphi 0, %s87
    %s91 = sphi 0, %s90
    %s107 = sphi 0, %s91
  $region4: #{fno2d_forward.10} parent=0 // loop_header_branch
    %12 = sbr.rel (%p10) target = $region8
  $region5: #{fno2d_forward.10} parent=0 // loop_body
    %s14 = ssub.s32 %s9, 1
    %s15 = ssub.s32 %s9, 2
    %s16 = sadd.s32 %s9, 1
    %s17 = ssub.s32 %s9, %s16
    %p18 = scmp.eq.s32.totalorder %s17, 0
    %s20 = sadd.s32 %s19, 1
    %s21 = scalar_select %p18, %s19, %s20
    %p24 = pneg %p18
    %p25 = scmp.eq.s32.totalorder %s9, 1
    %p26 = por %p24, %p25
    %p27 = scmp.ne.s32.totalorder %s19, %s22
    %p28 = scmp.eq.s32.totalorder %s9, 0
    %p29 = por %p27, %p28
    %p30 = scmp.ne.s32.totalorder %s19, %s22
    %p31 = scmp.eq.s32.totalorder %s14, 1
    %p32 = por %p30, %p31
    %p33 = scmp.ne.s32.totalorder %s22, %s23
    %p34 = scmp.eq.s32.totalorder %s14, 0
    %p35 = por %p33, %p34
    %p36 = scmp.ne.s32.totalorder %s22, %s23
    %p37 = scmp.eq.s32.totalorder %s15, 1
    %p38 = por %p36, %p37
    %p40 = scmp.ne.s32.totalorder %s23, %s39
    %p41 = scmp.eq.s32.totalorder %s15, 0
    %p42 = por %p40, %p41
    %s44 = sadd.s32 %s43, 1
    %p47 = scmp.eq.s32.totalorder %s9, 1
    %p48 = scmp.ne.s32.totalorder %s43, %s45
    %p49 = scmp.eq.s32.totalorder %s9, 0
    %p50 = por %p48, %p49
    %p51 = scmp.ne.s32.totalorder %s43, %s45
    %p52 = scmp.eq.s32.totalorder %s14, 1
    %p53 = por %p51, %p52
    %p54 = scmp.ne.s32.totalorder %s45, %s46
    %p55 = scmp.eq.s32.totalorder %s14, 0
    %p56 = por %p54, %p55
    %p57 = scmp.ne.s32.totalorder %s45, %s46
    %p58 = scmp.eq.s32.totalorder %s15, 1
    %p59 = por %p57, %p58
    %p61 = scmp.ne.s32.totalorder %s46, %s60
    %p62 = scmp.eq.s32.totalorder %s15, 0
    %p63 = por %p61, %p62
    %s65 = sadd.s32 %s64, 1
    %p68 = scmp.eq.s32.totalorder %s9, 1
    %p69 = scmp.ne.s32.totalorder %s64, %s66
    %p70 = scmp.eq.s32.totalorder %s9, 0
    %p71 = por %p69, %p70
    %p72 = scmp.ne.s32.totalorder %s64, %s66
    %p73 = scmp.eq.s32.totalorder %s14, 1
    %p74 = por %p72, %p73
    %p75 = scmp.ne.s32.totalorder %s66, %s67
    %p76 = scmp.eq.s32.totalorder %s14, 0
    %p77 = por %p75, %p76
    %p78 = scmp.ne.s32.totalorder %s66, %s67
    %p79 = scmp.eq.s32.totalorder %s15, 1
    %p80 = por %p78, %p79
    %p82 = scmp.ne.s32.totalorder %s67, %s81
    %p83 = scmp.eq.s32.totalorder %s15, 0
    %p84 = por %p82, %p83
    %s85 = ssub.s32 %s9, %s16
    %p86 = scmp.eq.s32.totalorder %s85, 0
    %s88 = sadd.s32 %s87, 1
    %s89 = scalar_select %p86, %s87, %s88
    %p92 = pneg %p86
    %p93 = scmp.eq.s32.totalorder %s9, 1
    %p94 = por %p92, %p93
    %p95 = scmp.ne.s32.totalorder %s87, %s90
    %p96 = scmp.eq.s32.totalorder %s9, 0
    %p97 = por %p95, %p96
    %p98 = scmp.ne.s32.totalorder %s87, %s90
    %p99 = scmp.eq.s32.totalorder %s14, 1
    %p100 = por %p98, %p99
    %p101 = scmp.ne.s32.totalorder %s90, %s91
    %p102 = scmp.eq.s32.totalorder %s14, 0
    %p103 = por %p101, %p102
    %p104 = scmp.ne.s32.totalorder %s90, %s91
    %p105 = scmp.eq.s32.totalorder %s15, 1
    %p106 = por %p104, %p105
    %p108 = scmp.ne.s32.totalorder %s91, %s107
    %p109 = scmp.eq.s32.totalorder %s15, 0
    %p110 = por %p108, %p109
    %p111 = scmp.le.s32.totalorder 1, %s9
    %p112 = scmp.lt.s32.totalorder %s9, 3
    %p113 = pnand %p111, %p112
    %p114 = pneg %p113
    // Predicated region
    $region9: #{fno2d_forward.10} parent=5 // pred_check
      _
    $region10: #{fno2d_forward.10} parent=5 // pred_check_branch
      %116 = sbr.rel (%p113) target = $region12
    $region11: #{fno2d_forward.10} parent=5 // pred_region
      %s117 = ssub.s32 %s9, 1
      // Predicated region
      $region13: #{fno2d_forward.10} parent=11 // pred_check
        %p118 = pneg %p56
      $region14: #{fno2d_forward.10} parent=11 // pred_check_branch
        %120 = sbr.rel (%p118) target = $region16
      $region15: #{fno2d_forward.10} parent=11 // pred_region
        _
      $region16: #{fno2d_forward.10} parent=11 // pred_fallthru
        _
      // Predicated region
      $region17: #{fno2d_forward.10} parent=11 // pred_check
        %p121 = pneg %p77
      $region18: #{fno2d_forward.10} parent=11 // pred_check_branch
        %123 = sbr.rel (%p121) target = $region20
      $region19: #{fno2d_forward.10} parent=11 // pred_region
        _
      $region20: #{fno2d_forward.10} parent=11 // pred_fallthru
        _
    $region12: #{fno2d_forward.10} parent=5 // pred_fallthru
      _
    %p124 = scmp.lt.s32.totalorder %s9, 2
    // Predicated region
    $region21: #{fno2d_forward.10} parent=5 // pred_check
      %p125 = pneg %p124
    $region22: #{fno2d_forward.10} parent=5 // pred_check_branch
      %127 = sbr.rel (%p125) target = $region24
    $region23: #{fno2d_forward.10} parent=5 // pred_region
      // Predicated region
      $region25: #{fno2d_forward.10} parent=23 // pred_check
        %p128 = pneg %p29
      $region26: #{fno2d_forward.10} parent=23 // pred_check_branch
        %130 = sbr.rel (%p128) target = $region28
      $region27: #{fno2d_forward.10} parent=23 // pred_region
        %s131 = smul.u32 32, %s9
        %p132 = scmp.lt.s32.totalorder %s131, 63
        %s133 = scalar_select %p132, %s131, 63
        %s134 = smul.addr %s133, 8
        %s135 = scalar_lea.vmem %s0, %s134
        %s136 = smul.u32 32, %s9
      $region28: #{fno2d_forward.10} parent=23 // pred_fallthru
        _
    $region24: #{fno2d_forward.10} parent=5 // pred_fallthru
      _
    %p137 = scmp.le.s32.totalorder 1, %s9
    %p138 = scmp.lt.s32.totalorder %s9, 3
    %p139 = pnand %p137, %p138
    %p140 = pneg %p139
    // Predicated region
    $region29: #{fno2d_forward.10} parent=5 // pred_check
      _
    $region30: #{fno2d_forward.10} parent=5 // pred_check_branch
      %142 = sbr.rel (%p139) target = $region32
    $region31: #{fno2d_forward.10} parent=5 // pred_region
      %s143 = ssub.s32 %s9, 1
      %s144 = smul.u32 32, %s14
      %p145 = scmp.lt.s32.totalorder %s144, 63
      %s146 = scalar_select %p145, %s144, 63
      %s147 = smul.addr %s146, 8
      %s148 = scalar_lea.vmem %s0, %s147
      %p149 = pneg %p35
      %p150 = pneg %p32
      %p151 = pneg %p56
      %p152 = pneg %p53
      %p153 = pneg %p77
      %p154 = pneg %p74
      %p155 = pneg %p103
      %p156 = pneg %p100
      %s157 = smul.u32 32, %s14
      %p158 = scmp.lt.s32.totalorder %s157, 63
      %s159 = scalar_select %p158, %s157, 63
      %s160 = smul.addr %s159, 8
      %s161 = scalar_lea.vmem %s3, %s160
      %s162 = smul.u32 32, %s14
      %p163 = scmp.lt.s32.totalorder %s162, 63
      %s164 = scalar_select %p163, %s162, 63
      %s165 = smul.addr %s164, 8
      %s166 = scalar_lea.vmem %s0, %s165
      %s167 = smul.u32 32, %s14
      %s168 = smul.u32 32, %s14
      %p169 = scmp.lt.s32.totalorder %s168, 63
      %s170 = scalar_select %p169, %s168, 63
      %s171 = smul.addr %s170, 8
      %s172 = scalar_lea.vmem %s3, %s171
      %s173 = smul.u32 32, %s14
      %v174 = vld [vmem:[%s166] sm:$0xff]
      %v175 = vld [vmem:[%s166 + $0x8] sm:$0xff]
      %v176 = vld [vmem:[%s166 + $0x10] sm:$0xff]
      %v177 = vld [vmem:[%s166 + $0x18] sm:$0xff]
      %v178 = vld [vmem:[%s166 + $0x20] sm:$0xff]
      %v179 = vld [vmem:[%s166 + $0x28] sm:$0xff]
      %v180 = vld [vmem:[%s166 + $0x30] sm:$0xff]
      %v181 = vld [vmem:[%s166 + $0x38] sm:$0xff]
      %v182 = vld [vmem:[%s166 + $0x40] sm:$0xff]
      %v183 = vld [vmem:[%s166 + $0x48] sm:$0xff]
      %v184 = vld [vmem:[%s166 + $0x50] sm:$0xff]
      %v185 = vld [vmem:[%s166 + $0x58] sm:$0xff]
      %v186 = vld [vmem:[%s166 + $0x60] sm:$0xff]
      %v187 = vld [vmem:[%s166 + $0x68] sm:$0xff]
      %v188 = vld [vmem:[%s166 + $0x70] sm:$0xff]
      %v189 = vld [vmem:[%s166 + $0x78] sm:$0xff]
      %v190 = vld [vmem:[%s166 + $0x80] sm:$0xff]
      %v191 = vld [vmem:[%s166 + $0x88] sm:$0xff]
      %v192 = vld [vmem:[%s166 + $0x90] sm:$0xff]
      %v193 = vld [vmem:[%s166 + $0x98] sm:$0xff]
      %v194 = vld [vmem:[%s166 + $0xa0] sm:$0xff]
      %v195 = vld [vmem:[%s166 + $0xa8] sm:$0xff]
      %v196 = vld [vmem:[%s166 + $0xb0] sm:$0xff]
      %v197 = vld [vmem:[%s166 + $0xb8] sm:$0xff]
      %v198 = vld [vmem:[%s166 + $0xc0] sm:$0xff]
      %v199 = vld [vmem:[%s166 + $0xc8] sm:$0xff]
      %v200 = vld [vmem:[%s166 + $0xd0] sm:$0xff]
      %v201 = vld [vmem:[%s166 + $0xd8] sm:$0xff]
      %v202 = vld [vmem:[%s166 + $0xe0] sm:$0xff]
      %v203 = vld [vmem:[%s166 + $0xe8] sm:$0xff]
      %v204 = vld [vmem:[%s166 + $0xf0] sm:$0xff]
      %v205 = vld [vmem:[%s166 + $0xf8] sm:$0xff]
      %v206 = vld [vmem:[%s1] sm:$0x1]
      %208 = vset.pattern.permute.xlu0 0
      %209 = vperm.xlu0 %208, %v174
      %v210 = vpop.permute.xlu0 %209
      %213 = vset.pattern.permute.xlu0 0
      %214 = vperm.xlu0 %213, %v175
      %v215 = vpop.permute.xlu0 %214
      %218 = vset.pattern.permute.xlu0 0
      %219 = vperm.xlu0 %218, %v176
      %v220 = vpop.permute.xlu0 %219
      %223 = vset.pattern.permute.xlu0 0
      %224 = vperm.xlu0 %223, %v177
      %v225 = vpop.permute.xlu0 %224
      %228 = vset.pattern.permute.xlu0 0
      %229 = vperm.xlu0 %228, %v178
      %v230 = vpop.permute.xlu0 %229
      %233 = vset.pattern.permute.xlu0 0
      %234 = vperm.xlu0 %233, %v179
      %v235 = vpop.permute.xlu0 %234
      %238 = vset.pattern.permute.xlu0 0
      %239 = vperm.xlu0 %238, %v180
      %v240 = vpop.permute.xlu0 %239
      %243 = vset.pattern.permute.xlu0 0
      %244 = vperm.xlu0 %243, %v181
      %v245 = vpop.permute.xlu0 %244
      %248 = vset.pattern.permute.xlu0 0
      %249 = vperm.xlu0 %248, %v182
      %v250 = vpop.permute.xlu0 %249
      %253 = vset.pattern.permute.xlu0 0
      %254 = vperm.xlu0 %253, %v183
      %v255 = vpop.permute.xlu0 %254
      %258 = vset.pattern.permute.xlu0 0
      %259 = vperm.xlu0 %258, %v184
      %v260 = vpop.permute.xlu0 %259
      %263 = vset.pattern.permute.xlu0 0
      %264 = vperm.xlu0 %263, %v185
      %v265 = vpop.permute.xlu0 %264
      %268 = vset.pattern.permute.xlu0 0
      %269 = vperm.xlu0 %268, %v186
      %v270 = vpop.permute.xlu0 %269
      %273 = vset.pattern.permute.xlu0 0
      %274 = vperm.xlu0 %273, %v187
      %v275 = vpop.permute.xlu0 %274
      %278 = vset.pattern.permute.xlu0 0
      %279 = vperm.xlu0 %278, %v188
      %v280 = vpop.permute.xlu0 %279
      %283 = vset.pattern.permute.xlu0 0
      %284 = vperm.xlu0 %283, %v189
      %v285 = vpop.permute.xlu0 %284
      %288 = vset.pattern.permute.xlu0 0
      %289 = vperm.xlu0 %288, %v190
      %v290 = vpop.permute.xlu0 %289
      %293 = vset.pattern.permute.xlu0 0
      %294 = vperm.xlu0 %293, %v191
      %v295 = vpop.permute.xlu0 %294
      %298 = vset.pattern.permute.xlu0 0
      %299 = vperm.xlu0 %298, %v192
      %v300 = vpop.permute.xlu0 %299
      %303 = vset.pattern.permute.xlu0 0
      %304 = vperm.xlu0 %303, %v193
      %v305 = vpop.permute.xlu0 %304
      %308 = vset.pattern.permute.xlu0 0
      %309 = vperm.xlu0 %308, %v194
      %v310 = vpop.permute.xlu0 %309
      %313 = vset.pattern.permute.xlu0 0
      %314 = vperm.xlu0 %313, %v195
      %v315 = vpop.permute.xlu0 %314
      %318 = vset.pattern.permute.xlu0 0
      %319 = vperm.xlu0 %318, %v196
      %v320 = vpop.permute.xlu0 %319
      %323 = vset.pattern.permute.xlu0 0
      %324 = vperm.xlu0 %323, %v197
      %v325 = vpop.permute.xlu0 %324
      %328 = vset.pattern.permute.xlu0 0
      %329 = vperm.xlu0 %328, %v198
      %v330 = vpop.permute.xlu0 %329
      %333 = vset.pattern.permute.xlu0 0
      %334 = vperm.xlu0 %333, %v199
      %v335 = vpop.permute.xlu0 %334
      %338 = vset.pattern.permute.xlu0 0
      %339 = vperm.xlu0 %338, %v200
      %v340 = vpop.permute.xlu0 %339
      %343 = vset.pattern.permute.xlu0 0
      %344 = vperm.xlu0 %343, %v201
      %v345 = vpop.permute.xlu0 %344
      %348 = vset.pattern.permute.xlu0 0
      %349 = vperm.xlu0 %348, %v202
      %v350 = vpop.permute.xlu0 %349
      %353 = vset.pattern.permute.xlu0 0
      %354 = vperm.xlu0 %353, %v203
      %v355 = vpop.permute.xlu0 %354
      %358 = vset.pattern.permute.xlu0 0
      %359 = vperm.xlu0 %358, %v204
      %v360 = vpop.permute.xlu0 %359
      %363 = vset.pattern.permute.xlu0 0
      %364 = vperm.xlu0 %363, %v205
      %v365 = vpop.permute.xlu0 %364
      %v368 = vlaneseq
      %v369 = vshrl.u32 %v368, 7
      %v370 = vsub.s32 0, %v369
      %v371 = vrot.slane %v206, %v370
      %v373 = vmul.f32 %v210, %v371
      %v374 = vmul.f32 %v215, %v371
      %v375 = vmul.f32 %v220, %v371
      %v376 = vmul.f32 %v225, %v371
      %v377 = vmul.f32 %v230, %v371
      %v378 = vmul.f32 %v235, %v371
      %v379 = vmul.f32 %v240, %v371
      %v380 = vmul.f32 %v245, %v371
      %v381 = vmul.f32 %v250, %v371
      %v382 = vmul.f32 %v255, %v371
      %v383 = vmul.f32 %v260, %v371
      %v384 = vmul.f32 %v265, %v371
      %v385 = vmul.f32 %v270, %v371
      %v386 = vmul.f32 %v275, %v371
      %v387 = vmul.f32 %v280, %v371
      %v388 = vmul.f32 %v285, %v371
      %v389 = vmul.f32 %v290, %v371
      %v390 = vmul.f32 %v295, %v371
      %v391 = vmul.f32 %v300, %v371
      %v392 = vmul.f32 %v305, %v371
      %v393 = vmul.f32 %v310, %v371
      %v394 = vmul.f32 %v315, %v371
      %v395 = vmul.f32 %v320, %v371
      %v396 = vmul.f32 %v325, %v371
      %v397 = vmul.f32 %v330, %v371
      %v398 = vmul.f32 %v335, %v371
      %v399 = vmul.f32 %v340, %v371
      %v400 = vmul.f32 %v345, %v371
      %v401 = vmul.f32 %v350, %v371
      %v402 = vmul.f32 %v355, %v371
      %v403 = vmul.f32 %v360, %v371
      %v404 = vmul.f32 %v365, %v371
      %v405 = vld [vmem:[%s2] sm:$0x1]
      %v407 = vlaneseq
      %v408 = vshrl.u32 %v407, 7
      %v409 = vsub.s32 0, %v408
      %v410 = vrot.slane %v405, %v409
      %v412 = vadd.f32 %v373, %v410
      %v413 = vadd.f32 %v374, %v410
      %v414 = vadd.f32 %v375, %v410
      %v415 = vadd.f32 %v376, %v410
      %v416 = vadd.f32 %v377, %v410
      %v417 = vadd.f32 %v378, %v410
      %v418 = vadd.f32 %v379, %v410
      %v419 = vadd.f32 %v380, %v410
      %v420 = vadd.f32 %v381, %v410
      %v421 = vadd.f32 %v382, %v410
      %v422 = vadd.f32 %v383, %v410
      %v423 = vadd.f32 %v384, %v410
      %v424 = vadd.f32 %v385, %v410
      %v425 = vadd.f32 %v386, %v410
      %v426 = vadd.f32 %v387, %v410
      %v427 = vadd.f32 %v388, %v410
      %v428 = vadd.f32 %v389, %v410
      %v429 = vadd.f32 %v390, %v410
      %v430 = vadd.f32 %v391, %v410
      %v431 = vadd.f32 %v392, %v410
      %v432 = vadd.f32 %v393, %v410
      %v433 = vadd.f32 %v394, %v410
      %v434 = vadd.f32 %v395, %v410
      %v435 = vadd.f32 %v396, %v410
      %v436 = vadd.f32 %v397, %v410
      %v437 = vadd.f32 %v398, %v410
      %v438 = vadd.f32 %v399, %v410
      %v439 = vadd.f32 %v400, %v410
      %v440 = vadd.f32 %v401, %v410
      %v441 = vadd.f32 %v402, %v410
      %v442 = vadd.f32 %v403, %v410
      %v443 = vadd.f32 %v404, %v410
      %vm444 = vcmask 261120
      %445 = vst.msk [vmem:[%s172] sm:$0xff] %vm444, %v412
      %446 = vst.msk [vmem:[%s172 + $0x8] sm:$0xff] %vm444, %v413
      %447 = vst.msk [vmem:[%s172 + $0x10] sm:$0xff] %vm444, %v414
      %448 = vst.msk [vmem:[%s172 + $0x18] sm:$0xff] %vm444, %v415
      %449 = vst.msk [vmem:[%s172 + $0x20] sm:$0xff] %vm444, %v416
      %450 = vst.msk [vmem:[%s172 + $0x28] sm:$0xff] %vm444, %v417
      %451 = vst.msk [vmem:[%s172 + $0x30] sm:$0xff] %vm444, %v418
      %452 = vst.msk [vmem:[%s172 + $0x38] sm:$0xff] %vm444, %v419
      %453 = vst.msk [vmem:[%s172 + $0x40] sm:$0xff] %vm444, %v420
      %454 = vst.msk [vmem:[%s172 + $0x48] sm:$0xff] %vm444, %v421
      %455 = vst.msk [vmem:[%s172 + $0x50] sm:$0xff] %vm444, %v422
      %456 = vst.msk [vmem:[%s172 + $0x58] sm:$0xff] %vm444, %v423
      %457 = vst.msk [vmem:[%s172 + $0x60] sm:$0xff] %vm444, %v424
      %458 = vst.msk [vmem:[%s172 + $0x68] sm:$0xff] %vm444, %v425
      %459 = vst.msk [vmem:[%s172 + $0x70] sm:$0xff] %vm444, %v426
      %460 = vst.msk [vmem:[%s172 + $0x78] sm:$0xff] %vm444, %v427
      %461 = vst.msk [vmem:[%s172 + $0x80] sm:$0xff] %vm444, %v428
      %462 = vst.msk [vmem:[%s172 + $0x88] sm:$0xff] %vm444, %v429
      %463 = vst.msk [vmem:[%s172 + $0x90] sm:$0xff] %vm444, %v430
      %464 = vst.msk [vmem:[%s172 + $0x98] sm:$0xff] %vm444, %v431
      %465 = vst.msk [vmem:[%s172 + $0xa0] sm:$0xff] %vm444, %v432
      %466 = vst.msk [vmem:[%s172 + $0xa8] sm:$0xff] %vm444, %v433
      %467 = vst.msk [vmem:[%s172 + $0xb0] sm:$0xff] %vm444, %v434
      %468 = vst.msk [vmem:[%s172 + $0xb8] sm:$0xff] %vm444, %v435
      %469 = vst.msk [vmem:[%s172 + $0xc0] sm:$0xff] %vm444, %v436
      %470 = vst.msk [vmem:[%s172 + $0xc8] sm:$0xff] %vm444, %v437
      %471 = vst.msk [vmem:[%s172 + $0xd0] sm:$0xff] %vm444, %v438
      %472 = vst.msk [vmem:[%s172 + $0xd8] sm:$0xff] %vm444, %v439
      %473 = vst.msk [vmem:[%s172 + $0xe0] sm:$0xff] %vm444, %v440
      %474 = vst.msk [vmem:[%s172 + $0xe8] sm:$0xff] %vm444, %v441
      %475 = vst.msk [vmem:[%s172 + $0xf0] sm:$0xff] %vm444, %v442
      %476 = vst.msk [vmem:[%s172 + $0xf8] sm:$0xff] %vm444, %v443
      %s477 = smul.u32 32, %s14
      %p478 = scmp.lt.s32.totalorder %s477, 63
      %s479 = scalar_select %p478, %s477, 63
      %s480 = smul.addr %s479, 8
      %s481 = scalar_lea.vmem %s3, %s480
      // Predicated region
      $region33: #{fno2d_forward.10} parent=31 // pred_check
        %p482 = pneg %p100
      $region34: #{fno2d_forward.10} parent=31 // pred_check_branch
        %484 = sbr.rel (%p482) target = $region36
      $region35: #{fno2d_forward.10} parent=31 // pred_region
        %s485 = smul.u32 32, %s14
      $region36: #{fno2d_forward.10} parent=31 // pred_fallthru
        _
    $region32: #{fno2d_forward.10} parent=5 // pred_fallthru
      _
    %p486 = scmp.le.s32.totalorder 2, %s9
    // Predicated region
    $region37: #{fno2d_forward.10} parent=5 // pred_check
      %p487 = pneg %p486
    $region38: #{fno2d_forward.10} parent=5 // pred_check_branch
      %489 = sbr.rel (%p487) target = $region40
    $region39: #{fno2d_forward.10} parent=5 // pred_region
      %s490 = ssub.s32 %s9, 2
      // Predicated region
      $region41: #{fno2d_forward.10} parent=39 // pred_check
        %p491 = pneg %p106
      $region42: #{fno2d_forward.10} parent=39 // pred_check_branch
        %493 = sbr.rel (%p491) target = $region44
      $region43: #{fno2d_forward.10} parent=39 // pred_region
        %s494 = smul.u32 32, %s15
        %p495 = scmp.lt.s32.totalorder %s494, 63
        %s496 = scalar_select %p495, %s494, 63
        %s497 = smul.addr %s496, 8
        %s498 = scalar_lea.vmem %s3, %s497
      $region44: #{fno2d_forward.10} parent=39 // pred_fallthru
        _
    $region40: #{fno2d_forward.10} parent=5 // pred_fallthru
      _
  $region6: #{fno2d_forward.10} parent=0 // loop_footer
    %s13 = sadd.s32 1, %s9
  $region7: #{fno2d_forward.10} parent=0 // loop_footer_branch
    %8 = sbr.rel target = $region3
  $region8: #{fno2d_forward.10} parent=0 // loop_exit
    _

// kernel: neg.4
$region0: #{neg.4}
  #allocation0 [shape = 's32[1]{0}', space=sflag, size = 0x4, scoped, tag = 'scoped memory for neg.4']
  %s0 = inlined_call_operand.vmem [shape: f32[16,32,32], index: 0, kind: input, shape index: {}]
  %s1 = inlined_call_operand.vmem [shape: f32[16,32,32], index: 1, kind: output, shape index: {}]
  %v2 = vld [vmem:[%s0] sm:$0xff]
  %3 = xla_tuple %v2
  %4 = xla_tuple %3
  %v5 = vxor.u32 %v2, 2147483648
  %6 = xla_tuple %v5
  %7 = vst [vmem:[%s1] sm:$0xff] %v5
  %s8 = scalar_lea.vmem %s0, 32
  %v9 = vld [vmem:[%s8] sm:$0xff]
  %10 = xla_tuple %v9
  %11 = xla_tuple %10
  %v12 = vxor.u32 %v9, 2147483648
  %13 = xla_tuple %v12
  %s14 = scalar_lea.vmem %s1, 32
  %15 = vst [vmem:[%s14] sm:$0xff] %v12
  %s16 = scalar_lea.vmem %s0, 64
  %v17 = vld [vmem:[%s16] sm:$0xff]
  %18 = xla_tuple %v17
  %19 = xla_tuple %18
  %v20 = vxor.u32 %v17, 2147483648
  %21 = xla_tuple %v20
  %s22 = scalar_lea.vmem %s1, 64
  %23 = vst [vmem:[%s22] sm:$0xff] %v20
  %s24 = scalar_lea.vmem %s0, 96
  %v25 = vld [vmem:[%s24] sm:$0xff]
  %26 = xla_tuple %v25
  %27 = xla_tuple %26
  %v28 = vxor.u32 %v25, 2147483648
  %29 = xla_tuple %v28
  %s30 = scalar_lea.vmem %s1, 96
  %31 = vst [vmem:[%s30] sm:$0xff] %v28
  %s32 = scalar_lea.vmem %s0, 128
  %v33 = vld [vmem:[%s32] sm:$0xff]
  %34 = xla_tuple %v33
  %35 = xla_tuple %34
  %v36 = vxor.u32 %v33, 2147483648
  %37 = xla_tuple %v36
  %s38 = scalar_lea.vmem %s1, 128
  %39 = vst [vmem:[%s38] sm:$0xff] %v36
  %s40 = scalar_lea.vmem %s0, 160
  %v41 = vld [vmem:[%s40] sm:$0xff]
  %42 = xla_tuple %v41
  %43 = xla_tuple %42
  %v44 = vxor.u32 %v41, 2147483648
  %45 = xla_tuple %v44
  %s46 = scalar_lea.vmem %s1, 160
  %47 = vst [vmem:[%s46] sm:$0xff] %v44
  %s48 = scalar_lea.vmem %s0, 192
  %v49 = vld [vmem:[%s48] sm:$0xff]
  %50 = xla_tuple %v49
  %51 = xla_tuple %50
  %v52 = vxor.u32 %v49, 2147483648
  %53 = xla_tuple %v52
  %s54 = scalar_lea.vmem %s1, 192
  %55 = vst [vmem:[%s54] sm:$0xff] %v52
  %s56 = scalar_lea.vmem %s0, 224
  %v57 = vld [vmem:[%s56] sm:$0xff]
  %58 = xla_tuple %v57
  %59 = xla_tuple %58
  %v60 = vxor.u32 %v57, 2147483648
  %61 = xla_tuple %v60
  %s62 = scalar_lea.vmem %s1, 224
  %63 = vst [vmem:[%s62] sm:$0xff] %v60
  %s64 = scalar_lea.vmem %s0, 256
  %v65 = vld [vmem:[%s64] sm:$0xff]
  %66 = xla_tuple %v65
  %67 = xla_tuple %66
  %v68 = vxor.u32 %v65, 2147483648
  %69 = xla_tuple %v68
  %s70 = scalar_lea.vmem %s1, 256
  %71 = vst [vmem:[%s70] sm:$0xff] %v68
  %s72 = scalar_lea.vmem %s0, 288
  %v73 = vld [vmem:[%s72] sm:$0xff]
  %74 = xla_tuple %v73
  %75 = xla_tuple %74
  %v76 = vxor.u32 %v73, 2147483648
  %77 = xla_tuple %v76
  %s78 = scalar_lea.vmem %s1, 288
  %79 = vst [vmem:[%s78] sm:$0xff] %v76
  %s80 = scalar_lea.vmem %s0, 320
  %v81 = vld [vmem:[%s80] sm:$0xff]
  %82 = xla_tuple %v81
  %83 = xla_tuple %82
  %v84 = vxor.u32 %v81, 2147483648
  %85 = xla_tuple %v84
  %s86 = scalar_lea.vmem %s1, 320
  %87 = vst [vmem:[%s86] sm:$0xff] %v84
  %s88 = scalar_lea.vmem %s0, 352
  %v89 = vld [vmem:[%s88] sm:$0xff]
  %90 = xla_tuple %v89
  %91 = xla_tuple %90
  %v92 = vxor.u32 %v89, 2147483648
  %93 = xla_tuple %v92
  %s94 = scalar_lea.vmem %s1, 352
  %95 = vst [vmem:[%s94] sm:$0xff] %v92
  %s96 = scalar_lea.vmem %s0, 384
  %v97 = vld [vmem:[%s96] sm:$0xff]
  %98 = xla_tuple %v97
  %99 = xla_tuple %98
  %v100 = vxor.u32 %v97, 2147483648
  %101 = xla_tuple %v100
  %s102 = scalar_lea.vmem %s1, 384
  %103 = vst [vmem:[%s102] sm:$0xff] %v100
  %s104 = scalar_lea.vmem %s0, 416
  %v105 = vld [vmem:[%s104] sm:$0xff]
  %106 = xla_tuple %v105
  %107 = xla_tuple %106
  %v108 = vxor.u32 %v105, 2147483648
  %109 = xla_tuple %v108
  %s110 = scalar_lea.vmem %s1, 416
  %111 = vst [vmem:[%s110] sm:$0xff] %v108
  %s112 = scalar_lea.vmem %s0, 448
  %v113 = vld [vmem:[%s112] sm:$0xff]
  %114 = xla_tuple %v113
  %115 = xla_tuple %114
  %v116 = vxor.u32 %v113, 2147483648
  %117 = xla_tuple %v116
  %s118 = scalar_lea.vmem %s1, 448
  %119 = vst [vmem:[%s118] sm:$0xff] %v116
  %s120 = scalar_lea.vmem %s0, 480
  %v121 = vld [vmem:[%s120] sm:$0xff]
  %122 = xla_tuple %v121
  %123 = xla_tuple %122
  %v124 = vxor.u32 %v121, 2147483648
  %125 = xla_tuple %v124
  %s126 = scalar_lea.vmem %s1, 480
  %127 = vst [vmem:[%s126] sm:$0xff] %v124
  %s128 = scalar_lea.vmem %s0, 8
  %v129 = vld [vmem:[%s128] sm:$0xff]
  %130 = xla_tuple %v129
  %131 = xla_tuple %130
  %v132 = vxor.u32 %v129, 2147483648
  %133 = xla_tuple %v132
  %s134 = scalar_lea.vmem %s1, 8
  %135 = vst [vmem:[%s134] sm:$0xff] %v132
  %s136 = scalar_lea.vmem %s0, 40
  %v137 = vld [vmem:[%s136] sm:$0xff]
  %138 = xla_tuple %v137
  %139 = xla_tuple %138
  %v140 = vxor.u32 %v137, 2147483648
  %141 = xla_tuple %v140
  %s142 = scalar_lea.vmem %s1, 40
  %143 = vst [vmem:[%s142] sm:$0xff] %v140
  %s144 = scalar_lea.vmem %s0, 72
  %v145 = vld [vmem:[%s144] sm:$0xff]
  %146 = xla_tuple %v145
  %147 = xla_tuple %146
  %v148 = vxor.u32 %v145, 2147483648
  %149 = xla_tuple %v148
  %s150 = scalar_lea.vmem %s1, 72
  %151 = vst [vmem:[%s150] sm:$0xff] %v148
  %s152 = scalar_lea.vmem %s0, 104
  %v153 = vld [vmem:[%s152] sm:$0xff]
  %154 = xla_tuple %v153
  %155 = xla_tuple %154
  %v156 = vxor.u32 %v153, 2147483648
  %157 = xla_tuple %v156
  %s158 = scalar_lea.vmem %s1, 104
  %159 = vst [vmem:[%s158] sm:$0xff] %v156
  %s160 = scalar_lea.vmem %s0, 136
  %v161 = vld [vmem:[%s160] sm:$0xff]
  %162 = xla_tuple %v161
  %163 = xla_tuple %162
  %v164 = vxor.u32 %v161, 2147483648
  %165 = xla_tuple %v164
  %s166 = scalar_lea.vmem %s1, 136
  %167 = vst [vmem:[%s166] sm:$0xff] %v164
  %s168 = scalar_lea.vmem %s0, 168
  %v169 = vld [vmem:[%s168] sm:$0xff]
  %170 = xla_tuple %v169
  %171 = xla_tuple %170
  %v172 = vxor.u32 %v169, 2147483648
  %173 = xla_tuple %v172
  %s174 = scalar_lea.vmem %s1, 168
  %175 = vst [vmem:[%s174] sm:$0xff] %v172
  %s176 = scalar_lea.vmem %s0, 200
  %v177 = vld [vmem:[%s176] sm:$0xff]
  %178 = xla_tuple %v177
  %179 = xla_tuple %178
  %v180 = vxor.u32 %v177, 2147483648
  %181 = xla_tuple %v180
  %s182 = scalar_lea.vmem %s1, 200
  %183 = vst [vmem:[%s182] sm:$0xff] %v180
  %s184 = scalar_lea.vmem %s0, 232
  %v185 = vld [vmem:[%s184] sm:$0xff]
  %186 = xla_tuple %v185
  %187 = xla_tuple %186
  %v188 = vxor.u32 %v185, 2147483648
  %189 = xla_tuple %v188
  %s190 = scalar_lea.vmem %s1, 232
  %191 = vst [vmem:[%s190] sm:$0xff] %v188
  %s192 = scalar_lea.vmem %s0, 264
  %v193 = vld [vmem:[%s192] sm:$0xff]
  %194 = xla_tuple %v193
  %195 = xla_tuple %194
  %v196 = vxor.u32 %v193, 2147483648
  %197 = xla_tuple %v196
  %s198 = scalar_lea.vmem %s1, 264
  %199 = vst [vmem:[%s198] sm:$0xff] %v196
  %s200 = scalar_lea.vmem %s0, 296
  %v201 = vld [vmem:[%s200] sm:$0xff]
  %202 = xla_tuple %v201
  %203 = xla_tuple %202
  %v204 = vxor.u32 %v201, 2147483648
  %205 = xla_tuple %v204
  %s206 = scalar_lea.vmem %s1, 296
  %207 = vst [vmem:[%s206] sm:$0xff] %v204
  %s208 = scalar_lea.vmem %s0, 328
  %v209 = vld [vmem:[%s208] sm:$0xff]
  %210 = xla_tuple %v209
  %211 = xla_tuple %210
  %v212 = vxor.u32 %v209, 2147483648
  %213 = xla_tuple %v212
  %s214 = scalar_lea.vmem %s1, 328
  %215 = vst [vmem:[%s214] sm:$0xff] %v212
  %s216 = scalar_lea.vmem %s0, 360
  %v217 = vld [vmem:[%s216] sm:$0xff]
  %218 = xla_tuple %v217
  %219 = xla_tuple %218
  %v220 = vxor.u32 %v217, 2147483648
  %221 = xla_tuple %v220
  %s222 = scalar_lea.vmem %s1, 360
  %223 = vst [vmem:[%s222] sm:$0xff] %v220
  %s224 = scalar_lea.vmem %s0, 392
  %v225 = vld [vmem:[%s224] sm:$0xff]
  %226 = xla_tuple %v225
  %227 = xla_tuple %226
  %v228 = vxor.u32 %v225, 2147483648
  %229 = xla_tuple %v228
  %s230 = scalar_lea.vmem %s1, 392
  %231 = vst [vmem:[%s230] sm:$0xff] %v228
  %s232 = scalar_lea.vmem %s0, 424
  %v233 = vld [vmem:[%s232] sm:$0xff]
  %234 = xla_tuple %v233
  %235 = xla_tuple %234
  %v236 = vxor.u32 %v233, 2147483648
  %237 = xla_tuple %v236
  %s238 = scalar_lea.vmem %s1, 424
  %239 = vst [vmem:[%s238] sm:$0xff] %v236
  %s240 = scalar_lea.vmem %s0, 456
  %v241 = vld [vmem:[%s240] sm:$0xff]
  %242 = xla_tuple %v241
  %243 = xla_tuple %242
  %v244 = vxor.u32 %v241, 2147483648
  %245 = xla_tuple %v244
  %s246 = scalar_lea.vmem %s1, 456
  %247 = vst [vmem:[%s246] sm:$0xff] %v244
  %s248 = scalar_lea.vmem %s0, 488
  %v249 = vld [vmem:[%s248] sm:$0xff]
  %250 = xla_tuple %v249
  %251 = xla_tuple %250
  %v252 = vxor.u32 %v249, 2147483648
  %253 = xla_tuple %v252
  %s254 = scalar_lea.vmem %s1, 488
  %255 = vst [vmem:[%s254] sm:$0xff] %v252
  %s256 = scalar_lea.vmem %s0, 16
  %v257 = vld [vmem:[%s256] sm:$0xff]
  %258 = xla_tuple %v257
  %259 = xla_tuple %258
  %v260 = vxor.u32 %v257, 2147483648
  %261 = xla_tuple %v260
  %s262 = scalar_lea.vmem %s1, 16
  %263 = vst [vmem:[%s262] sm:$0xff] %v260
  %s264 = scalar_lea.vmem %s0, 48
  %v265 = vld [vmem:[%s264] sm:$0xff]
  %266 = xla_tuple %v265
  %267 = xla_tuple %266
  %v268 = vxor.u32 %v265, 2147483648
  %269 = xla_tuple %v268
  %s270 = scalar_lea.vmem %s1, 48
  %271 = vst [vmem:[%s270] sm:$0xff] %v268
  %s272 = scalar_lea.vmem %s0, 80
  %v273 = vld [vmem:[%s272] sm:$0xff]
  %274 = xla_tuple %v273
  %275 = xla_tuple %274
  %v276 = vxor.u32 %v273, 2147483648
  %277 = xla_tuple %v276
  %s278 = scalar_lea.vmem %s1, 80
  %279 = vst [vmem:[%s278] sm:$0xff] %v276
  %s280 = scalar_lea.vmem %s0, 112
  %v281 = vld [vmem:[%s280] sm:$0xff]
  %282 = xla_tuple %v281
  %283 = xla_tuple %282
  %v284 = vxor.u32 %v281, 2147483648
  %285 = xla_tuple %v284
  %s286 = scalar_lea.vmem %s1, 112
  %287 = vst [vmem:[%s286] sm:$0xff] %v284
  %s288 = scalar_lea.vmem %s0, 144
  %v289 = vld [vmem:[%s288] sm:$0xff]
  %290 = xla_tuple %v289
  %291 = xla_tuple %290
  %v292 = vxor.u32 %v289, 2147483648
  %293 = xla_tuple %v292
  %s294 = scalar_lea.vmem %s1, 144
  %295 = vst [vmem:[%s294] sm:$0xff] %v292
  %s296 = scalar_lea.vmem %s0, 176
  %v297 = vld [vmem:[%s296] sm:$0xff]
  %298 = xla_tuple %v297
  %299 = xla_tuple %298
  %v300 = vxor.u32 %v297, 2147483648
  %301 = xla_tuple %v300
  %s302 = scalar_lea.vmem %s1, 176
  %303 = vst [vmem:[%s302] sm:$0xff] %v300
  %s304 = scalar_lea.vmem %s0, 208
  %v305 = vld [vmem:[%s304] sm:$0xff]
  %306 = xla_tuple %v305
  %307 = xla_tuple %306
  %v308 = vxor.u32 %v305, 2147483648
  %309 = xla_tuple %v308
  %s310 = scalar_lea.vmem %s1, 208
  %311 = vst [vmem:[%s310] sm:$0xff] %v308
  %s312 = scalar_lea.vmem %s0, 240
  %v313 = vld [vmem:[%s312] sm:$0xff]
  %314 = xla_tuple %v313
  %315 = xla_tuple %314
  %v316 = vxor.u32 %v313, 2147483648
  %317 = xla_tuple %v316
  %s318 = scalar_lea.vmem %s1, 240
  %319 = vst [vmem:[%s318] sm:$0xff] %v316
  %s320 = scalar_lea.vmem %s0, 272
  %v321 = vld [vmem:[%s320] sm:$0xff]
  %322 = xla_tuple %v321
  %323 = xla_tuple %322
  %v324 = vxor.u32 %v321, 2147483648
  %325 = xla_tuple %v324
  %s326 = scalar_lea.vmem %s1, 272
  %327 = vst [vmem:[%s326] sm:$0xff] %v324
  %s328 = scalar_lea.vmem %s0, 304
  %v329 = vld [vmem:[%s328] sm:$0xff]
  %330 = xla_tuple %v329
  %331 = xla_tuple %330
  %v332 = vxor.u32 %v329, 2147483648
  %333 = xla_tuple %v332
  %s334 = scalar_lea.vmem %s1, 304
  %335 = vst [vmem:[%s334] sm:$0xff] %v332
  %s336 = scalar_lea.vmem %s0, 336
  %v337 = vld [vmem:[%s336] sm:$0xff]
  %338 = xla_tuple %v337
  %339 = xla_tuple %338
  %v340 = vxor.u32 %v337, 2147483648
  %341 = xla_tuple %v340
  %s342 = scalar_lea.vmem %s1, 336
  %343 = vst [vmem:[%s342] sm:$0xff] %v340
  %s344 = scalar_lea.vmem %s0, 368
  %v345 = vld [vmem:[%s344] sm:$0xff]
  %346 = xla_tuple %v345
  %347 = xla_tuple %346
  %v348 = vxor.u32 %v345, 2147483648
  %349 = xla_tuple %v348
  %s350 = scalar_lea.vmem %s1, 368
  %351 = vst [vmem:[%s350] sm:$0xff] %v348
  %s352 = scalar_lea.vmem %s0, 400
  %v353 = vld [vmem:[%s352] sm:$0xff]
  %354 = xla_tuple %v353
  %355 = xla_tuple %354
  %v356 = vxor.u32 %v353, 2147483648
  %357 = xla_tuple %v356
  %s358 = scalar_lea.vmem %s1, 400
  %359 = vst [vmem:[%s358] sm:$0xff] %v356
  %s360 = scalar_lea.vmem %s0, 432
  %v361 = vld [vmem:[%s360] sm:$0xff]
  %362 = xla_tuple %v361
  %363 = xla_tuple %362
  %v364 = vxor.u32 %v361, 2147483648
  %365 = xla_tuple %v364
  %s366 = scalar_lea.vmem %s1, 432
  %367 = vst [vmem:[%s366] sm:$0xff] %v364
  %s368 = scalar_lea.vmem %s0, 464
  %v369 = vld [vmem:[%s368] sm:$0xff]
  %370 = xla_tuple %v369
  %371 = xla_tuple %370
  %v372 = vxor.u32 %v369, 2147483648
  %373 = xla_tuple %v372
  %s374 = scalar_lea.vmem %s1, 464
  %375 = vst [vmem:[%s374] sm:$0xff] %v372
  %s376 = scalar_lea.vmem %s0, 496
  %v377 = vld [vmem:[%s376] sm:$0xff]
  %378 = xla_tuple %v377
  %379 = xla_tuple %378
  %v380 = vxor.u32 %v377, 2147483648
  %381 = xla_tuple %v380
  %s382 = scalar_lea.vmem %s1, 496
  %383 = vst [vmem:[%s382] sm:$0xff] %v380
  %s384 = scalar_lea.vmem %s0, 24
  %v385 = vld [vmem:[%s384] sm:$0xff]
  %386 = xla_tuple %v385
  %387 = xla_tuple %386
  %v388 = vxor.u32 %v385, 2147483648
  %389 = xla_tuple %v388
  %s390 = scalar_lea.vmem %s1, 24
  %391 = vst [vmem:[%s390] sm:$0xff] %v388
  %s392 = scalar_lea.vmem %s0, 56
  %v393 = vld [vmem:[%s392] sm:$0xff]
  %394 = xla_tuple %v393
  %395 = xla_tuple %394
  %v396 = vxor.u32 %v393, 2147483648
  %397 = xla_tuple %v396
  %s398 = scalar_lea.vmem %s1, 56
  %399 = vst [vmem:[%s398] sm:$0xff] %v396
  %s400 = scalar_lea.vmem %s0, 88
  %v401 = vld [vmem:[%s400] sm:$0xff]
  %402 = xla_tuple %v401
  %403 = xla_tuple %402
  %v404 = vxor.u32 %v401, 2147483648
  %405 = xla_tuple %v404
  %s406 = scalar_lea.vmem %s1, 88
  %407 = vst [vmem:[%s406] sm:$0xff] %v404
  %s408 = scalar_lea.vmem %s0, 120
  %v409 = vld [vmem:[%s408] sm:$0xff]
  %410 = xla_tuple %v409
  %411 = xla_tuple %410
  %v412 = vxor.u32 %v409, 2147483648
  %413 = xla_tuple %v412
  %s414 = scalar_lea.vmem %s1, 120
  %415 = vst [vmem:[%s414] sm:$0xff] %v412
  %s416 = scalar_lea.vmem %s0, 152
  %v417 = vld [vmem:[%s416] sm:$0xff]
  %418 = xla_tuple %v417
  %419 = xla_tuple %418
  %v420 = vxor.u32 %v417, 2147483648
  %421 = xla_tuple %v420
  %s422 = scalar_lea.vmem %s1, 152
  %423 = vst [vmem:[%s422] sm:$0xff] %v420
  %s424 = scalar_lea.vmem %s0, 184
  %v425 = vld [vmem:[%s424] sm:$0xff]
  %426 = xla_tuple %v425
  %427 = xla_tuple %426
  %v428 = vxor.u32 %v425, 2147483648
  %429 = xla_tuple %v428
  %s430 = scalar_lea.vmem %s1, 184
  %431 = vst [vmem:[%s430] sm:$0xff] %v428
  %s432 = scalar_lea.vmem %s0, 216
  %v433 = vld [vmem:[%s432] sm:$0xff]
  %434 = xla_tuple %v433
  %435 = xla_tuple %434
  %v436 = vxor.u32 %v433, 2147483648
  %437 = xla_tuple %v436
  %s438 = scalar_lea.vmem %s1, 216
  %439 = vst [vmem:[%s438] sm:$0xff] %v436
  %s440 = scalar_lea.vmem %s0, 248
  %v441 = vld [vmem:[%s440] sm:$0xff]
  %442 = xla_tuple %v441
  %443 = xla_tuple %442
  %v444 = vxor.u32 %v441, 2147483648
  %445 = xla_tuple %v444
  %s446 = scalar_lea.vmem %s1, 248
  %447 = vst [vmem:[%s446] sm:$0xff] %v444
  %s448 = scalar_lea.vmem %s0, 280
  %v449 = vld [vmem:[%s448] sm:$0xff]
  %450 = xla_tuple %v449
  %451 = xla_tuple %450
  %v452 = vxor.u32 %v449, 2147483648
  %453 = xla_tuple %v452
  %s454 = scalar_lea.vmem %s1, 280
  %455 = vst [vmem:[%s454] sm:$0xff] %v452
  %s456 = scalar_lea.vmem %s0, 312
  %v457 = vld [vmem:[%s456] sm:$0xff]
  %458 = xla_tuple %v457
  %459 = xla_tuple %458
  %v460 = vxor.u32 %v457, 2147483648
  %461 = xla_tuple %v460
  %s462 = scalar_lea.vmem %s1, 312
  %463 = vst [vmem:[%s462] sm:$0xff] %v460
  %s464 = scalar_lea.vmem %s0, 344
  %v465 = vld [vmem:[%s464] sm:$0xff]
  %466 = xla_tuple %v465
  %467 = xla_tuple %466
  %v468 = vxor.u32 %v465, 2147483648
  %469 = xla_tuple %v468
  %s470 = scalar_lea.vmem %s1, 344
  %471 = vst [vmem:[%s470] sm:$0xff] %v468
  %s472 = scalar_lea.vmem %s0, 376
  %v473 = vld [vmem:[%s472] sm:$0xff]
  %474 = xla_tuple %v473
  %475 = xla_tuple %474
  %v476 = vxor.u32 %v473, 2147483648
  %477 = xla_tuple %v476
  %s478 = scalar_lea.vmem %s1, 376
  %479 = vst [vmem:[%s478] sm:$0xff] %v476
  %s480 = scalar_lea.vmem %s0, 408
  %v481 = vld [vmem:[%s480] sm:$0xff]
  %482 = xla_tuple %v481
  %483 = xla_tuple %482
  %v484 = vxor.u32 %v481, 2147483648
  %485 = xla_tuple %v484
  %s486 = scalar_lea.vmem %s1, 408
  %487 = vst [vmem:[%s486] sm:$0xff] %v484
  %s488 = scalar_lea.vmem %s0, 440
  %v489 = vld [vmem:[%s488] sm:$0xff]
  %490 = xla_tuple %v489
  %491 = xla_tuple %490
  %v492 = vxor.u32 %v489, 2147483648
  %493 = xla_tuple %v492
  %s494 = scalar_lea.vmem %s1, 440
  %495 = vst [vmem:[%s494] sm:$0xff] %v492
  %s496 = scalar_lea.vmem %s0, 472
  %v497 = vld [vmem:[%s496] sm:$0xff]
  %498 = xla_tuple %v497
  %499 = xla_tuple %498
  %v500 = vxor.u32 %v497, 2147483648
  %501 = xla_tuple %v500
  %s502 = scalar_lea.vmem %s1, 472
  %503 = vst [vmem:[%s502] sm:$0xff] %v500
  %s504 = scalar_lea.vmem %s0, 504
  %v505 = vld [vmem:[%s504] sm:$0xff]
  %506 = xla_tuple %v505
  %507 = xla_tuple %506
  %v508 = vxor.u32 %v505, 2147483648
  %509 = xla_tuple %v508
  %s510 = scalar_lea.vmem %s1, 504
  %511 = vst [vmem:[%s510] sm:$0xff] %v508

// kernel: fno2d_forward.11
$region0: #{fno2d_forward.11}
  #allocation0 [shape = 'u32[]', space=smem, size = 0x4, offset = 0x4, fixed_abs, tag = 'smem constant byte address 0x4 - core index']
  #allocation1 [shape = 'u32[144,128]{1,0:T(1,128)}', space=vmem, size = 0x12000, scoped, tag = 'internal scratch']
  %s0 = inlined_call_operand.vmem [shape: f32[16,2,64], index: 0, kind: input, shape index: {}]
  %s1 = inlined_call_operand.vmem [shape: f32[16,64,64], index: 1, kind: input, shape index: {}]
  %s2 = inlined_call_operand.vmem [shape: f32[16,2,64], index: 2, kind: output, shape index: {}]
  %s3 = sld [smem:[#allocation0]]
  $region18: #{fno2d_forward.11} parent=0
    _
  %s5 = ssub.s32 1, %s3
  %s6 = scalar_select 0, %s5, %s3
  // Predicated region
  $region2: #{fno2d_forward.11} parent=0 // pred_check
    _
  $region3: #{fno2d_forward.11} parent=0 // pred_check_branch
    %8 = sbr.rel (0) target = $region5
  $region4: #{fno2d_forward.11} parent=0 // pred_region
    _
  $region5: #{fno2d_forward.11} parent=0 // pred_fallthru
    _
  // Predicated region
  $region6: #{fno2d_forward.11} parent=0 // pred_check
    _
  $region7: #{fno2d_forward.11} parent=0 // pred_check_branch
    %10 = sbr.rel (0) target = $region9
  $region8: #{fno2d_forward.11} parent=0 // pred_region
    _
  $region9: #{fno2d_forward.11} parent=0 // pred_fallthru
    _
  %v11 = vld [vmem:[%s0] sm:$0x3]
  %v12 = vld [vmem:[%s1] sm:$0xff]
  %v13 = vld [vmem:[%s1 + $0x8] sm:$0xff]
  %v14 = vld [vmem:[%s1 + $0x10] sm:$0xff]
  %v15 = vld [vmem:[%s1 + $0x18] sm:$0xff]
  %v16 = vld [vmem:[%s1 + $0x20] sm:$0xff]
  %v17 = vld [vmem:[%s1 + $0x28] sm:$0xff]
  %v18 = vld [vmem:[%s1 + $0x30] sm:$0xff]
  %v19 = vld [vmem:[%s1 + $0x38] sm:$0xff]
  %vm20 = vcmask 523264
  %v22 = vsel %vm20, %v11, 0
  %24 = vmatprep.subr.mxu0 0.0
  %25 = vmatpush1.msra.mxu0 %v12
  %26 = vmatprep.subr.mxu0 0.0
  %27 = vmatpush1.msra.mxu0 %v13
  %28 = vmatprep.subr.mxu0 0.0
  %29 = vmatpush1.msra.mxu0 %v14
  %30 = vmatprep.subr.mxu0 0.0
  %31 = vmatpush1.msra.mxu0 %v15
  %32 = vmatprep.subr.mxu0 0.0
  %33 = vmatpush1.msra.mxu0 %v16
  %34 = vmatprep.subr.mxu0 0.0
  %35 = vmatpush1.msra.mxu0 %v17
  %36 = vmatprep.subr.mxu0 0.0
  %37 = vmatpush1.msra.mxu0 %v18
  %38 = vmatprep.subr.mxu0 0.0
  %39 = vmatpush1.msra.mxu0 %v19
  %40 = vmatprep.subr.mxu0 0.0
  %41 = vmatpush1.msra.mxu0 0.0
  %42 = vmatprep.subr.mxu0 0.0
  %43 = vmatpush1.msra.mxu0 0.0
  %44 = vmatprep.subr.mxu0 0.0
  %45 = vmatpush1.msra.mxu0 0.0
  %46 = vmatprep.subr.mxu0 0.0
  %47 = vmatpush1.msra.mxu0 0.0
  %48 = vmatprep.subr.mxu0 0.0
  %49 = vmatpush1.msra.mxu0 0.0
  %50 = vmatprep.subr.mxu0 0.0
  %51 = vmatpush1.msra.mxu0 0.0
  %52 = vmatprep.subr.mxu0 0.0
  %53 = vmatpush1.msra.mxu0 0.0
  %54 = vmatprep.subr.mxu0 0.0
  %55 = vmatpush1.msra.mxu0 0.0
  %56 = vmatprep.subr.mxu0 0.0
  %57 = vmatpush1.msra.mxu0 0.0
  %58 = vmatprep.subr.mxu0 0.0
  %59 = vmatpush1.msra.mxu0 0.0
  %60 = vmatprep.subr.mxu0 0.0
  %61 = vmatpush1.msra.mxu0 0.0
  %62 = vmatprep.subr.mxu0 0.0
  %63 = vmatpush1.msra.mxu0 0.0
  %64 = vmatprep.subr.mxu0 0.0
  %65 = vmatpush1.msra.mxu0 0.0
  %66 = vmatprep.subr.mxu0 0.0
  %67 = vmatpush1.msra.mxu0 0.0
  %68 = vmatprep.subr.mxu0 0.0
  %69 = vmatpush1.msra.mxu0 0.0
  %70 = vmatprep.subr.mxu0 0.0
  %71 = vmatpush1.msra.mxu0 0.0
  %72 = vmatprep.subr.mxu0 0.0
  %73 = vmatpush1.msra.mxu0 0.0
  %74 = vmatprep.subr.mxu0 0.0
  %75 = vmatpush1.msra.mxu0 0.0
  %76 = vmatprep.subr.mxu0 0.0
  %77 = vmatpush1.msra.mxu0 0.0
  %78 = vmatprep.subr.mxu0 0.0
  %79 = vmatpush1.msra.mxu0 0.0
  %80 = vmatprep.subr.mxu0 0.0
  %81 = vmatpush1.msra.mxu0 0.0
  %82 = vmatprep.subr.mxu0 0.0
  %83 = vmatpush1.msra.mxu0 0.0
  %84 = vmatprep.subr.mxu0 0.0
  %85 = vmatpush1.msra.mxu0 0.0
  %86 = vmatprep.subr.mxu0 0.0
  %87 = vmatpush1.msra.mxu0 0.0
  %88 = vmatprep.mubr.f32.mxu0 0.0
  %89 = vmatmul.mubr.f32.gmra.mrb[0].mxu0 %v22
  %v90 = vpop.f32.mrb[0].mxu0
  %v91 = vadd.f32 0.0, %v90
  %v92 = vpop.f32.mrb[0].mxu0
  %93 = vdwg.mxu0
  %vm94 = vcmask 517120
  %95 = vst.msk [vmem:[%s2] sm:$0x3] %vm94, %v91
  %s96 = scalar_lea.vmem %s0, 2
  %v97 = vld [vmem:[%s96] sm:$0x3]
  %s98 = scalar_lea.vmem %s1, 64
  %v99 = vld [vmem:[%s98] sm:$0xff]
  %v100 = vld [vmem:[%s98 + $0x8] sm:$0xff]
  %v101 = vld [vmem:[%s98 + $0x10] sm:$0xff]
  %v102 = vld [vmem:[%s98 + $0x18] sm:$0xff]
  %v103 = vld [vmem:[%s98 + $0x20] sm:$0xff]
  %v104 = vld [vmem:[%s98 + $0x28] sm:$0xff]
  %v105 = vld [vmem:[%s98 + $0x30] sm:$0xff]
  %v106 = vld [vmem:[%s98 + $0x38] sm:$0xff]
  %v108 = vsel %vm20, %v97, 0
  %110 = vmatprep.subr.mxu0 0.0
  %111 = vmatpush1.msra.mxu0 %v99
  %112 = vmatprep.subr.mxu0 0.0
  %113 = vmatpush1.msra.mxu0 %v100
  %114 = vmatprep.subr.mxu0 0.0
  %115 = vmatpush1.msra.mxu0 %v101
  %116 = vmatprep.subr.mxu0 0.0
  %117 = vmatpush1.msra.mxu0 %v102
  %118 = vmatprep.subr.mxu0 0.0
  %119 = vmatpush1.msra.mxu0 %v103
  %120 = vmatprep.subr.mxu0 0.0
  %121 = vmatpush1.msra.mxu0 %v104
  %122 = vmatprep.subr.mxu0 0.0
  %123 = vmatpush1.msra.mxu0 %v105
  %124 = vmatprep.subr.mxu0 0.0
  %125 = vmatpush1.msra.mxu0 %v106
  %126 = vmatprep.subr.mxu0 0.0
  %127 = vmatpush1.msra.mxu0 0.0
  %128 = vmatprep.subr.mxu0 0.0
  %129 = vmatpush1.msra.mxu0 0.0
  %130 = vmatprep.subr.mxu0 0.0
  %131 = vmatpush1.msra.mxu0 0.0
  %132 = vmatprep.subr.mxu0 0.0
  %133 = vmatpush1.msra.mxu0 0.0
  %134 = vmatprep.subr.mxu0 0.0
  %135 = vmatpush1.msra.mxu0 0.0
  %136 = vmatprep.subr.mxu0 0.0
  %137 = vmatpush1.msra.mxu0 0.0
  %138 = vmatprep.subr.mxu0 0.0
  %139 = vmatpush1.msra.mxu0 0.0
  %140 = vmatprep.subr.mxu0 0.0
  %141 = vmatpush1.msra.mxu0 0.0
  %142 = vmatprep.subr.mxu0 0.0
  %143 = vmatpush1.msra.mxu0 0.0
  %144 = vmatprep.subr.mxu0 0.0
  %145 = vmatpush1.msra.mxu0 0.0
  %146 = vmatprep.subr.mxu0 0.0
  %147 = vmatpush1.msra.mxu0 0.0
  %148 = vmatprep.subr.mxu0 0.0
  %149 = vmatpush1.msra.mxu0 0.0
  %150 = vmatprep.subr.mxu0 0.0
  %151 = vmatpush1.msra.mxu0 0.0
  %152 = vmatprep.subr.mxu0 0.0
  %153 = vmatpush1.msra.mxu0 0.0
  %154 = vmatprep.subr.mxu0 0.0
  %155 = vmatpush1.msra.mxu0 0.0
  %156 = vmatprep.subr.mxu0 0.0
  %157 = vmatpush1.msra.mxu0 0.0
  %158 = vmatprep.subr.mxu0 0.0
  %159 = vmatpush1.msra.mxu0 0.0
  %160 = vmatprep.subr.mxu0 0.0
  %161 = vmatpush1.msra.mxu0 0.0
  %162 = vmatprep.subr.mxu0 0.0
  %163 = vmatpush1.msra.mxu0 0.0
  %164 = vmatprep.subr.mxu0 0.0
  %165 = vmatpush1.msra.mxu0 0.0
  %166 = vmatprep.subr.mxu0 0.0
  %167 = vmatpush1.msra.mxu0 0.0
  %168 = vmatprep.subr.mxu0 0.0
  %169 = vmatpush1.msra.mxu0 0.0
  %170 = vmatprep.subr.mxu0 0.0
  %171 = vmatpush1.msra.mxu0 0.0
  %172 = vmatprep.subr.mxu0 0.0
  %173 = vmatpush1.msra.mxu0 0.0
  %174 = vmatprep.mubr.f32.mxu0 0.0
  %175 = vmatmul.mubr.f32.gmra.mrb[0].mxu0 %v108
  %v176 = vpop.f32.mrb[0].mxu0
  %v177 = vadd.f32 0.0, %v176
  %v178 = vpop.f32.mrb[0].mxu0
  %179 = vdwg.mxu0
  %s180 = scalar_lea.vmem %s2, 2
  %181 = vst.msk [vmem:[%s180] sm:$0x3] %vm94, %v177
  %s182 = scalar_lea.vmem %s0, 4
  %v183 = vld [vmem:[%s182] sm:$0x3]
  %s184 = scalar_lea.vmem %s1, 128
  %v185 = vld [vmem:[%s184] sm:$0xff]
  %v186 = vld [vmem:[%s184 + $0x8] sm:$0xff]
  %v187 = vld [vmem:[%s184 + $0x10] sm:$0xff]
  %v188 = vld [vmem:[%s184 + $0x18] sm:$0xff]
  %v189 = vld [vmem:[%s184 + $0x20] sm:$0xff]
  %v190 = vld [vmem:[%s184 + $0x28] sm:$0xff]
  %v191 = vld [vmem:[%s184 + $0x30] sm:$0xff]
  %v192 = vld [vmem:[%s184 + $0x38] sm:$0xff]
  %v194 = vsel %vm20, %v183, 0
  %196 = vmatprep.subr.mxu0 0.0
  %197 = vmatpush1.msra.mxu0 %v185
  %198 = vmatprep.subr.mxu0 0.0
  %199 = vmatpush1.msra.mxu0 %v186
  %200 = vmatprep.subr.mxu0 0.0
  %201 = vmatpush1.msra.mxu0 %v187
  %202 = vmatprep.subr.mxu0 0.0
  %203 = vmatpush1.msra.mxu0 %v188
  %204 = vmatprep.subr.mxu0 0.0
  %205 = vmatpush1.msra.mxu0 %v189
  %206 = vmatprep.subr.mxu0 0.0
  %207 = vmatpush1.msra.mxu0 %v190
  %208 = vmatprep.subr.mxu0 0.0
  %209 = vmatpush1.msra.mxu0 %v191
  %210 = vmatprep.subr.mxu0 0.0
  %211 = vmatpush1.msra.mxu0 %v192
  %212 = vmatprep.subr.mxu0 0.0
  %213 = vmatpush1.msra.mxu0 0.0
  %214 = vmatprep.subr.mxu0 0.0
  %215 = vmatpush1.msra.mxu0 0.0
  %216 = vmatprep.subr.mxu0 0.0
  %217 = vmatpush1.msra.mxu0 0.0
  %218 = vmatprep.subr.mxu0 0.0
  %219 = vmatpush1.msra.mxu0 0.0
  %220 = vmatprep.subr.mxu0 0.0
  %221 = vmatpush1.msra.mxu0 0.0
  %222 = vmatprep.subr.mxu0 0.0
  %223 = vmatpush1.msra.mxu0 0.0
  %224 = vmatprep.subr.mxu0 0.0
  %225 = vmatpush1.msra.mxu0 0.0
  %226 = vmatprep.subr.mxu0 0.0
  %227 = vmatpush1.msra.mxu0 0.0
  %228 = vmatprep.subr.mxu0 0.0
  %229 = vmatpush1.msra.mxu0 0.0
  %230 = vmatprep.subr.mxu0 0.0
  %231 = vmatpush1.msra.mxu0 0.0
  %232 = vmatprep.subr.mxu0 0.0
  %233 = vmatpush1.msra.mxu0 0.0
  %234 = vmatprep.subr.mxu0 0.0
  %235 = vmatpush1.msra.mxu0 0.0
  %236 = vmatprep.subr.mxu0 0.0
  %237 = vmatpush1.msra.mxu0 0.0
  %238 = vmatprep.subr.mxu0 0.0
  %239 = vmatpush1.msra.mxu0 0.0
  %240 = vmatprep.subr.mxu0 0.0
  %241 = vmatpush1.msra.mxu0 0.0
  %242 = vmatprep.subr.mxu0 0.0
  %243 = vmatpush1.msra.mxu0 0.0
  %244 = vmatprep.subr.mxu0 0.0
  %245 = vmatpush1.msra.mxu0 0.0
  %246 = vmatprep.subr.mxu0 0.0
  %247 = vmatpush1.msra.mxu0 0.0
  %248 = vmatprep.subr.mxu0 0.0
  %249 = vmatpush1.msra.mxu0 0.0
  %250 = vmatprep.subr.mxu0 0.0
  %251 = vmatpush1.msra.mxu0 0.0
  %252 = vmatprep.subr.mxu0 0.0
  %253 = vmatpush1.msra.mxu0 0.0
  %254 = vmatprep.subr.mxu0 0.0
  %255 = vmatpush1.msra.mxu0 0.0
  %256 = vmatprep.subr.mxu0 0.0
  %257 = vmatpush1.msra.mxu0 0.0
  %258 = vmatprep.subr.mxu0 0.0
  %259 = vmatpush1.msra.mxu0 0.0
  %260 = vmatprep.mubr.f32.mxu0 0.0
  %261 = vmatmul.mubr.f32.gmra.mrb[0].mxu0 %v194
  %v262 = vpop.f32.mrb[0].mxu0
  %v263 = vadd.f32 0.0, %v262
  %v264 = vpop.f32.mrb[0].mxu0
  %265 = vdwg.mxu0
  %s266 = scalar_lea.vmem %s2, 4
  %267 = vst.msk [vmem:[%s266] sm:$0x3] %vm94, %v263
  %s268 = scalar_lea.vmem %s0, 6
  %v269 = vld [vmem:[%s268] sm:$0x3]
  %s270 = scalar_lea.vmem %s1, 192
  %v271 = vld [vmem:[%s270] sm:$0xff]
  %v272 = vld [vmem:[%s270 + $0x8] sm:$0xff]
  %v273 = vld [vmem:[%s270 + $0x10] sm:$0xff]
  %v274 = vld [vmem:[%s270 + $0x18] sm:$0xff]
  %v275 = vld [vmem:[%s270 + $0x20] sm:$0xff]
  %v276 = vld [vmem:[%s270 + $0x28] sm:$0xff]
  %v277 = vld [vmem:[%s270 + $0x30] sm:$0xff]
  %v278 = vld [vmem:[%s270 + $0x38] sm:$0xff]
  %v280 = vsel %vm20, %v269, 0
  %282 = vmatprep.subr.mxu0 0.0
  %283 = vmatpush1.msra.mxu0 %v271
  %284 = vmatprep.subr.mxu0 0.0
  %285 = vmatpush1.msra.mxu0 %v272
  %286 = vmatprep.subr.mxu0 0.0
  %287 = vmatpush1.msra.mxu0 %v273
  %288 = vmatprep.subr.mxu0 0.0
  %289 = vmatpush1.msra.mxu0 %v274
  %290 = vmatprep.subr.mxu0 0.0
  %291 = vmatpush1.msra.mxu0 %v275
  %292 = vmatprep.subr.mxu0 0.0
  %293 = vmatpush1.msra.mxu0 %v276
  %294 = vmatprep.subr.mxu0 0.0
  %295 = vmatpush1.msra.mxu0 %v277
  %296 = vmatprep.subr.mxu0 0.0
  %297 = vmatpush1.msra.mxu0 %v278
  %298 = vmatprep.subr.mxu0 0.0
  %299 = vmatpush1.msra.mxu0 0.0
  %300 = vmatprep.subr.mxu0 0.0
  %301 = vmatpush1.msra.mxu0 0.0
  %302 = vmatprep.subr.mxu0 0.0
  %303 = vmatpush1.msra.mxu0 0.0
  %304 = vmatprep.subr.mxu0 0.0
  %305 = vmatpush1.msra.mxu0 0.0
  %306 = vmatprep.subr.mxu0 0.0
  %307 = vmatpush1.msra.mxu0 0.0
  %308 = vmatprep.subr.mxu0 0.0
  %309 = vmatpush1.msra.mxu0 0.0
  %310 = vmatprep.subr.mxu0 0.0
  %311 = vmatpush1.msra.mxu0 0.0
  %312 = vmatprep.subr.mxu0 0.0
  %313 = vmatpush1.msra.mxu0 0.0
  %314 = vmatprep.subr.mxu0 0.0
  %315 = vmatpush1.msra.mxu0 0.0
  %316 = vmatprep.subr.mxu0 0.0
  %317 = vmatpush1.msra.mxu0 0.0
  %318 = vmatprep.subr.mxu0 0.0
  %319 = vmatpush1.msra.mxu0 0.0
  %320 = vmatprep.subr.mxu0 0.0
  %321 = vmatpush1.msra.mxu0 0.0
  %322 = vmatprep.subr.mxu0 0.0
  %323 = vmatpush1.msra.mxu0 0.0
  %324 = vmatprep.subr.mxu0 0.0
  %325 = vmatpush1.msra.mxu0 0.0
  %326 = vmatprep.subr.mxu0 0.0
  %327 = vmatpush1.msra.mxu0 0.0
  %328 = vmatprep.subr.mxu0 0.0
  %329 = vmatpush1.msra.mxu0 0.0
  %330 = vmatprep.subr.mxu0 0.0
  %331 = vmatpush1.msra.mxu0 0.0
  %332 = vmatprep.subr.mxu0 0.0
  %333 = vmatpush1.msra.mxu0 0.0
  %334 = vmatprep.subr.mxu0 0.0
  %335 = vmatpush1.msra.mxu0 0.0
  %336 = vmatprep.subr.mxu0 0.0
  %337 = vmatpush1.msra.mxu0 0.0
  %338 = vmatprep.subr.mxu0 0.0
  %339 = vmatpush1.msra.mxu0 0.0
  %340 = vmatprep.subr.mxu0 0.0
  %341 = vmatpush1.msra.mxu0 0.0
  %342 = vmatprep.subr.mxu0 0.0
  %343 = vmatpush1.msra.mxu0 0.0
  %344 = vmatprep.subr.mxu0 0.0
  %345 = vmatpush1.msra.mxu0 0.0
  %346 = vmatprep.mubr.f32.mxu0 0.0
  %347 = vmatmul.mubr.f32.gmra.mrb[0].mxu0 %v280
  %v348 = vpop.f32.mrb[0].mxu0
  %v349 = vadd.f32 0.0, %v348
  %v350 = vpop.f32.mrb[0].mxu0
  %351 = vdwg.mxu0
  %s352 = scalar_lea.vmem %s2, 6
  %353 = vst.msk [vmem:[%s352] sm:$0x3] %vm94, %v349
  %s354 = scalar_lea.vmem %s0, 8
  %v355 = vld [vmem:[%s354] sm:$0x3]
  %s356 = scalar_lea.vmem %s1, 256
  %v357 = vld [vmem:[%s356] sm:$0xff]
  %v358 = vld [vmem:[%s356 + $0x8] sm:$0xff]
  %v359 = vld [vmem:[%s356 + $0x10] sm:$0xff]
  %v360 = vld [vmem:[%s356 + $0x18] sm:$0xff]
  %v361 = vld [vmem:[%s356 + $0x20] sm:$0xff]
  %v362 = vld [vmem:[%s356 + $0x28] sm:$0xff]
  %v363 = vld [vmem:[%s356 + $0x30] sm:$0xff]
  %v364 = vld [vmem:[%s356 + $0x38] sm:$0xff]
  %v366 = vsel %vm20, %v355, 0
  %368 = vmatprep.subr.mxu0 0.0
  %369 = vmatpush1.msra.mxu0 %v357
  %370 = vmatprep.subr.mxu0 0.0
  %371 = vmatpush1.msra.mxu0 %v358
  %372 = vmatprep.subr.mxu0 0.0
  %373 = vmatpush1.msra.mxu0 %v359
  %374 = vmatprep.subr.mxu0 0.0
  %375 = vmatpush1.msra.mxu0 %v360
  %376 = vmatprep.subr.mxu0 0.0
  %377 = vmatpush1.msra.mxu0 %v361
  %378 = vmatprep.subr.mxu0 0.0
  %379 = vmatpush1.msra.mxu0 %v362
  %380 = vmatprep.subr.mxu0 0.0
  %381 = vmatpush1.msra.mxu0 %v363
  %382 = vmatprep.subr.mxu0 0.0
  %383 = vmatpush1.msra.mxu0 %v364
  %384 = vmatprep.subr.mxu0 0.0
  %385 = vmatpush1.msra.mxu0 0.0
  %386 = vmatprep.subr.mxu0 0.0
  %387 = vmatpush1.msra.mxu0 0.0
  %388 = vmatprep.subr.mxu0 0.0
  %389 = vmatpush1.msra.mxu0 0.0
  %390 = vmatprep.subr.mxu0 0.0
  %391 = vmatpush1.msra.mxu0 0.0
  %392 = vmatprep.subr.mxu0 0.0
  %393 = vmatpush1.msra.mxu0 0.0
  %394 = vmatprep.subr.mxu0 0.0
  %395 = vmatpush1.msra.mxu0 0.0
  %396 = vmatprep.subr.mxu0 0.0
  %397 = vmatpush1.msra.mxu0 0.0
  %398 = vmatprep.subr.mxu0 0.0
  %399 = vmatpush1.msra.mxu0 0.0
  %400 = vmatprep.subr.mxu0 0.0
  %401 = vmatpush1.msra.mxu0 0.0
  %402 = vmatprep.subr.mxu0 0.0
  %403 = vmatpush1.msra.mxu0 0.0
  %404 = vmatprep.subr.mxu0 0.0
  %405 = vmatpush1.msra.mxu0 0.0
  %406 = vmatprep.subr.mxu0 0.0
  %407 = vmatpush1.msra.mxu0 0.0
  %408 = vmatprep.subr.mxu0 0.0
  %409 = vmatpush1.msra.mxu0 0.0
  %410 = vmatprep.subr.mxu0 0.0
  %411 = vmatpush1.msra.mxu0 0.0
  %412 = vmatprep.subr.mxu0 0.0
  %413 = vmatpush1.msra.mxu0 0.0
  %414 = vmatprep.subr.mxu0 0.0
  %415 = vmatpush1.msra.mxu0 0.0
  %416 = vmatprep.subr.mxu0 0.0
  %417 = vmatpush1.msra.mxu0 0.0
  %418 = vmatprep.subr.mxu0 0.0
  %419 = vmatpush1.msra.mxu0 0.0
  %420 = vmatprep.subr.mxu0 0.0
  %421 = vmatpush1.msra.mxu0 0.0
  %422 = vmatprep.subr.mxu0 0.0
  %423 = vmatpush1.msra.mxu0 0.0
  %424 = vmatprep.subr.mxu0 0.0
  %425 = vmatpush1.msra.mxu0 0.0
  %426 = vmatprep.subr.mxu0 0.0
  %427 = vmatpush1.msra.mxu0 0.0
  %428 = vmatprep.subr.mxu0 0.0
  %429 = vmatpush1.msra.mxu0 0.0
  %430 = vmatprep.subr.mxu0 0.0
  %431 = vmatpush1.msra.mxu0 0.0
  %432 = vmatprep.mubr.f32.mxu0 0.0
  %433 = vmatmul.mubr.f32.gmra.mrb[0].mxu0 %v366
  %v434 = vpop.f32.mrb[0].mxu0
  %v435 = vadd.f32 0.0, %v434
  %v436 = vpop.f32.mrb[0].mxu0
  %437 = vdwg.mxu0
  %s438 = scalar_lea.vmem %s2, 8
  %439 = vst.msk [vmem:[%s438] sm:$0x3] %vm94, %v435
  %s440 = scalar_lea.vmem %s0, 10
  %v441 = vld [vmem:[%s440] sm:$0x3]
  %s442 = scalar_lea.vmem %s1, 320
  %v443 = vld [vmem:[%s442] sm:$0xff]
  %v444 = vld [vmem:[%s442 + $0x8] sm:$0xff]
  %v445 = vld [vmem:[%s442 + $0x10] sm:$0xff]
  %v446 = vld [vmem:[%s442 + $0x18] sm:$0xff]
  %v447 = vld [vmem:[%s442 + $0x20] sm:$0xff]
  %v448 = vld [vmem:[%s442 + $0x28] sm:$0xff]
  %v449 = vld [vmem:[%s442 + $0x30] sm:$0xff]
  %v450 = vld [vmem:[%s442 + $0x38] sm:$0xff]
  %v452 = vsel %vm20, %v441, 0
  %454 = vmatprep.subr.mxu0 0.0
  %455 = vmatpush1.msra.mxu0 %v443
  %456 = vmatprep.subr.mxu0 0.0
  %457 = vmatpush1.msra.mxu0 %v444
  %458 = vmatprep.subr.mxu0 0.0
  %459 = vmatpush1.msra.mxu0 %v445
  %460 = vmatprep.subr.mxu0 0.0
  %461 = vmatpush1.msra.mxu0 %v446
  %462 = vmatprep.subr.mxu0 0.0
  %463 = vmatpush1.msra.mxu0 %v447
  %464 = vmatprep.subr.mxu0 0.0
  %465 = vmatpush1.msra.mxu0 %v448
  %466 = vmatprep.subr.mxu0 0.0
  %467 = vmatpush1.msra.mxu0 %v449
  %468 = vmatprep.subr.mxu0 0.0
  %469 = vmatpush1.msra.mxu0 %v450
  %470 = vmatprep.subr.mxu0 0.0
  %471 = vmatpush1.msra.mxu0 0.0
  %472 = vmatprep.subr.mxu0 0.0
  %473 = vmatpush1.msra.mxu0 0.0
  %474 = vmatprep.subr.mxu0 0.0
  %475 = vmatpush1.msra.mxu0 0.0
  %476 = vmatprep.subr.mxu0 0.0
  %477 = vmatpush1.msra.mxu0 0.0
  %478 = vmatprep.subr.mxu0 0.0
  %479 = vmatpush1.msra.mxu0 0.0
  %480 = vmatprep.subr.mxu0 0.0
  %481 = vmatpush1.msra.mxu0 0.0
  %482 = vmatprep.subr.mxu0 0.0
  %483 = vmatpush1.msra.mxu0 0.0
  %484 = vmatprep.subr.mxu0 0.0
  %485 = vmatpush1.msra.mxu0 0.0
  %486 = vmatprep.subr.mxu0 0.0
  %487 = vmatpush1.msra.mxu0 0.0
  %488 = vmatprep.subr.mxu0 0.0
  %489 = vmatpush1.msra.mxu0 0.0
  %490 = vmatprep.subr.mxu0 0.0
  %491 = vmatpush1.msra.mxu0 0.0
  %492 = vmatprep.subr.mxu0 0.0
  %493 = vmatpush1.msra.mxu0 0.0
  %494 = vmatprep.subr.mxu0 0.0
  %495 = vmatpush1.msra.mxu0 0.0
  %496 = vmatprep.subr.mxu0 0.0
  %497 = vmatpush1.msra.mxu0 0.0
  %498 = vmatprep.subr.mxu0 0.0
  %499 = vmatpush1.msra.mxu0 0.0
  %500 = vmatprep.subr.mxu0 0.0
  %501 = vmatpush1.msra.mxu0 0.0
  %502 = vmatprep.subr.mxu0 0.0
  %503 = vmatpush1.msra.mxu0 0.0
  %504 = vmatprep.subr.mxu0 0.0
  %505 = vmatpush1.msra.mxu0 0.0
  %506 = vmatprep.subr.mxu0 0.0
  %507 = vmatpush1.msra.mxu0 0.0
  %508 = vmatprep.subr.mxu0 0.0
  %509 = vmatpush1.msra.mxu0 0.0
  %510 = vmatprep.subr.mxu0 0.0
  %511 = vmatpush1.msra.mxu0 0.0
  %512 = vmatprep.subr.mxu0 0.0
  %513 = vmatpush1.msra.mxu0 0.0
  %514 = vmatprep.subr.mxu0 0.0
  %515 = vmatpush1.msra.mxu0 0.0
  %516 = vmatprep.subr.mxu0 0.0
  %517 = vmatpush1.msra.mxu0 0.0
  %518 = vmatprep.mubr.f32.mxu0 0.0
  %519 = vmatmul.mubr.f32.gmra.mrb[0].mxu0 %v452
  %v520 = vpop.f32.mrb[0].mxu0
  %v521 = vadd.f32 0.0, %v520
  %v522 = vpop.f32.mrb[0].mxu0
  %523 = vdwg.mxu0
  %s524 = scalar_lea.vmem %s2, 10
  %525 = vst.msk [vmem:[%s524] sm:$0x3] %vm94, %v521
  %s526 = scalar_lea.vmem %s0, 12
  %v527 = vld [vmem:[%s526] sm:$0x3]
  %s528 = scalar_lea.vmem %s1, 384
  %v529 = vld [vmem:[%s528] sm:$0xff]
  %v530 = vld [vmem:[%s528 + $0x8] sm:$0xff]
  %v531 = vld [vmem:[%s528 + $0x10] sm:$0xff]
  %v532 = vld [vmem:[%s528 + $0x18] sm:$0xff]
  %v533 = vld [vmem:[%s528 + $0x20] sm:$0xff]
  %v534 = vld [vmem:[%s528 + $0x28] sm:$0xff]
  %v535 = vld [vmem:[%s528 + $0x30] sm:$0xff]
  %v536 = vld [vmem:[%s528 + $0x38] sm:$0xff]
  %v538 = vsel %vm20, %v527, 0
  %540 = vmatprep.subr.mxu0 0.0
  %541 = vmatpush1.msra.mxu0 %v529
  %542 = vmatprep.subr.mxu0 0.0
  %543 = vmatpush1.msra.mxu0 %v530
  %544 = vmatprep.subr.mxu0 0.0
  %545 = vmatpush1.msra.mxu0 %v531
  %546 = vmatprep.subr.mxu0 0.0
  %547 = vmatpush1.msra.mxu0 %v532
  %548 = vmatprep.subr.mxu0 0.0
  %549 = vmatpush1.msra.mxu0 %v533
  %550 = vmatprep.subr.mxu0 0.0
  %551 = vmatpush1.msra.mxu0 %v534
  %552 = vmatprep.subr.mxu0 0.0
  %553 = vmatpush1.msra.mxu0 %v535
  %554 = vmatprep.subr.mxu0 0.0
  %555 = vmatpush1.msra.mxu0 %v536
  %556 = vmatprep.subr.mxu0 0.0
  %557 = vmatpush1.msra.mxu0 0.0
  %558 = vmatprep.subr.mxu0 0.0
  %559 = vmatpush1.msra.mxu0 0.0
  %560 = vmatprep.subr.mxu0 0.0
  %561 = vmatpush1.msra.mxu0 0.0
  %562 = vmatprep.subr.mxu0 0.0
  %563 = vmatpush1.msra.mxu0 0.0
  %564 = vmatprep.subr.mxu0 0.0
  %565 = vmatpush1.msra.mxu0 0.0
  %566 = vmatprep.subr.mxu0 0.0
  %567 = vmatpush1.msra.mxu0 0.0
  %568 = vmatprep.subr.mxu0 0.0
  %569 = vmatpush1.msra.mxu0 0.0
  %570 = vmatprep.subr.mxu0 0.0
  %571 = vmatpush1.msra.mxu0 0.0
  %572 = vmatprep.subr.mxu0 0.0
  %573 = vmatpush1.msra.mxu0 0.0
  %574 = vmatprep.subr.mxu0 0.0
  %575 = vmatpush1.msra.mxu0 0.0
  %576 = vmatprep.subr.mxu0 0.0
  %577 = vmatpush1.msra.mxu0 0.0
  %578 = vmatprep.subr.mxu0 0.0
  %579 = vmatpush1.msra.mxu0 0.0
  %580 = vmatprep.subr.mxu0 0.0
  %581 = vmatpush1.msra.mxu0 0.0
  %582 = vmatprep.subr.mxu0 0.0
  %583 = vmatpush1.msra.mxu0 0.0
  %584 = vmatprep.subr.mxu0 0.0
  %585 = vmatpush1.msra.mxu0 0.0
  %586 = vmatprep.subr.mxu0 0.0
  %587 = vmatpush1.msra.mxu0 0.0
  %588 = vmatprep.subr.mxu0 0.0
  %589 = vmatpush1.msra.mxu0 0.0
  %590 = vmatprep.subr.mxu0 0.0
  %591 = vmatpush1.msra.mxu0 0.0
  %592 = vmatprep.subr.mxu0 0.0
  %593 = vmatpush1.msra.mxu0 0.0
  %594 = vmatprep.subr.mxu0 0.0
  %595 = vmatpush1.msra.mxu0 0.0
  %596 = vmatprep.subr.mxu0 0.0
  %597 = vmatpush1.msra.mxu0 0.0
  %598 = vmatprep.subr.mxu0 0.0
  %599 = vmatpush1.msra.mxu0 0.0
  %600 = vmatprep.subr.mxu0 0.0
  %601 = vmatpush1.msra.mxu0 0.0
  %602 = vmatprep.subr.mxu0 0.0
  %603 = vmatpush1.msra.mxu0 0.0
  %604 = vmatprep.mubr.f32.mxu0 0.0
  %605 = vmatmul.mubr.f32.gmra.mrb[0].mxu0 %v538
  %v606 = vpop.f32.mrb[0].mxu0
  %v607 = vadd.f32 0.0, %v606
  %v608 = vpop.f32.mrb[0].mxu0
  %609 = vdwg.mxu0
  %s610 = scalar_lea.vmem %s2, 12
  %611 = vst.msk [vmem:[%s610] sm:$0x3] %vm94, %v607
  %s612 = scalar_lea.vmem %s0, 14
  %v613 = vld [vmem:[%s612] sm:$0x3]
  %s614 = scalar_lea.vmem %s1, 448
  %v615 = vld [vmem:[%s614] sm:$0xff]
  %v616 = vld [vmem:[%s614 + $0x8] sm:$0xff]
  %v617 = vld [vmem:[%s614 + $0x10] sm:$0xff]
  %v618 = vld [vmem:[%s614 + $0x18] sm:$0xff]
  %v619 = vld [vmem:[%s614 + $0x20] sm:$0xff]
  %v620 = vld [vmem:[%s614 + $0x28] sm:$0xff]
  %v621 = vld [vmem:[%s614 + $0x30] sm:$0xff]
  %v622 = vld [vmem:[%s614 + $0x38] sm:$0xff]
  %v624 = vsel %vm20, %v613, 0
  %626 = vmatprep.subr.mxu0 0.0
  %627 = vmatpush1.msra.mxu0 %v615
  %628 = vmatprep.subr.mxu0 0.0
  %629 = vmatpush1.msra.mxu0 %v616
  %630 = vmatprep.subr.mxu0 0.0
  %631 = vmatpush1.msra.mxu0 %v617
  %632 = vmatprep.subr.mxu0 0.0
  %633 = vmatpush1.msra.mxu0 %v618
  %634 = vmatprep.subr.mxu0 0.0
  %635 = vmatpush1.msra.mxu0 %v619
  %636 = vmatprep.subr.mxu0 0.0
  %637 = vmatpush1.msra.mxu0 %v620
  %638 = vmatprep.subr.mxu0 0.0
  %639 = vmatpush1.msra.mxu0 %v621
  %640 = vmatprep.subr.mxu0 0.0
  %641 = vmatpush1.msra.mxu0 %v622
  %642 = vmatprep.subr.mxu0 0.0
  %643 = vmatpush1.msra.mxu0 0.0
  %644 = vmatprep.subr.mxu0 0.0
  %645 = vmatpush1.msra.mxu0 0.0
  %646 = vmatprep.subr.mxu0 0.0
  %647 = vmatpush1.msra.mxu0 0.0
  %648 = vmatprep.subr.mxu0 0.0
  %649 = vmatpush1.msra.mxu0 0.0
  %650 = vmatprep.subr.mxu0 0.0
  %651 = vmatpush1.msra.mxu0 0.0
  %652 = vmatprep.subr.mxu0 0.0
  %653 = vmatpush1.msra.mxu0 0.0
  %654 = vmatprep.subr.mxu0 0.0
  %655 = vmatpush1.msra.mxu0 0.0
  %656 = vmatprep.subr.mxu0 0.0
  %657 = vmatpush1.msra.mxu0 0.0
  %658 = vmatprep.subr.mxu0 0.0
  %659 = vmatpush1.msra.mxu0 0.0
  %660 = vmatprep.subr.mxu0 0.0
  %661 = vmatpush1.msra.mxu0 0.0
  %662 = vmatprep.subr.mxu0 0.0
  %663 = vmatpush1.msra.mxu0 0.0
  %664 = vmatprep.subr.mxu0 0.0
  %665 = vmatpush1.msra.mxu0 0.0
  %666 = vmatprep.subr.mxu0 0.0
  %667 = vmatpush1.msra.mxu0 0.0
  %668 = vmatprep.subr.mxu0 0.0
  %669 = vmatpush1.msra.mxu0 0.0
  %670 = vmatprep.subr.mxu0 0.0
  %671 = vmatpush1.msra.mxu0 0.0
  %672 = vmatprep.subr.mxu0 0.0
  %673 = vmatpush1.msra.mxu0 0.0
  %674 = vmatprep.subr.mxu0 0.0
  %675 = vmatpush1.msra.mxu0 0.0
  %676 = vmatprep.subr.mxu0 0.0
  %677 = vmatpush1.msra.mxu0 0.0
  %678 = vmatprep.subr.mxu0 0.0
  %679 = vmatpush1.msra.mxu0 0.0
  %680 = vmatprep.subr.mxu0 0.0
  %681 = vmatpush1.msra.mxu0 0.0
  %682 = vmatprep.subr.mxu0 0.0
  %683 = vmatpush1.msra.mxu0 0.0
  %684 = vmatprep.subr.mxu0 0.0
  %685 = vmatpush1.msra.mxu0 0.0
  %686 = vmatprep.subr.mxu0 0.0
  %687 = vmatpush1.msra.mxu0 0.0
  %688 = vmatprep.subr.mxu0 0.0
  %689 = vmatpush1.msra.mxu0 0.0
  %690 = vmatprep.mubr.f32.mxu0 0.0
  %691 = vmatmul.mubr.f32.gmra.mrb[0].mxu0 %v624
  %v692 = vpop.f32.mrb[0].mxu0
  %v693 = vadd.f32 0.0, %v692
  %v694 = vpop.f32.mrb[0].mxu0
  %695 = vdwg.mxu0
  %s696 = scalar_lea.vmem %s2, 14
  %697 = vst.msk [vmem:[%s696] sm:$0x3] %vm94, %v693
  %s698 = scalar_lea.vmem %s0, 16
  %v699 = vld [vmem:[%s698] sm:$0x3]
  %s700 = scalar_lea.vmem %s1, 512
  %v701 = vld [vmem:[%s700] sm:$0xff]
  %v702 = vld [vmem:[%s700 + $0x8] sm:$0xff]
  %v703 = vld [vmem:[%s700 + $0x10] sm:$0xff]
  %v704 = vld [vmem:[%s700 + $0x18] sm:$0xff]
  %v705 = vld [vmem:[%s700 + $0x20] sm:$0xff]
  %v706 = vld [vmem:[%s700 + $0x28] sm:$0xff]
  %v707 = vld [vmem:[%s700 + $0x30] sm:$0xff]
  %v708 = vld [vmem:[%s700 + $0x38] sm:$0xff]
  %v710 = vsel %vm20, %v699, 0
  %712 = vmatprep.subr.mxu0 0.0
  %713 = vmatpush1.msra.mxu0 %v701
  %714 = vmatprep.subr.mxu0 0.0
  %715 = vmatpush1.msra.mxu0 %v702
  %716 = vmatprep.subr.mxu0 0.0
  %717 = vmatpush1.msra.mxu0 %v703
  %718 = vmatprep.subr.mxu0 0.0
  %719 = vmatpush1.msra.mxu0 %v704
  %720 = vmatprep.subr.mxu0 0.0
  %721 = vmatpush1.msra.mxu0 %v705
  %722 = vmatprep.subr.mxu0 0.0
  %723 = vmatpush1.msra.mxu0 %v706
  %724 = vmatprep.subr.mxu0 0.0
  %725 = vmatpush1.msra.mxu0 %v707
  %726 = vmatprep.subr.mxu0 0.0
  %727 = vmatpush1.msra.mxu0 %v708
  %728 = vmatprep.subr.mxu0 0.0
  %729 = vmatpush1.msra.mxu0 0.0
  %730 = vmatprep.subr.mxu0 0.0
  %731 = vmatpush1.msra.mxu0 0.0
  %732 = vmatprep.subr.mxu0 0.0
  %733 = vmatpush1.msra.mxu0 0.0
  %734 = vmatprep.subr.mxu0 0.0
  %735 = vmatpush1.msra.mxu0 0.0
  %736 = vmatprep.subr.mxu0 0.0
  %737 = vmatpush1.msra.mxu0 0.0
  %738 = vmatprep.subr.mxu0 0.0
  %739 = vmatpush1.msra.mxu0 0.0
  %740 = vmatprep.subr.mxu0 0.0
  %741 = vmatpush1.msra.mxu0 0.0
  %742 = vmatprep.subr.mxu0 0.0
  %743 = vmatpush1.msra.mxu0 0.0
  %744 = vmatprep.subr.mxu0 0.0
  %745 = vmatpush1.msra.mxu0 0.0
  %746 = vmatprep.subr.mxu0 0.0
  %747 = vmatpush1.msra.mxu0 0.0
  %748 = vmatprep.subr.mxu0 0.0
  %749 = vmatpush1.msra.mxu0 0.0
  %750 = vmatprep.subr.mxu0 0.0
  %751 = vmatpush1.msra.mxu0 0.0
  %752 = vmatprep.subr.mxu0 0.0
  %753 = vmatpush1.msra.mxu0 0.0
  %754 = vmatprep.subr.mxu0 0.0
  %755 = vmatpush1.msra.mxu0 0.0
  %756 = vmatprep.subr.mxu0 0.0
  %757 = vmatpush1.msra.mxu0 0.0
  %758 = vmatprep.subr.mxu0 0.0
  %759 = vmatpush1.msra.mxu0 0.0
  %760 = vmatprep.subr.mxu0 0.0
  %761 = vmatpush1.msra.mxu0 0.0
  %762 = vmatprep.subr.mxu0 0.0
  %763 = vmatpush1.msra.mxu0 0.0
  %764 = vmatprep.subr.mxu0 0.0
  %765 = vmatpush1.msra.mxu0 0.0
  %766 = vmatprep.subr.mxu0 0.0
  %767 = vmatpush1.msra.mxu0 0.0
  %768 = vmatprep.subr.mxu0 0.0
  %769 = vmatpush1.msra.mxu0 0.0
  %770 = vmatprep.subr.mxu0 0.0
  %771 = vmatpush1.msra.mxu0 0.0
  %772 = vmatprep.subr.mxu0 0.0
  %773 = vmatpush1.msra.mxu0 0.0
  %774 = vmatprep.subr.mxu0 0.0
  %775 = vmatpush1.msra.mxu0 0.0
  %776 = vmatprep.mubr.f32.mxu0 0.0
  %777 = vmatmul.mubr.f32.gmra.mrb[0].mxu0 %v710
  %v778 = vpop.f32.mrb[0].mxu0
  %v779 = vadd.f32 0.0, %v778
  %v780 = vpop.f32.mrb[0].mxu0
  %781 = vdwg.mxu0
  %s782 = scalar_lea.vmem %s2, 16
  %783 = vst.msk [vmem:[%s782] sm:$0x3] %vm94, %v779
  %s784 = scalar_lea.vmem %s0, 18
  %v785 = vld [vmem:[%s784] sm:$0x3]
  %s786 = scalar_lea.vmem %s1, 576
  %v787 = vld [vmem:[%s786] sm:$0xff]
  %v788 = vld [vmem:[%s786 + $0x8] sm:$0xff]
  %v789 = vld [vmem:[%s786 + $0x10] sm:$0xff]
  %v790 = vld [vmem:[%s786 + $0x18] sm:$0xff]
  %v791 = vld [vmem:[%s786 + $0x20] sm:$0xff]
  %v792 = vld [vmem:[%s786 + $0x28] sm:$0xff]
  %v793 = vld [vmem:[%s786 + $0x30] sm:$0xff]
  %v794 = vld [vmem:[%s786 + $0x38] sm:$0xff]
  %v796 = vsel %vm20, %v785, 0
  %798 = vmatprep.subr.mxu0 0.0
  %799 = vmatpush1.msra.mxu0 %v787
  %800 = vmatprep.subr.mxu0 0.0
  %801 = vmatpush1.msra.mxu0 %v788
  %802 = vmatprep.subr.mxu0 0.0
  %803 = vmatpush1.msra.mxu0 %v789
  %804 = vmatprep.subr.mxu0 0.0
  %805 = vmatpush1.msra.mxu0 %v790
  %806 = vmatprep.subr.mxu0 0.0
  %807 = vmatpush1.msra.mxu0 %v791
  %808 = vmatprep.subr.mxu0 0.0
  %809 = vmatpush1.msra.mxu0 %v792
  %810 = vmatprep.subr.mxu0 0.0
  %811 = vmatpush1.msra.mxu0 %v793
  %812 = vmatprep.subr.mxu0 0.0
  %813 = vmatpush1.msra.mxu0 %v794
  %814 = vmatprep.subr.mxu0 0.0
  %815 = vmatpush1.msra.mxu0 0.0
  %816 = vmatprep.subr.mxu0 0.0
  %817 = vmatpush1.msra.mxu0 0.0
  %818 = vmatprep.subr.mxu0 0.0
  %819 = vmatpush1.msra.mxu0 0.0
  %820 = vmatprep.subr.mxu0 0.0
  %821 = vmatpush1.msra.mxu0 0.0
  %822 = vmatprep.subr.mxu0 0.0
  %823 = vmatpush1.msra.mxu0 0.0
  %824 = vmatprep.subr.mxu0 0.0
  %825 = vmatpush1.msra.mxu0 0.0
  %826 = vmatprep.subr.mxu0 0.0
  %827 = vmatpush1.msra.mxu0 0.0
  %828 = vmatprep.subr.mxu0 0.0
  %829 = vmatpush1.msra.mxu0 0.0
  %830 = vmatprep.subr.mxu0 0.0
  %831 = vmatpush1.msra.mxu0 0.0
  %832 = vmatprep.subr.mxu0 0.0
  %833 = vmatpush1.msra.mxu0 0.0
  %834 = vmatprep.subr.mxu0 0.0
  %835 = vmatpush1.msra.mxu0 0.0
  %836 = vmatprep.subr.mxu0 0.0
  %837 = vmatpush1.msra.mxu0 0.0
  %838 = vmatprep.subr.mxu0 0.0
  %839 = vmatpush1.msra.mxu0 0.0
  %840 = vmatprep.subr.mxu0 0.0
  %841 = vmatpush1.msra.mxu0 0.0
  %842 = vmatprep.subr.mxu0 0.0
  %843 = vmatpush1.msra.mxu0 0.0
  %844 = vmatprep.subr.mxu0 0.0
  %845 = vmatpush1.msra.mxu0 0.0
  %846 = vmatprep.subr.mxu0 0.0
  %847 = vmatpush1.msra.mxu0 0.0
  %848 = vmatprep.subr.mxu0 0.0
  %849 = vmatpush1.msra.mxu0 0.0
  %850 = vmatprep.subr.mxu0 0.0
  %851 = vmatpush1.msra.mxu0 0.0
  %852 = vmatprep.subr.mxu0 0.0
  %853 = vmatpush1.msra.mxu0 0.0
  %854 = vmatprep.subr.mxu0 0.0
  %855 = vmatpush1.msra.mxu0 0.0
  %856 = vmatprep.subr.mxu0 0.0
  %857 = vmatpush1.msra.mxu0 0.0
  %858 = vmatprep.subr.mxu0 0.0
  %859 = vmatpush1.msra.mxu0 0.0
  %860 = vmatprep.subr.mxu0 0.0
  %861 = vmatpush1.msra.mxu0 0.0
  %862 = vmatprep.mubr.f32.mxu0 0.0
  %863 = vmatmul.mubr.f32.gmra.mrb[0].mxu0 %v796
  %v864 = vpop.f32.mrb[0].mxu0
  %v865 = vadd.f32 0.0, %v864
  %v866 = vpop.f32.mrb[0].mxu0
  %867 = vdwg.mxu0
  %s868 = scalar_lea.vmem %s2, 18
  %869 = vst.msk [vmem:[%s868] sm:$0x3] %vm94, %v865
  %s870 = scalar_lea.vmem %s0, 20
  %v871 = vld [vmem:[%s870] sm:$0x3]
  %s872 = scalar_lea.vmem %s1, 640
  %v873 = vld [vmem:[%s872] sm:$0xff]
  %v874 = vld [vmem:[%s872 + $0x8] sm:$0xff]
  %v875 = vld [vmem:[%s872 + $0x10] sm:$0xff]
  %v876 = vld [vmem:[%s872 + $0x18] sm:$0xff]
  %v877 = vld [vmem:[%s872 + $0x20] sm:$0xff]
  %v878 = vld [vmem:[%s872 + $0x28] sm:$0xff]
  %v879 = vld [vmem:[%s872 + $0x30] sm:$0xff]
  %v880 = vld [vmem:[%s872 + $0x38] sm:$0xff]
  %v882 = vsel %vm20, %v871, 0
  %884 = vmatprep.subr.mxu0 0.0
  %885 = vmatpush1.msra.mxu0 %v873
  %886 = vmatprep.subr.mxu0 0.0
  %887 = vmatpush1.msra.mxu0 %v874
  %888 = vmatprep.subr.mxu0 0.0
  %889 = vmatpush1.msra.mxu0 %v875
  %890 = vmatprep.subr.mxu0 0.0
  %891 = vmatpush1.msra.mxu0 %v876
  %892 = vmatprep.subr.mxu0 0.0
  %893 = vmatpush1.msra.mxu0 %v877
  %894 = vmatprep.subr.mxu0 0.0
  %895 = vmatpush1.msra.mxu0 %v878
  %896 = vmatprep.subr.mxu0 0.0
  %897 = vmatpush1.msra.mxu0 %v879
  %898 = vmatprep.subr.mxu0 0.0
  %899 = vmatpush1.msra.mxu0 %v880
  %900 = vmatprep.subr.mxu0 0.0
  %901 = vmatpush1.msra.mxu0 0.0
  %902 = vmatprep.subr.mxu0 0.0
  %903 = vmatpush1.msra.mxu0 0.0
  %904 = vmatprep.subr.mxu0 0.0
  %905 = vmatpush1.msra.mxu0 0.0
  %906 = vmatprep.subr.mxu0 0.0
  %907 = vmatpush1.msra.mxu0 0.0
  %908 = vmatprep.subr.mxu0 0.0
  %909 = vmatpush1.msra.mxu0 0.0
  %910 = vmatprep.subr.mxu0 0.0
  %911 = vmatpush1.msra.mxu0 0.0
  %912 = vmatprep.subr.mxu0 0.0
  %913 = vmatpush1.msra.mxu0 0.0
  %914 = vmatprep.subr.mxu0 0.0
  %915 = vmatpush1.msra.mxu0 0.0
  %916 = vmatprep.subr.mxu0 0.0
  %917 = vmatpush1.msra.mxu0 0.0
  %918 = vmatprep.subr.mxu0 0.0
  %919 = vmatpush1.msra.mxu0 0.0
  %920 = vmatprep.subr.mxu0 0.0
  %921 = vmatpush1.msra.mxu0 0.0
  %922 = vmatprep.subr.mxu0 0.0
  %923 = vmatpush1.msra.mxu0 0.0
  %924 = vmatprep.subr.mxu0 0.0
  %925 = vmatpush1.msra.mxu0 0.0
  %926 = vmatprep.subr.mxu0 0.0
  %927 = vmatpush1.msra.mxu0 0.0
  %928 = vmatprep.subr.mxu0 0.0
  %929 = vmatpush1.msra.mxu0 0.0
  %930 = vmatprep.subr.mxu0 0.0
  %931 = vmatpush1.msra.mxu0 0.0
  %932 = vmatprep.subr.mxu0 0.0
  %933 = vmatpush1.msra.mxu0 0.0
  %934 = vmatprep.subr.mxu0 0.0
  %935 = vmatpush1.msra.mxu0 0.0
  %936 = vmatprep.subr.mxu0 0.0
  %937 = vmatpush1.msra.mxu0 0.0
  %938 = vmatprep.subr.mxu0 0.0
  %939 = vmatpush1.msra.mxu0 0.0
  %940 = vmatprep.subr.mxu0 0.0
  %941 = vmatpush1.msra.mxu0 0.0
  %942 = vmatprep.subr.mxu0 0.0
  %943 = vmatpush1.msra.mxu0 0.0
  %944 = vmatprep.subr.mxu0 0.0
  %945 = vmatpush1.msra.mxu0 0.0
  %946 = vmatprep.subr.mxu0 0.0
  %947 = vmatpush1.msra.mxu0 0.0
  %948 = vmatprep.mubr.f32.mxu0 0.0
  %949 = vmatmul.mubr.f32.gmra.mrb[0].mxu0 %v882
  %v950 = vpop.f32.mrb[0].mxu0
  %v951 = vadd.f32 0.0, %v950
  %v952 = vpop.f32.mrb[0].mxu0
  %953 = vdwg.mxu0
  %s954 = scalar_lea.vmem %s2, 20
  %955 = vst.msk [vmem:[%s954] sm:$0x3] %vm94, %v951
  %s956 = scalar_lea.vmem %s0, 22
  %v957 = vld [vmem:[%s956] sm:$0x3]
  %s958 = scalar_lea.vmem %s1, 704
  %v959 = vld [vmem:[%s958] sm:$0xff]
  %v960 = vld [vmem:[%s958 + $0x8] sm:$0xff]
  %v961 = vld [vmem:[%s958 + $0x10] sm:$0xff]
  %v962 = vld [vmem:[%s958 + $0x18] sm:$0xff]
  %v963 = vld [vmem:[%s958 + $0x20] sm:$0xff]
  %v964 = vld [vmem:[%s958 + $0x28] sm:$0xff]
  %v965 = vld [vmem:[%s958 + $0x30] sm:$0xff]
  %v966 = vld [vmem:[%s958 + $0x38] sm:$0xff]
  %v968 = vsel %vm20, %v957, 0
  %970 = vmatprep.subr.mxu0 0.0
  %971 = vmatpush1.msra.mxu0 %v959
  %972 = vmatprep.subr.mxu0 0.0
  %973 = vmatpush1.msra.mxu0 %v960
  %974 = vmatprep.subr.mxu0 0.0
  %975 = vmatpush1.msra.mxu0 %v961
  %976 = vmatprep.subr.mxu0 0.0
  %977 = vmatpush1.msra.mxu0 %v962
  %978 = vmatprep.subr.mxu0 0.0
  %979 = vmatpush1.msra.mxu0 %v963
  %980 = vmatprep.subr.mxu0 0.0
  %981 = vmatpush1.msra.mxu0 %v964
  %982 = vmatprep.subr.mxu0 0.0
  %983 = vmatpush1.msra.mxu0 %v965
  %984 = vmatprep.subr.mxu0 0.0
  %985 = vmatpush1.msra.mxu0 %v966
  %986 = vmatprep.subr.mxu0 0.0
  %987 = vmatpush1.msra.mxu0 0.0
  %988 = vmatprep.subr.mxu0 0.0
  %989 = vmatpush1.msra.mxu0 0.0
  %990 = vmatprep.subr.mxu0 0.0
  %991 = vmatpush1.msra.mxu0 0.0
  %992 = vmatprep.subr.mxu0 0.0
  %993 = vmatpush1.msra.mxu0 0.0
  %994 = vmatprep.subr.mxu0 0.0
  %995 = vmatpush1.msra.mxu0 0.0
  %996 = vmatprep.subr.mxu0 0.0
  %997 = vmatpush1.msra.mxu0 0.0
  %998 = vmatprep.subr.mxu0 0.0
  %999 = vmatpush1.msra.mxu0 0.0
  %1000 = vmatprep.subr.mxu0 0.0
  %1001 = vmatpush1.msra.mxu0 0.0
  %1002 = vmatprep.subr.mxu0 0.0
  %1003 = vmatpush1.msra.mxu0 0.0
  %1004 = vmatprep.subr.mxu0 0.0
  %1005 = vmatpush1.msra.mxu0 0.0
  %1006 = vmatprep.subr.mxu0 0.0
  %1007 = vmatpush1.msra.mxu0 0.0
  %1008 = vmatprep.subr.mxu0 0.0
  %1009 = vmatpush1.msra.mxu0 0.0
  %1010 = vmatprep.subr.mxu0 0.0
  %1011 = vmatpush1.msra.mxu0 0.0
  %1012 = vmatprep.subr.mxu0 0.0
  %1013 = vmatpush1.msra.mxu0 0.0
  %1014 = vmatprep.subr.mxu0 0.0
  %1015 = vmatpush1.msra.mxu0 0.0
  %1016 = vmatprep.subr.mxu0 0.0
  %1017 = vmatpush1.msra.mxu0 0.0
  %1018 = vmatprep.subr.mxu0 0.0
  %1019 = vmatpush1.msra.mxu0 0.0
  %1020 = vmatprep.subr.mxu0 0.0
  %1021 = vmatpush1.msra.mxu0 0.0
  %1022 = vmatprep.subr.mxu0 0.0
  %1023 = vmatpush1.msra.mxu0 0.0
  %1024 = vmatprep.subr.mxu0 0.0
  %1025 = vmatpush1.msra.mxu0 0.0
  %1026 = vmatprep.subr.mxu0 0.0
  %1027 = vmatpush1.msra.mxu0 0.0
  %1028 = vmatprep.subr.mxu0 0.0
  %1029 = vmatpush1.msra.mxu0 0.0
  %1030 = vmatprep.subr.mxu0 0.0
  %1031 = vmatpush1.msra.mxu0 0.0
  %1032 = vmatprep.subr.mxu0 0.0
  %1033 = vmatpush1.msra.mxu0 0.0
  %1034 = vmatprep.mubr.f32.mxu0 0.0
  %1035 = vmatmul.mubr.f32.gmra.mrb[0].mxu0 %v968
  %v1036 = vpop.f32.mrb[0].mxu0
  %v1037 = vadd.f32 0.0, %v1036
  %v1038 = vpop.f32.mrb[0].mxu0
  %1039 = vdwg.mxu0
  %s1040 = scalar_lea.vmem %s2, 22
  %1041 = vst.msk [vmem:[%s1040] sm:$0x3] %vm94, %v1037
  %s1042 = scalar_lea.vmem %s0, 24
  %v1043 = vld [vmem:[%s1042] sm:$0x3]
  %s1044 = scalar_lea.vmem %s1, 768
  %v1045 = vld [vmem:[%s1044] sm:$0xff]
  %v1046 = vld [vmem:[%s1044 + $0x8] sm:$0xff]
  %v1047 = vld [vmem:[%s1044 + $0x10] sm:$0xff]
  %v1048 = vld [vmem:[%s1044 + $0x18] sm:$0xff]
  %v1049 = vld [vmem:[%s1044 + $0x20] sm:$0xff]
  %v1050 = vld [vmem:[%s1044 + $0x28] sm:$0xff]
  %v1051 = vld [vmem:[%s1044 + $0x30] sm:$0xff]
  %v1052 = vld [vmem:[%s1044 + $0x38] sm:$0xff]
  %v1054 = vsel %vm20, %v1043, 0
  %1056 = vmatprep.subr.mxu0 0.0
  %1057 = vmatpush1.msra.mxu0 %v1045
  %1058 = vmatprep.subr.mxu0 0.0
  %1059 = vmatpush1.msra.mxu0 %v1046
  %1060 = vmatprep.subr.mxu0 0.0
  %1061 = vmatpush1.msra.mxu0 %v1047
  %1062 = vmatprep.subr.mxu0 0.0
  %1063 = vmatpush1.msra.mxu0 %v1048
  %1064 = vmatprep.subr.mxu0 0.0
  %1065 = vmatpush1.msra.mxu0 %v1049
  %1066 = vmatprep.subr.mxu0 0.0
  %1067 = vmatpush1.msra.mxu0 %v1050
  %1068 = vmatprep.subr.mxu0 0.0
  %1069 = vmatpush1.msra.mxu0 %v1051
  %1070 = vmatprep.subr.mxu0 0.0
  %1071 = vmatpush1.msra.mxu0 %v1052
  %1072 = vmatprep.subr.mxu0 0.0
  %1073 = vmatpush1.msra.mxu0 0.0
  %1074 = vmatprep.subr.mxu0 0.0
  %1075 = vmatpush1.msra.mxu0 0.0
  %1076 = vmatprep.subr.mxu0 0.0
  %1077 = vmatpush1.msra.mxu0 0.0
  %1078 = vmatprep.subr.mxu0 0.0
  %1079 = vmatpush1.msra.mxu0 0.0
  %1080 = vmatprep.subr.mxu0 0.0
  %1081 = vmatpush1.msra.mxu0 0.0
  %1082 = vmatprep.subr.mxu0 0.0
  %1083 = vmatpush1.msra.mxu0 0.0
  %1084 = vmatprep.subr.mxu0 0.0
  %1085 = vmatpush1.msra.mxu0 0.0
  %1086 = vmatprep.subr.mxu0 0.0
  %1087 = vmatpush1.msra.mxu0 0.0
  %1088 = vmatprep.subr.mxu0 0.0
  %1089 = vmatpush1.msra.mxu0 0.0
  %1090 = vmatprep.subr.mxu0 0.0
  %1091 = vmatpush1.msra.mxu0 0.0
  %1092 = vmatprep.subr.mxu0 0.0
  %1093 = vmatpush1.msra.mxu0 0.0
  %1094 = vmatprep.subr.mxu0 0.0
  %1095 = vmatpush1.msra.mxu0 0.0
  %1096 = vmatprep.subr.mxu0 0.0
  %1097 = vmatpush1.msra.mxu0 0.0
  %1098 = vmatprep.subr.mxu0 0.0
  %1099 = vmatpush1.msra.mxu0 0.0
  %1100 = vmatprep.subr.mxu0 0.0
  %1101 = vmatpush1.msra.mxu0 0.0
  %1102 = vmatprep.subr.mxu0 0.0
  %1103 = vmatpush1.msra.mxu0 0.0
  %1104 = vmatprep.subr.mxu0 0.0
  %1105 = vmatpush1.msra.mxu0 0.0
  %1106 = vmatprep.subr.mxu0 0.0
  %1107 = vmatpush1.msra.mxu0 0.0
  %1108 = vmatprep.subr.mxu0 0.0
  %1109 = vmatpush1.msra.mxu0 0.0
  %1110 = vmatprep.subr.mxu0 0.0
  %1111 = vmatpush1.msra.mxu0 0.0
  %1112 = vmatprep.subr.mxu0 0.0
  %1113 = vmatpush1.msra.mxu0 0.0
  %1114 = vmatprep.subr.mxu0 0.0
  %1115 = vmatpush1.msra.mxu0 0.0
  %1116 = vmatprep.subr.mxu0 0.0
  %1117 = vmatpush1.msra.mxu0 0.0
  %1118 = vmatprep.subr.mxu0 0.0
  %1119 = vmatpush1.msra.mxu0 0.0
  %1120 = vmatprep.mubr.f32.mxu0 0.0
  %1121 = vmatmul.mubr.f32.gmra.mrb[0].mxu0 %v1054
  %v1122 = vpop.f32.mrb[0].mxu0
  %v1123 = vadd.f32 0.0, %v1122
  %v1124 = vpop.f32.mrb[0].mxu0
  %1125 = vdwg.mxu0
  %s1126 = scalar_lea.vmem %s2, 24
  %1127 = vst.msk [vmem:[%s1126] sm:$0x3] %vm94, %v1123
  %s1128 = scalar_lea.vmem %s0, 26
  %v1129 = vld [vmem:[%s1128] sm:$0x3]
  %s1130 = scalar_lea.vmem %s1, 832
  %v1131 = vld [vmem:[%s1130] sm:$0xff]
  %v1132 = vld [vmem:[%s1130 + $0x8] sm:$0xff]
  %v1133 = vld [vmem:[%s1130 + $0x10] sm:$0xff]
  %v1134 = vld [vmem:[%s1130 + $0x18] sm:$0xff]
  %v1135 = vld [vmem:[%s1130 + $0x20] sm:$0xff]
  %v1136 = vld [vmem:[%s1130 + $0x28] sm:$0xff]
  %v1137 = vld [vmem:[%s1130 + $0x30] sm:$0xff]
  %v1138 = vld [vmem:[%s1130 + $0x38] sm:$0xff]
  %v1140 = vsel %vm20, %v1129, 0
  %1142 = vmatprep.subr.mxu0 0.0
  %1143 = vmatpush1.msra.mxu0 %v1131
  %1144 = vmatprep.subr.mxu0 0.0
  %1145 = vmatpush1.msra.mxu0 %v1132
  %1146 = vmatprep.subr.mxu0 0.0
  %1147 = vmatpush1.msra.mxu0 %v1133
  %1148 = vmatprep.subr.mxu0 0.0
  %1149 = vmatpush1.msra.mxu0 %v1134
  %1150 = vmatprep.subr.mxu0 0.0
  %1151 = vmatpush1.msra.mxu0 %v1135
  %1152 = vmatprep.subr.mxu0 0.0
  %1153 = vmatpush1.msra.mxu0 %v1136
  %1154 = vmatprep.subr.mxu0 0.0
  %1155 = vmatpush1.msra.mxu0 %v1137
  %1156 = vmatprep.subr.mxu0 0.0
  %1157 = vmatpush1.msra.mxu0 %v1138
  %1158 = vmatprep.subr.mxu0 0.0
  %1159 = vmatpush1.msra.mxu0 0.0
  %1160 = vmatprep.subr.mxu0 0.0
  %1161 = vmatpush1.msra.mxu0 0.0
  %1162 = vmatprep.subr.mxu0 0.0
  %1163 = vmatpush1.msra.mxu0 0.0
  %1164 = vmatprep.subr.mxu0 0.0
  %1165 = vmatpush1.msra.mxu0 0.0
  %1166 = vmatprep.subr.mxu0 0.0
  %1167 = vmatpush1.msra.mxu0 0.0
  %1168 = vmatprep.subr.mxu0 0.0
  %1169 = vmatpush1.msra.mxu0 0.0
  %1170 = vmatprep.subr.mxu0 0.0
  %1171 = vmatpush1.msra.mxu0 0.0
  %1172 = vmatprep.subr.mxu0 0.0
  %1173 = vmatpush1.msra.mxu0 0.0
  %1174 = vmatprep.subr.mxu0 0.0
  %1175 = vmatpush1.msra.mxu0 0.0
  %1176 = vmatprep.subr.mxu0 0.0
  %1177 = vmatpush1.msra.mxu0 0.0
  %1178 = vmatprep.subr.mxu0 0.0
  %1179 = vmatpush1.msra.mxu0 0.0
  %1180 = vmatprep.subr.mxu0 0.0
  %1181 = vmatpush1.msra.mxu0 0.0
  %1182 = vmatprep.subr.mxu0 0.0
  %1183 = vmatpush1.msra.mxu0 0.0
  %1184 = vmatprep.subr.mxu0 0.0
  %1185 = vmatpush1.msra.mxu0 0.0
  %1186 = vmatprep.subr.mxu0 0.0
  %1187 = vmatpush1.msra.mxu0 0.0
  %1188 = vmatprep.subr.mxu0 0.0
  %1189 = vmatpush1.msra.mxu0 0.0
  %1190 = vmatprep.subr.mxu0 0.0
  %1191 = vmatpush1.msra.mxu0 0.0
  %1192 = vmatprep.subr.mxu0 0.0
  %1193 = vmatpush1.msra.mxu0 0.0
  %1194 = vmatprep.subr.mxu0 0.0
  %1195 = vmatpush1.msra.mxu0 0.0
  %1196 = vmatprep.subr.mxu0 0.0
  %1197 = vmatpush1.msra.mxu0 0.0
  %1198 = vmatprep.subr.mxu0 0.0
  %1199 = vmatpush1.msra.mxu0 0.0
  %1200 = vmatprep.subr.mxu0 0.0
  %1201 = vmatpush1.msra.mxu0 0.0
  %1202 = vmatprep.subr.mxu0 0.0
  %1203 = vmatpush1.msra.mxu0 0.0
  %1204 = vmatprep.subr.mxu0 0.0
  %1205 = vmatpush1.msra.mxu0 0.0
  %1206 = vmatprep.mubr.f32.mxu0 0.0
  %1207 = vmatmul.mubr.f32.gmra.mrb[0].mxu0 %v1140
  %v1208 = vpop.f32.mrb[0].mxu0
  %v1209 = vadd.f32 0.0, %v1208
  %v1210 = vpop.f32.mrb[0].mxu0
  %1211 = vdwg.mxu0
  %s1212 = scalar_lea.vmem %s2, 26
  %1213 = vst.msk [vmem:[%s1212] sm:$0x3] %vm94, %v1209
  %s1214 = scalar_lea.vmem %s0, 28
  %v1215 = vld [vmem:[%s1214] sm:$0x3]
  %s1216 = scalar_lea.vmem %s1, 896
  %v1217 = vld [vmem:[%s1216] sm:$0xff]
  %v1218 = vld [vmem:[%s1216 + $0x8] sm:$0xff]
  %v1219 = vld [vmem:[%s1216 + $0x10] sm:$0xff]
  %v1220 = vld [vmem:[%s1216 + $0x18] sm:$0xff]
  %v1221 = vld [vmem:[%s1216 + $0x20] sm:$0xff]
  %v1222 = vld [vmem:[%s1216 + $0x28] sm:$0xff]
  %v1223 = vld [vmem:[%s1216 + $0x30] sm:$0xff]
  %v1224 = vld [vmem:[%s1216 + $0x38] sm:$0xff]
  %v1226 = vsel %vm20, %v1215, 0
  %1228 = vmatprep.subr.mxu0 0.0
  %1229 = vmatpush1.msra.mxu0 %v1217
  %1230 = vmatprep.subr.mxu0 0.0
  %1231 = vmatpush1.msra.mxu0 %v1218
  %1232 = vmatprep.subr.mxu0 0.0
  %1233 = vmatpush1.msra.mxu0 %v1219
  %1234 = vmatprep.subr.mxu0 0.0
  %1235 = vmatpush1.msra.mxu0 %v1220
  %1236 = vmatprep.subr.mxu0 0.0
  %1237 = vmatpush1.msra.mxu0 %v1221
  %1238 = vmatprep.subr.mxu0 0.0
  %1239 = vmatpush1.msra.mxu0 %v1222
  %1240 = vmatprep.subr.mxu0 0.0
  %1241 = vmatpush1.msra.mxu0 %v1223
  %1242 = vmatprep.subr.mxu0 0.0
  %1243 = vmatpush1.msra.mxu0 %v1224
  %1244 = vmatprep.subr.mxu0 0.0
  %1245 = vmatpush1.msra.mxu0 0.0
  %1246 = vmatprep.subr.mxu0 0.0
  %1247 = vmatpush1.msra.mxu0 0.0
  %1248 = vmatprep.subr.mxu0 0.0
  %1249 = vmatpush1.msra.mxu0 0.0
  %1250 = vmatprep.subr.mxu0 0.0
  %1251 = vmatpush1.msra.mxu0 0.0
  %1252 = vmatprep.subr.mxu0 0.0
  %1253 = vmatpush1.msra.mxu0 0.0
  %1254 = vmatprep.subr.mxu0 0.0
  %1255 = vmatpush1.msra.mxu0 0.0
  %1256 = vmatprep.subr.mxu0 0.0
  %1257 = vmatpush1.msra.mxu0 0.0
  %1258 = vmatprep.subr.mxu0 0.0
  %1259 = vmatpush1.msra.mxu0 0.0
  %1260 = vmatprep.subr.mxu0 0.0
  %1261 = vmatpush1.msra.mxu0 0.0
  %1262 = vmatprep.subr.mxu0 0.0
  %1263 = vmatpush1.msra.mxu0 0.0
  %1264 = vmatprep.subr.mxu0 0.0
  %1265 = vmatpush1.msra.mxu0 0.0
  %1266 = vmatprep.subr.mxu0 0.0
  %1267 = vmatpush1.msra.mxu0 0.0
  %1268 = vmatprep.subr.mxu0 0.0
  %1269 = vmatpush1.msra.mxu0 0.0
  %1270 = vmatprep.subr.mxu0 0.0
  %1271 = vmatpush1.msra.mxu0 0.0
  %1272 = vmatprep.subr.mxu0 0.0
  %1273 = vmatpush1.msra.mxu0 0.0
  %1274 = vmatprep.subr.mxu0 0.0
  %1275 = vmatpush1.msra.mxu0 0.0
  %1276 = vmatprep.subr.mxu0 0.0
  %1277 = vmatpush1.msra.mxu0 0.0
  %1278 = vmatprep.subr.mxu0 0.0
  %1279 = vmatpush1.msra.mxu0 0.0
  %1280 = vmatprep.subr.mxu0 0.0
  %1281 = vmatpush1.msra.mxu0 0.0
  %1282 = vmatprep.subr.mxu0 0.0
  %1283 = vmatpush1.msra.mxu0 0.0
  %1284 = vmatprep.subr.mxu0 0.0
  %1285 = vmatpush1.msra.mxu0 0.0
  %1286 = vmatprep.subr.mxu0 0.0
  %1287 = vmatpush1.msra.mxu0 0.0
  %1288 = vmatprep.subr.mxu0 0.0
  %1289 = vmatpush1.msra.mxu0 0.0
  %1290 = vmatprep.subr.mxu0 0.0
  %1291 = vmatpush1.msra.mxu0 0.0
  %1292 = vmatprep.mubr.f32.mxu0 0.0
  %1293 = vmatmul.mubr.f32.gmra.mrb[0].mxu0 %v1226
  %v1294 = vpop.f32.mrb[0].mxu0
  %v1295 = vadd.f32 0.0, %v1294
  %v1296 = vpop.f32.mrb[0].mxu0
  %1297 = vdwg.mxu0
  %s1298 = scalar_lea.vmem %s2, 28
  %1299 = vst.msk [vmem:[%s1298] sm:$0x3] %vm94, %v1295
  %s1300 = scalar_lea.vmem %s0, 30
  %v1301 = vld [vmem:[%s1300] sm:$0x3]
  %s1302 = scalar_lea.vmem %s1, 960
  %v1303 = vld [vmem:[%s1302] sm:$0xff]
  %v1304 = vld [vmem:[%s1302 + $0x8] sm:$0xff]
  %v1305 = vld [vmem:[%s1302 + $0x10] sm:$0xff]
  %v1306 = vld [vmem:[%s1302 + $0x18] sm:$0xff]
  %v1307 = vld [vmem:[%s1302 + $0x20] sm:$0xff]
  %v1308 = vld [vmem:[%s1302 + $0x28] sm:$0xff]
  %v1309 = vld [vmem:[%s1302 + $0x30] sm:$0xff]
  %v1310 = vld [vmem:[%s1302 + $0x38] sm:$0xff]
  %v1312 = vsel %vm20, %v1301, 0
  %1314 = vmatprep.subr.mxu0 0.0
  %1315 = vmatpush1.msra.mxu0 %v1303
  %1316 = vmatprep.subr.mxu0 0.0
  %1317 = vmatpush1.msra.mxu0 %v1304
  %1318 = vmatprep.subr.mxu0 0.0
  %1319 = vmatpush1.msra.mxu0 %v1305
  %1320 = vmatprep.subr.mxu0 0.0
  %1321 = vmatpush1.msra.mxu0 %v1306
  %1322 = vmatprep.subr.mxu0 0.0
  %1323 = vmatpush1.msra.mxu0 %v1307
  %1324 = vmatprep.subr.mxu0 0.0
  %1325 = vmatpush1.msra.mxu0 %v1308
  %1326 = vmatprep.subr.mxu0 0.0
  %1327 = vmatpush1.msra.mxu0 %v1309
  %1328 = vmatprep.subr.mxu0 0.0
  %1329 = vmatpush1.msra.mxu0 %v1310
  %1330 = vmatprep.subr.mxu0 0.0
  %1331 = vmatpush1.msra.mxu0 0.0
  %1332 = vmatprep.subr.mxu0 0.0
  %1333 = vmatpush1.msra.mxu0 0.0
  %1334 = vmatprep.subr.mxu0 0.0
  %1335 = vmatpush1.msra.mxu0 0.0
  %1336 = vmatprep.subr.mxu0 0.0
  %1337 = vmatpush1.msra.mxu0 0.0
  %1338 = vmatprep.subr.mxu0 0.0
  %1339 = vmatpush1.msra.mxu0 0.0
  %1340 = vmatprep.subr.mxu0 0.0
  %1341 = vmatpush1.msra.mxu0 0.0
  %1342 = vmatprep.subr.mxu0 0.0
  %1343 = vmatpush1.msra.mxu0 0.0
  %1344 = vmatprep.subr.mxu0 0.0
  %1345 = vmatpush1.msra.mxu0 0.0
  %1346 = vmatprep.subr.mxu0 0.0
  %1347 = vmatpush1.msra.mxu0 0.0
  %1348 = vmatprep.subr.mxu0 0.0
  %1349 = vmatpush1.msra.mxu0 0.0
  %1350 = vmatprep.subr.mxu0 0.0
  %1351 = vmatpush1.msra.mxu0 0.0
  %1352 = vmatprep.subr.mxu0 0.0
  %1353 = vmatpush1.msra.mxu0 0.0
  %1354 = vmatprep.subr.mxu0 0.0
  %1355 = vmatpush1.msra.mxu0 0.0
  %1356 = vmatprep.subr.mxu0 0.0
  %1357 = vmatpush1.msra.mxu0 0.0
  %1358 = vmatprep.subr.mxu0 0.0
  %1359 = vmatpush1.msra.mxu0 0.0
  %1360 = vmatprep.subr.mxu0 0.0
  %1361 = vmatpush1.msra.mxu0 0.0
  %1362 = vmatprep.subr.mxu0 0.0
  %1363 = vmatpush1.msra.mxu0 0.0
  %1364 = vmatprep.subr.mxu0 0.0
  %1365 = vmatpush1.msra.mxu0 0.0
  %1366 = vmatprep.subr.mxu0 0.0
  %1367 = vmatpush1.msra.mxu0 0.0
  %1368 = vmatprep.subr.mxu0 0.0
  %1369 = vmatpush1.msra.mxu0 0.0
  %1370 = vmatprep.subr.mxu0 0.0
  %1371 = vmatpush1.msra.mxu0 0.0
  %1372 = vmatprep.subr.mxu0 0.0
  %1373 = vmatpush1.msra.mxu0 0.0
  %1374 = vmatprep.subr.mxu0 0.0
  %1375 = vmatpush1.msra.mxu0 0.0
  %1376 = vmatprep.subr.mxu0 0.0
  %1377 = vmatpush1.msra.mxu0 0.0
  %1378 = vmatprep.mubr.f32.mxu0 0.0
  %1379 = vmatmul.mubr.f32.gmra.mrb[0].mxu0 %v1312
  %v1380 = vpop.f32.mrb[0].mxu0
  %v1381 = vadd.f32 0.0, %v1380
  %v1382 = vpop.f32.mrb[0].mxu0
  %1383 = vdwg.mxu0
  %s1384 = scalar_lea.vmem %s2, 30
  %1385 = vst.msk [vmem:[%s1384] sm:$0x3] %vm94, %v1381
  // Predicated region
  $region10: #{fno2d_forward.11} parent=0 // pred_check
    _
  $region11: #{fno2d_forward.11} parent=0 // pred_check_branch
    %1387 = sbr.rel (0) target = $region13
  $region12: #{fno2d_forward.11} parent=0 // pred_region
    _
  $region13: #{fno2d_forward.11} parent=0 // pred_fallthru
    _
  // Predicated region
  $region14: #{fno2d_forward.11} parent=0 // pred_check
    _
  $region15: #{fno2d_forward.11} parent=0 // pred_check_branch
    %1389 = sbr.rel (0) target = $region17
  $region16: #{fno2d_forward.11} parent=0 // pred_region
    _
  $region17: #{fno2d_forward.11} parent=0 // pred_fallthru
    _

// kernel: reverse.8
$region0: #{reverse.8}
  #allocation0 [shape = 's32[1]{0}', space=sflag, size = 0x4, scoped, tag = 'scoped memory for reverse.8']
  %s0 = inlined_call_operand.vmem [shape: f32[2,32,16,7], index: 0, kind: input, shape index: {}]
  %s1 = inlined_call_operand.vmem [shape: f32[2,32,16,7], index: 1, kind: output, shape index: {}]
  %s2 = scalar_lea.vmem %s0, 96
  %v3 = vld [vmem:[%s2] sm:$0xff]
  %4 = vst [vmem:[%s1] sm:$0xff] %v3
  %s5 = scalar_lea.vmem %s0, 208
  %v6 = vld [vmem:[%s5] sm:$0xff]
  %s7 = scalar_lea.vmem %s1, 112
  %8 = vst [vmem:[%s7] sm:$0xff] %v6
  %s9 = scalar_lea.vmem %s0, 80
  %v10 = vld [vmem:[%s9] sm:$0xff]
  %s11 = scalar_lea.vmem %s1, 16
  %12 = vst [vmem:[%s11] sm:$0xff] %v10
  %s13 = scalar_lea.vmem %s0, 192
  %v14 = vld [vmem:[%s13] sm:$0xff]
  %s15 = scalar_lea.vmem %s1, 128
  %16 = vst [vmem:[%s15] sm:$0xff] %v14
  %s17 = scalar_lea.vmem %s0, 64
  %v18 = vld [vmem:[%s17] sm:$0xff]
  %s19 = scalar_lea.vmem %s1, 32
  %20 = vst [vmem:[%s19] sm:$0xff] %v18
  %s21 = scalar_lea.vmem %s0, 176
  %v22 = vld [vmem:[%s21] sm:$0xff]
  %s23 = scalar_lea.vmem %s1, 144
  %24 = vst [vmem:[%s23] sm:$0xff] %v22
  %s25 = scalar_lea.vmem %s0, 48
  %v26 = vld [vmem:[%s25] sm:$0xff]
  %s27 = scalar_lea.vmem %s1, 48
  %28 = vst [vmem:[%s27] sm:$0xff] %v26
  %s29 = scalar_lea.vmem %s0, 160
  %v30 = vld [vmem:[%s29] sm:$0xff]
  %s31 = scalar_lea.vmem %s1, 160
  %32 = vst [vmem:[%s31] sm:$0xff] %v30
  %s33 = scalar_lea.vmem %s0, 32
  %v34 = vld [vmem:[%s33] sm:$0xff]
  %s35 = scalar_lea.vmem %s1, 64
  %36 = vst [vmem:[%s35] sm:$0xff] %v34
  %s37 = scalar_lea.vmem %s0, 144
  %v38 = vld [vmem:[%s37] sm:$0xff]
  %s39 = scalar_lea.vmem %s1, 176
  %40 = vst [vmem:[%s39] sm:$0xff] %v38
  %s41 = scalar_lea.vmem %s0, 16
  %v42 = vld [vmem:[%s41] sm:$0xff]
  %s43 = scalar_lea.vmem %s1, 80
  %44 = vst [vmem:[%s43] sm:$0xff] %v42
  %s45 = scalar_lea.vmem %s0, 128
  %v46 = vld [vmem:[%s45] sm:$0xff]
  %s47 = scalar_lea.vmem %s1, 192
  %48 = vst [vmem:[%s47] sm:$0xff] %v46
  %v49 = vld [vmem:[%s0] sm:$0xff]
  %s50 = scalar_lea.vmem %s1, 96
  %51 = vst [vmem:[%s50] sm:$0xff] %v49
  %s52 = scalar_lea.vmem %s0, 112
  %v53 = vld [vmem:[%s52] sm:$0xff]
  %s54 = scalar_lea.vmem %s1, 208
  %55 = vst [vmem:[%s54] sm:$0xff] %v53
  %s56 = scalar_lea.vmem %s0, 104
  %v57 = vld [vmem:[%s56] sm:$0xff]
  %s58 = scalar_lea.vmem %s1, 8
  %59 = vst [vmem:[%s58] sm:$0xff] %v57
  %s60 = scalar_lea.vmem %s0, 216
  %v61 = vld [vmem:[%s60] sm:$0xff]
  %s62 = scalar_lea.vmem %s1, 120
  %63 = vst [vmem:[%s62] sm:$0xff] %v61
  %s64 = scalar_lea.vmem %s0, 88
  %v65 = vld [vmem:[%s64] sm:$0xff]
  %s66 = scalar_lea.vmem %s1, 24
  %67 = vst [vmem:[%s66] sm:$0xff] %v65
  %s68 = scalar_lea.vmem %s0, 200
  %v69 = vld [vmem:[%s68] sm:$0xff]
  %s70 = scalar_lea.vmem %s1, 136
  %71 = vst [vmem:[%s70] sm:$0xff] %v69
  %s72 = scalar_lea.vmem %s0, 72
  %v73 = vld [vmem:[%s72] sm:$0xff]
  %s74 = scalar_lea.vmem %s1, 40
  %75 = vst [vmem:[%s74] sm:$0xff] %v73
  %s76 = scalar_lea.vmem %s0, 184
  %v77 = vld [vmem:[%s76] sm:$0xff]
  %s78 = scalar_lea.vmem %s1, 152
  %79 = vst [vmem:[%s78] sm:$0xff] %v77
  %s80 = scalar_lea.vmem %s0, 56
  %v81 = vld [vmem:[%s80] sm:$0xff]
  %s82 = scalar_lea.vmem %s1, 56
  %83 = vst [vmem:[%s82] sm:$0xff] %v81
  %s84 = scalar_lea.vmem %s0, 168
  %v85 = vld [vmem:[%s84] sm:$0xff]
  %s86 = scalar_lea.vmem %s1, 168
  %87 = vst [vmem:[%s86] sm:$0xff] %v85
  %s88 = scalar_lea.vmem %s0, 40
  %v89 = vld [vmem:[%s88] sm:$0xff]
  %s90 = scalar_lea.vmem %s1, 72
  %91 = vst [vmem:[%s90] sm:$0xff] %v89
  %s92 = scalar_lea.vmem %s0, 152
  %v93 = vld [vmem:[%s92] sm:$0xff]
  %s94 = scalar_lea.vmem %s1, 184
  %95 = vst [vmem:[%s94] sm:$0xff] %v93
  %s96 = scalar_lea.vmem %s0, 24
  %v97 = vld [vmem:[%s96] sm:$0xff]
  %s98 = scalar_lea.vmem %s1, 88
  %99 = vst [vmem:[%s98] sm:$0xff] %v97
  %s100 = scalar_lea.vmem %s0, 136
  %v101 = vld [vmem:[%s100] sm:$0xff]
  %s102 = scalar_lea.vmem %s1, 200
  %103 = vst [vmem:[%s102] sm:$0xff] %v101
  %s104 = scalar_lea.vmem %s0, 8
  %v105 = vld [vmem:[%s104] sm:$0xff]
  %s106 = scalar_lea.vmem %s1, 104
  %107 = vst [vmem:[%s106] sm:$0xff] %v105
  %s108 = scalar_lea.vmem %s0, 120
  %v109 = vld [vmem:[%s108] sm:$0xff]
  %s110 = scalar_lea.vmem %s1, 216
  %111 = vst [vmem:[%s110] sm:$0xff] %v109

// kernel: fno2d_forward.12
$region0: #{fno2d_forward.12}
  #allocation0 [shape = 'u32[]', space=smem, size = 0x4, offset = 0x4, fixed_abs, tag = 'smem constant byte address 0x4 - core index']
  #allocation1 [shape = 'u32[144,128]{1,0:T(1,128)}', space=vmem, size = 0x12000, scoped, tag = 'internal scratch']
  %s0 = inlined_call_operand.vmem [shape: f32[512,32], index: 0, kind: input, shape index: {}]
  %s1 = inlined_call_operand.vmem [shape: f32[32,32], index: 1, kind: input, shape index: {}]
  %s2 = inlined_call_operand.vmem [shape: f32[1,32], index: 2, kind: input, shape index: {}]
  %s3 = inlined_call_operand.vmem [shape: f32[512,32], index: 3, kind: input, shape index: {}]
  %s4 = inlined_call_operand.vmem [shape: f32[512,32], index: 4, kind: output, shape index: {}]
  %s5 = sld [smem:[#allocation0]]
  $region49: #{fno2d_forward.12} parent=0
    _
  %s7 = ssub.s32 1, %s5
  %s8 = scalar_select 0, %s7, %s5
  loop: start=0, step=1, limit=4
  $region2: #{fno2d_forward.12} parent=0 // loop_pre_header
    _
  $region3: #{fno2d_forward.12} parent=0 // loop_header
    %s10 = sphi 0, %s14
    %p11 = scmp.ge.s32.totalorder %s10, 4
    %s20 = sphi 0, %s22
    %s23 = sphi 0, %s20
    %s24 = sphi 0, %s23
    %s40 = sphi 0, %s24
    %s44 = sphi 0, %s44
    %s46 = sphi 0, %s44
    %s47 = sphi 0, %s46
    %s61 = sphi 0, %s47
    %s65 = sphi 0, %s65
    %s67 = sphi 0, %s65
    %s68 = sphi 0, %s67
    %s82 = sphi 0, %s68
    %s88 = sphi 0, %s90
    %s91 = sphi 0, %s88
    %s92 = sphi 0, %s91
    %s108 = sphi 0, %s92
    %s114 = sphi 0, %s116
    %s117 = sphi 0, %s114
    %s118 = sphi 0, %s117
    %s134 = sphi 0, %s118
  $region4: #{fno2d_forward.12} parent=0 // loop_header_branch
    %13 = sbr.rel (%p11) target = $region8
  $region5: #{fno2d_forward.12} parent=0 // loop_body
    %s15 = ssub.s32 %s10, 1
    %s16 = ssub.s32 %s10, 2
    %s17 = sadd.s32 %s10, 1
    %s18 = ssub.s32 %s10, %s17
    %p19 = scmp.eq.s32.totalorder %s18, 0
    %s21 = sadd.s32 %s20, 1
    %s22 = scalar_select %p19, %s20, %s21
    %p25 = pneg %p19
    %p26 = scmp.eq.s32.totalorder %s10, 1
    %p27 = por %p25, %p26
    %p28 = scmp.ne.s32.totalorder %s20, %s23
    %p29 = scmp.eq.s32.totalorder %s10, 0
    %p30 = por %p28, %p29
    %p31 = scmp.ne.s32.totalorder %s20, %s23
    %p32 = scmp.eq.s32.totalorder %s15, 1
    %p33 = por %p31, %p32
    %p34 = scmp.ne.s32.totalorder %s23, %s24
    %p35 = scmp.eq.s32.totalorder %s15, 0
    %p36 = por %p34, %p35
    %p37 = scmp.ne.s32.totalorder %s23, %s24
    %p38 = scmp.eq.s32.totalorder %s16, 1
    %p39 = por %p37, %p38
    %p41 = scmp.ne.s32.totalorder %s24, %s40
    %p42 = scmp.eq.s32.totalorder %s16, 0
    %p43 = por %p41, %p42
    %s45 = sadd.s32 %s44, 1
    %p48 = scmp.eq.s32.totalorder %s10, 1
    %p49 = scmp.ne.s32.totalorder %s44, %s46
    %p50 = scmp.eq.s32.totalorder %s10, 0
    %p51 = por %p49, %p50
    %p52 = scmp.ne.s32.totalorder %s44, %s46
    %p53 = scmp.eq.s32.totalorder %s15, 1
    %p54 = por %p52, %p53
    %p55 = scmp.ne.s32.totalorder %s46, %s47
    %p56 = scmp.eq.s32.totalorder %s15, 0
    %p57 = por %p55, %p56
    %p58 = scmp.ne.s32.totalorder %s46, %s47
    %p59 = scmp.eq.s32.totalorder %s16, 1
    %p60 = por %p58, %p59
    %p62 = scmp.ne.s32.totalorder %s47, %s61
    %p63 = scmp.eq.s32.totalorder %s16, 0
    %p64 = por %p62, %p63
    %s66 = sadd.s32 %s65, 1
    %p69 = scmp.eq.s32.totalorder %s10, 1
    %p70 = scmp.ne.s32.totalorder %s65, %s67
    %p71 = scmp.eq.s32.totalorder %s10, 0
    %p72 = por %p70, %p71
    %p73 = scmp.ne.s32.totalorder %s65, %s67
    %p74 = scmp.eq.s32.totalorder %s15, 1
    %p75 = por %p73, %p74
    %p76 = scmp.ne.s32.totalorder %s67, %s68
    %p77 = scmp.eq.s32.totalorder %s15, 0
    %p78 = por %p76, %p77
    %p79 = scmp.ne.s32.totalorder %s67, %s68
    %p80 = scmp.eq.s32.totalorder %s16, 1
    %p81 = por %p79, %p80
    %p83 = scmp.ne.s32.totalorder %s68, %s82
    %p84 = scmp.eq.s32.totalorder %s16, 0
    %p85 = por %p83, %p84
    %s86 = ssub.s32 %s10, %s17
    %p87 = scmp.eq.s32.totalorder %s86, 0
    %s89 = sadd.s32 %s88, 1
    %s90 = scalar_select %p87, %s88, %s89
    %p93 = pneg %p87
    %p94 = scmp.eq.s32.totalorder %s10, 1
    %p95 = por %p93, %p94
    %p96 = scmp.ne.s32.totalorder %s88, %s91
    %p97 = scmp.eq.s32.totalorder %s10, 0
    %p98 = por %p96, %p97
    %p99 = scmp.ne.s32.totalorder %s88, %s91
    %p100 = scmp.eq.s32.totalorder %s15, 1
    %p101 = por %p99, %p100
    %p102 = scmp.ne.s32.totalorder %s91, %s92
    %p103 = scmp.eq.s32.totalorder %s15, 0
    %p104 = por %p102, %p103
    %p105 = scmp.ne.s32.totalorder %s91, %s92
    %p106 = scmp.eq.s32.totalorder %s16, 1
    %p107 = por %p105, %p106
    %p109 = scmp.ne.s32.totalorder %s92, %s108
    %p110 = scmp.eq.s32.totalorder %s16, 0
    %p111 = por %p109, %p110
    %s112 = ssub.s32 %s10, %s17
    %p113 = scmp.eq.s32.totalorder %s112, 0
    %s115 = sadd.s32 %s114, 1
    %s116 = scalar_select %p113, %s114, %s115
    %p119 = pneg %p113
    %p120 = scmp.eq.s32.totalorder %s10, 1
    %p121 = por %p119, %p120
    %p122 = scmp.ne.s32.totalorder %s114, %s117
    %p123 = scmp.eq.s32.totalorder %s10, 0
    %p124 = por %p122, %p123
    %p125 = scmp.ne.s32.totalorder %s114, %s117
    %p126 = scmp.eq.s32.totalorder %s15, 1
    %p127 = por %p125, %p126
    %p128 = scmp.ne.s32.totalorder %s117, %s118
    %p129 = scmp.eq.s32.totalorder %s15, 0
    %p130 = por %p128, %p129
    %p131 = scmp.ne.s32.totalorder %s117, %s118
    %p132 = scmp.eq.s32.totalorder %s16, 1
    %p133 = por %p131, %p132
    %p135 = scmp.ne.s32.totalorder %s118, %s134
    %p136 = scmp.eq.s32.totalorder %s16, 0
    %p137 = por %p135, %p136
    %p138 = scmp.le.s32.totalorder 1, %s10
    %p139 = scmp.lt.s32.totalorder %s10, 3
    %p140 = pnand %p138, %p139
    %p141 = pneg %p140
    // Predicated region
    $region9: #{fno2d_forward.12} parent=5 // pred_check
      _
    $region10: #{fno2d_forward.12} parent=5 // pred_check_branch
      %143 = sbr.rel (%p140) target = $region12
    $region11: #{fno2d_forward.12} parent=5 // pred_region
      %s144 = ssub.s32 %s10, 1
      // Predicated region
      $region13: #{fno2d_forward.12} parent=11 // pred_check
        %p145 = pneg %p57
      $region14: #{fno2d_forward.12} parent=11 // pred_check_branch
        %147 = sbr.rel (%p145) target = $region16
      $region15: #{fno2d_forward.12} parent=11 // pred_region
        _
      $region16: #{fno2d_forward.12} parent=11 // pred_fallthru
        _
      // Predicated region
      $region17: #{fno2d_forward.12} parent=11 // pred_check
        %p148 = pneg %p78
      $region18: #{fno2d_forward.12} parent=11 // pred_check_branch
        %150 = sbr.rel (%p148) target = $region20
      $region19: #{fno2d_forward.12} parent=11 // pred_region
        _
      $region20: #{fno2d_forward.12} parent=11 // pred_fallthru
        _
    $region12: #{fno2d_forward.12} parent=5 // pred_fallthru
      _
    %p151 = scmp.lt.s32.totalorder %s10, 2
    // Predicated region
    $region21: #{fno2d_forward.12} parent=5 // pred_check
      %p152 = pneg %p151
    $region22: #{fno2d_forward.12} parent=5 // pred_check_branch
      %154 = sbr.rel (%p152) target = $region24
    $region23: #{fno2d_forward.12} parent=5 // pred_region
      // Predicated region
      $region25: #{fno2d_forward.12} parent=23 // pred_check
        %p155 = pneg %p30
      $region26: #{fno2d_forward.12} parent=23 // pred_check_branch
        %157 = sbr.rel (%p155) target = $region28
      $region27: #{fno2d_forward.12} parent=23 // pred_region
        %s158 = smul.u32 32, %s10
        %p159 = scmp.lt.s32.totalorder %s158, 63
        %s160 = scalar_select %p159, %s158, 63
        %s161 = smul.addr %s160, 8
        %s162 = scalar_lea.vmem %s0, %s161
        %s163 = smul.u32 32, %s10
      $region28: #{fno2d_forward.12} parent=23 // pred_fallthru
        _
      // Predicated region
      $region29: #{fno2d_forward.12} parent=23 // pred_check
        %p164 = pneg %p98
      $region30: #{fno2d_forward.12} parent=23 // pred_check_branch
        %166 = sbr.rel (%p164) target = $region32
      $region31: #{fno2d_forward.12} parent=23 // pred_region
        %s167 = smul.u32 32, %s10
        %p168 = scmp.lt.s32.totalorder %s167, 63
        %s169 = scalar_select %p168, %s167, 63
        %s170 = smul.addr %s169, 8
        %s171 = scalar_lea.vmem %s3, %s170
        %s172 = smul.u32 32, %s10
      $region32: #{fno2d_forward.12} parent=23 // pred_fallthru
        _
    $region24: #{fno2d_forward.12} parent=5 // pred_fallthru
      _
    %p173 = scmp.le.s32.totalorder 1, %s10
    %p174 = scmp.lt.s32.totalorder %s10, 3
    %p175 = pnand %p173, %p174
    %p176 = pneg %p175
    // Predicated region
    $region33: #{fno2d_forward.12} parent=5 // pred_check
      _
    $region34: #{fno2d_forward.12} parent=5 // pred_check_branch
      %178 = sbr.rel (%p175) target = $region36
    $region35: #{fno2d_forward.12} parent=5 // pred_region
      %s179 = ssub.s32 %s10, 1
      %s180 = smul.u32 32, %s15
      %p181 = scmp.lt.s32.totalorder %s180, 63
      %s182 = scalar_select %p181, %s180, 63
      %s183 = smul.addr %s182, 8
      %s184 = scalar_lea.vmem %s0, %s183
      %p185 = pneg %p36
      %p186 = pneg %p33
      %p187 = pneg %p57
      %p188 = pneg %p54
      %p189 = pneg %p78
      %p190 = pneg %p75
      %s191 = smul.u32 32, %s15
      %p192 = scmp.lt.s32.totalorder %s191, 63
      %s193 = scalar_select %p192, %s191, 63
      %s194 = smul.addr %s193, 8
      %s195 = scalar_lea.vmem %s3, %s194
      %p196 = pneg %p104
      %p197 = pneg %p101
      %p198 = pneg %p130
      %p199 = pneg %p127
      %s200 = smul.u32 32, %s15
      %p201 = scmp.lt.s32.totalorder %s200, 63
      %s202 = scalar_select %p201, %s200, 63
      %s203 = smul.addr %s202, 8
      %s204 = scalar_lea.vmem %s4, %s203
      %s205 = smul.u32 32, %s15
      %p206 = scmp.lt.s32.totalorder %s205, 63
      %s207 = scalar_select %p206, %s205, 63
      %s208 = smul.addr %s207, 8
      %s209 = scalar_lea.vmem %s0, %s208
      %s210 = smul.u32 32, %s15
      %s211 = smul.u32 32, %s15
      %p212 = scmp.lt.s32.totalorder %s211, 63
      %s213 = scalar_select %p212, %s211, 63
      %s214 = smul.addr %s213, 8
      %s215 = scalar_lea.vmem %s3, %s214
      %s216 = smul.u32 32, %s15
      %s217 = smul.u32 32, %s15
      %p218 = scmp.lt.s32.totalorder %s217, 63
      %s219 = scalar_select %p218, %s217, 63
      %s220 = smul.addr %s219, 8
      %s221 = scalar_lea.vmem %s4, %s220
      %s222 = smul.u32 32, %s15
      %v223 = vld [vmem:[%s209] sm:$0xff]
      %v224 = vld [vmem:[%s209 + $0x8] sm:$0xff]
      %v225 = vld [vmem:[%s209 + $0x10] sm:$0xff]
      %v226 = vld [vmem:[%s209 + $0x18] sm:$0xff]
      %v227 = vld [vmem:[%s209 + $0x20] sm:$0xff]
      %v228 = vld [vmem:[%s209 + $0x28] sm:$0xff]
      %v229 = vld [vmem:[%s209 + $0x30] sm:$0xff]
      %v230 = vld [vmem:[%s209 + $0x38] sm:$0xff]
      %v231 = vld [vmem:[%s209 + $0x40] sm:$0xff]
      %v232 = vld [vmem:[%s209 + $0x48] sm:$0xff]
      %v233 = vld [vmem:[%s209 + $0x50] sm:$0xff]
      %v234 = vld [vmem:[%s209 + $0x58] sm:$0xff]
      %v235 = vld [vmem:[%s209 + $0x60] sm:$0xff]
      %v236 = vld [vmem:[%s209 + $0x68] sm:$0xff]
      %v237 = vld [vmem:[%s209 + $0x70] sm:$0xff]
      %v238 = vld [vmem:[%s209 + $0x78] sm:$0xff]
      %v239 = vld [vmem:[%s209 + $0x80] sm:$0xff]
      %v240 = vld [vmem:[%s209 + $0x88] sm:$0xff]
      %v241 = vld [vmem:[%s209 + $0x90] sm:$0xff]
      %v242 = vld [vmem:[%s209 + $0x98] sm:$0xff]
      %v243 = vld [vmem:[%s209 + $0xa0] sm:$0xff]
      %v244 = vld [vmem:[%s209 + $0xa8] sm:$0xff]
      %v245 = vld [vmem:[%s209 + $0xb0] sm:$0xff]
      %v246 = vld [vmem:[%s209 + $0xb8] sm:$0xff]
      %v247 = vld [vmem:[%s209 + $0xc0] sm:$0xff]
      %v248 = vld [vmem:[%s209 + $0xc8] sm:$0xff]
      %v249 = vld [vmem:[%s209 + $0xd0] sm:$0xff]
      %v250 = vld [vmem:[%s209 + $0xd8] sm:$0xff]
      %v251 = vld [vmem:[%s209 + $0xe0] sm:$0xff]
      %v252 = vld [vmem:[%s209 + $0xe8] sm:$0xff]
      %v253 = vld [vmem:[%s209 + $0xf0] sm:$0xff]
      %v254 = vld [vmem:[%s209 + $0xf8] sm:$0xff]
      %v255 = vld [vmem:[%s1] sm:$0xff]
      %v256 = vld [vmem:[%s1 + $0x8] sm:$0xff]
      %v257 = vld [vmem:[%s1 + $0x10] sm:$0xff]
      %v258 = vld [vmem:[%s1 + $0x18] sm:$0xff]
      %v259 = vld [vmem:[%s2] sm:$0x1]
      %v261 = vlaneseq
      %v262 = vshrl.u32 %v261, 7
      %v263 = vsub.s32 0, %v262
      %v264 = vrot.slane %v259, %v263
      %vm266 = vcmask 261120
      %v268 = vsel %vm266, %v223, 0
      %v271 = vsel %vm266, %v224, 0
      %v274 = vsel %vm266, %v225, 0
      %v277 = vsel %vm266, %v226, 0
      %v280 = vsel %vm266, %v227, 0
      %v283 = vsel %vm266, %v228, 0
      %v286 = vsel %vm266, %v229, 0
      %v289 = vsel %vm266, %v230, 0
      %v292 = vsel %vm266, %v231, 0
      %v295 = vsel %vm266, %v232, 0
      %v298 = vsel %vm266, %v233, 0
      %v301 = vsel %vm266, %v234, 0
      %v304 = vsel %vm266, %v235, 0
      %v307 = vsel %vm266, %v236, 0
      %v310 = vsel %vm266, %v237, 0
      %v313 = vsel %vm266, %v238, 0
      %v316 = vsel %vm266, %v239, 0
      %v319 = vsel %vm266, %v240, 0
      %v322 = vsel %vm266, %v241, 0
      %v325 = vsel %vm266, %v242, 0
      %v328 = vsel %vm266, %v243, 0
      %v331 = vsel %vm266, %v244, 0
      %v334 = vsel %vm266, %v245, 0
      %v337 = vsel %vm266, %v246, 0
      %v340 = vsel %vm266, %v247, 0
      %v343 = vsel %vm266, %v248, 0
      %v346 = vsel %vm266, %v249, 0
      %v349 = vsel %vm266, %v250, 0
      %v352 = vsel %vm266, %v251, 0
      %v355 = vsel %vm266, %v252, 0
      %v358 = vsel %vm266, %v253, 0
      %v361 = vsel %vm266, %v254, 0
      %363 = vmatprep.subr.mxu0 0.0
      %364 = vmatpush1.msra.mxu0 %v255
      %365 = vmatprep.subr.mxu0 0.0
      %366 = vmatpush1.msra.mxu0 %v256
      %367 = vmatprep.subr.mxu0 0.0
      %368 = vmatpush1.msra.mxu0 %v257
      %369 = vmatprep.subr.mxu0 0.0
      %370 = vmatpush1.msra.mxu0 %v258
      %371 = vmatprep.subr.mxu0 0.0
      %372 = vmatpush1.msra.mxu0 0.0
      %373 = vmatprep.subr.mxu0 0.0
      %374 = vmatpush1.msra.mxu0 0.0
      %375 = vmatprep.subr.mxu0 0.0
      %376 = vmatpush1.msra.mxu0 0.0
      %377 = vmatprep.subr.mxu0 0.0
      %378 = vmatpush1.msra.mxu0 0.0
      %379 = vmatprep.subr.mxu0 0.0
      %380 = vmatpush1.msra.mxu0 0.0
      %381 = vmatprep.subr.mxu0 0.0
      %382 = vmatpush1.msra.mxu0 0.0
      %383 = vmatprep.subr.mxu0 0.0
      %384 = vmatpush1.msra.mxu0 0.0
      %385 = vmatprep.subr.mxu0 0.0
      %386 = vmatpush1.msra.mxu0 0.0
      %387 = vmatprep.subr.mxu0 0.0
      %388 = vmatpush1.msra.mxu0 0.0
      %389 = vmatprep.subr.mxu0 0.0
      %390 = vmatpush1.msra.mxu0 0.0
      %391 = vmatprep.subr.mxu0 0.0
      %392 = vmatpush1.msra.mxu0 0.0
      %393 = vmatprep.subr.mxu0 0.0
      %394 = vmatpush1.msra.mxu0 0.0
      %395 = vmatprep.subr.mxu0 0.0
      %396 = vmatpush1.msra.mxu0 0.0
      %397 = vmatprep.subr.mxu0 0.0
      %398 = vmatpush1.msra.mxu0 0.0
      %399 = vmatprep.subr.mxu0 0.0
      %400 = vmatpush1.msra.mxu0 0.0
      %401 = vmatprep.subr.mxu0 0.0
      %402 = vmatpush1.msra.mxu0 0.0
      %403 = vmatprep.subr.mxu0 0.0
      %404 = vmatpush1.msra.mxu0 0.0
      %405 = vmatprep.subr.mxu0 0.0
      %406 = vmatpush1.msra.mxu0 0.0
      %407 = vmatprep.subr.mxu0 0.0
      %408 = vmatpush1.msra.mxu0 0.0
      %409 = vmatprep.subr.mxu0 0.0
      %410 = vmatpush1.msra.mxu0 0.0
      %411 = vmatprep.subr.mxu0 0.0
      %412 = vmatpush1.msra.mxu0 0.0
      %413 = vmatprep.subr.mxu0 0.0
      %414 = vmatpush1.msra.mxu0 0.0
      %415 = vmatprep.subr.mxu0 0.0
      %416 = vmatpush1.msra.mxu0 0.0
      %417 = vmatprep.subr.mxu0 0.0
      %418 = vmatpush1.msra.mxu0 0.0
      %419 = vmatprep.subr.mxu0 0.0
      %420 = vmatpush1.msra.mxu0 0.0
      %421 = vmatprep.subr.mxu0 0.0
      %422 = vmatpush1.msra.mxu0 0.0
      %423 = vmatprep.subr.mxu0 0.0
      %424 = vmatpush1.msra.mxu0 0.0
      %425 = vmatprep.subr.mxu0 0.0
      %426 = vmatpush1.msra.mxu0 0.0
      %427 = vmatprep.mubr.f32.mxu0 0.0
      %428 = vmatmul.mubr.f32.gmra.mrb[0].mxu0 %v268
      %v429 = vpop.f32.mrb[0].mxu0
      %v430 = vadd.f32 %v264, %v429
      %v431 = vpop.f32.mrb[0].mxu0
      %432 = vmatprep.mubr.f32.mxu0 0.0
      %433 = vmatmul.mubr.f32.gmra.mrb[0].mxu0 %v271
      %v434 = vpop.f32.mrb[0].mxu0
      %v435 = vadd.f32 %v264, %v434
      %v436 = vpop.f32.mrb[0].mxu0
      %437 = vmatprep.mubr.f32.mxu0 0.0
      %438 = vmatmul.mubr.f32.gmra.mrb[0].mxu0 %v274
      %v439 = vpop.f32.mrb[0].mxu0
      %v440 = vadd.f32 %v264, %v439
      %v441 = vpop.f32.mrb[0].mxu0
      %442 = vmatprep.mubr.f32.mxu0 0.0
      %443 = vmatmul.mubr.f32.gmra.mrb[0].mxu0 %v277
      %v444 = vpop.f32.mrb[0].mxu0
      %v445 = vadd.f32 %v264, %v444
      %v446 = vpop.f32.mrb[0].mxu0
      %447 = vmatprep.mubr.f32.mxu0 0.0
      %448 = vmatmul.mubr.f32.gmra.mrb[0].mxu0 %v280
      %v449 = vpop.f32.mrb[0].mxu0
      %v450 = vadd.f32 %v264, %v449
      %v451 = vpop.f32.mrb[0].mxu0
      %452 = vmatprep.mubr.f32.mxu0 0.0
      %453 = vmatmul.mubr.f32.gmra.mrb[0].mxu0 %v283
      %v454 = vpop.f32.mrb[0].mxu0
      %v455 = vadd.f32 %v264, %v454
      %v456 = vpop.f32.mrb[0].mxu0
      %457 = vmatprep.mubr.f32.mxu0 0.0
      %458 = vmatmul.mubr.f32.gmra.mrb[0].mxu0 %v286
      %v459 = vpop.f32.mrb[0].mxu0
      %v460 = vadd.f32 %v264, %v459
      %v461 = vpop.f32.mrb[0].mxu0
      %462 = vmatprep.mubr.f32.mxu0 0.0
      %463 = vmatmul.mubr.f32.gmra.mrb[0].mxu0 %v289
      %v464 = vpop.f32.mrb[0].mxu0
      %v465 = vadd.f32 %v264, %v464
      %v466 = vpop.f32.mrb[0].mxu0
      %467 = vmatprep.mubr.f32.mxu0 0.0
      %468 = vmatmul.mubr.f32.gmra.mrb[0].mxu0 %v292
      %v469 = vpop.f32.mrb[0].mxu0
      %v470 = vadd.f32 %v264, %v469
      %v471 = vpop.f32.mrb[0].mxu0
      %472 = vmatprep.mubr.f32.mxu0 0.0
      %473 = vmatmul.mubr.f32.gmra.mrb[0].mxu0 %v295
      %v474 = vpop.f32.mrb[0].mxu0
      %v475 = vadd.f32 %v264, %v474
      %v476 = vpop.f32.mrb[0].mxu0
      %477 = vmatprep.mubr.f32.mxu0 0.0
      %478 = vmatmul.mubr.f32.gmra.mrb[0].mxu0 %v298
      %v479 = vpop.f32.mrb[0].mxu0
      %v480 = vadd.f32 %v264, %v479
      %v481 = vpop.f32.mrb[0].mxu0
      %482 = vmatprep.mubr.f32.mxu0 0.0
      %483 = vmatmul.mubr.f32.gmra.mrb[0].mxu0 %v301
      %v484 = vpop.f32.mrb[0].mxu0
      %v485 = vadd.f32 %v264, %v484
      %v486 = vpop.f32.mrb[0].mxu0
      %487 = vmatprep.mubr.f32.mxu0 0.0
      %488 = vmatmul.mubr.f32.gmra.mrb[0].mxu0 %v304
      %v489 = vpop.f32.mrb[0].mxu0
      %v490 = vadd.f32 %v264, %v489
      %v491 = vpop.f32.mrb[0].mxu0
      %492 = vmatprep.mubr.f32.mxu0 0.0
      %493 = vmatmul.mubr.f32.gmra.mrb[0].mxu0 %v307
      %v494 = vpop.f32.mrb[0].mxu0
      %v495 = vadd.f32 %v264, %v494
      %v496 = vpop.f32.mrb[0].mxu0
      %497 = vmatprep.mubr.f32.mxu0 0.0
      %498 = vmatmul.mubr.f32.gmra.mrb[0].mxu0 %v310
      %v499 = vpop.f32.mrb[0].mxu0
      %v500 = vadd.f32 %v264, %v499
      %v501 = vpop.f32.mrb[0].mxu0
      %502 = vmatprep.mubr.f32.mxu0 0.0
      %503 = vmatmul.mubr.f32.gmra.mrb[0].mxu0 %v313
      %v504 = vpop.f32.mrb[0].mxu0
      %v505 = vadd.f32 %v264, %v504
      %v506 = vpop.f32.mrb[0].mxu0
      %507 = vmatprep.mubr.f32.mxu0 0.0
      %508 = vmatmul.mubr.f32.gmra.mrb[0].mxu0 %v316
      %v509 = vpop.f32.mrb[0].mxu0
      %v510 = vadd.f32 %v264, %v509
      %v511 = vpop.f32.mrb[0].mxu0
      %512 = vmatprep.mubr.f32.mxu0 0.0
      %513 = vmatmul.mubr.f32.gmra.mrb[0].mxu0 %v319
      %v514 = vpop.f32.mrb[0].mxu0
      %v515 = vadd.f32 %v264, %v514
      %v516 = vpop.f32.mrb[0].mxu0
      %517 = vmatprep.mubr.f32.mxu0 0.0
      %518 = vmatmul.mubr.f32.gmra.mrb[0].mxu0 %v322
      %v519 = vpop.f32.mrb[0].mxu0
      %v520 = vadd.f32 %v264, %v519
      %v521 = vpop.f32.mrb[0].mxu0
      %522 = vmatprep.mubr.f32.mxu0 0.0
      %523 = vmatmul.mubr.f32.gmra.mrb[0].mxu0 %v325
      %v524 = vpop.f32.mrb[0].mxu0
      %v525 = vadd.f32 %v264, %v524
      %v526 = vpop.f32.mrb[0].mxu0
      %527 = vmatprep.mubr.f32.mxu0 0.0
      %528 = vmatmul.mubr.f32.gmra.mrb[0].mxu0 %v328
      %v529 = vpop.f32.mrb[0].mxu0
      %v530 = vadd.f32 %v264, %v529
      %v531 = vpop.f32.mrb[0].mxu0
      %532 = vmatprep.mubr.f32.mxu0 0.0
      %533 = vmatmul.mubr.f32.gmra.mrb[0].mxu0 %v331
      %v534 = vpop.f32.mrb[0].mxu0
      %v535 = vadd.f32 %v264, %v534
      %v536 = vpop.f32.mrb[0].mxu0
      %537 = vmatprep.mubr.f32.mxu0 0.0
      %538 = vmatmul.mubr.f32.gmra.mrb[0].mxu0 %v334
      %v539 = vpop.f32.mrb[0].mxu0
      %v540 = vadd.f32 %v264, %v539
      %v541 = vpop.f32.mrb[0].mxu0
      %542 = vmatprep.mubr.f32.mxu0 0.0
      %543 = vmatmul.mubr.f32.gmra.mrb[0].mxu0 %v337
      %v544 = vpop.f32.mrb[0].mxu0
      %v545 = vadd.f32 %v264, %v544
      %v546 = vpop.f32.mrb[0].mxu0
      %547 = vmatprep.mubr.f32.mxu0 0.0
      %548 = vmatmul.mubr.f32.gmra.mrb[0].mxu0 %v340
      %v549 = vpop.f32.mrb[0].mxu0
      %v550 = vadd.f32 %v264, %v549
      %v551 = vpop.f32.mrb[0].mxu0
      %552 = vmatprep.mubr.f32.mxu0 0.0
      %553 = vmatmul.mubr.f32.gmra.mrb[0].mxu0 %v343
      %v554 = vpop.f32.mrb[0].mxu0
      %v555 = vadd.f32 %v264, %v554
      %v556 = vpop.f32.mrb[0].mxu0
      %557 = vmatprep.mubr.f32.mxu0 0.0
      %558 = vmatmul.mubr.f32.gmra.mrb[0].mxu0 %v346
      %v559 = vpop.f32.mrb[0].mxu0
      %v560 = vadd.f32 %v264, %v559
      %v561 = vpop.f32.mrb[0].mxu0
      %562 = vmatprep.mubr.f32.mxu0 0.0
      %563 = vmatmul.mubr.f32.gmra.mrb[0].mxu0 %v349
      %v564 = vpop.f32.mrb[0].mxu0
      %v565 = vadd.f32 %v264, %v564
      %v566 = vpop.f32.mrb[0].mxu0
      %567 = vmatprep.mubr.f32.mxu0 0.0
      %568 = vmatmul.mubr.f32.gmra.mrb[0].mxu0 %v352
      %v569 = vpop.f32.mrb[0].mxu0
      %v570 = vadd.f32 %v264, %v569
      %v571 = vpop.f32.mrb[0].mxu0
      %572 = vmatprep.mubr.f32.mxu0 0.0
      %573 = vmatmul.mubr.f32.gmra.mrb[0].mxu0 %v355
      %v574 = vpop.f32.mrb[0].mxu0
      %v575 = vadd.f32 %v264, %v574
      %v576 = vpop.f32.mrb[0].mxu0
      %577 = vmatprep.mubr.f32.mxu0 0.0
      %578 = vmatmul.mubr.f32.gmra.mrb[0].mxu0 %v358
      %v579 = vpop.f32.mrb[0].mxu0
      %v580 = vadd.f32 %v264, %v579
      %v581 = vpop.f32.mrb[0].mxu0
      %582 = vmatprep.mubr.f32.mxu0 0.0
      %583 = vmatmul.mubr.f32.gmra.mrb[0].mxu0 %v361
      %v584 = vpop.f32.mrb[0].mxu0
      %v585 = vadd.f32 %v264, %v584
      %v586 = vpop.f32.mrb[0].mxu0
      %587 = vdwg.mxu0
      %v588 = vld [vmem:[%s215] sm:$0xff]
      %v589 = vld [vmem:[%s215 + $0x8] sm:$0xff]
      %v590 = vld [vmem:[%s215 + $0x10] sm:$0xff]
      %v591 = vld [vmem:[%s215 + $0x18] sm:$0xff]
      %v592 = vld [vmem:[%s215 + $0x20] sm:$0xff]
      %v593 = vld [vmem:[%s215 + $0x28] sm:$0xff]
      %v594 = vld [vmem:[%s215 + $0x30] sm:$0xff]
      %v595 = vld [vmem:[%s215 + $0x38] sm:$0xff]
      %v596 = vld [vmem:[%s215 + $0x40] sm:$0xff]
      %v597 = vld [vmem:[%s215 + $0x48] sm:$0xff]
      %v598 = vld [vmem:[%s215 + $0x50] sm:$0xff]
      %v599 = vld [vmem:[%s215 + $0x58] sm:$0xff]
      %v600 = vld [vmem:[%s215 + $0x60] sm:$0xff]
      %v601 = vld [vmem:[%s215 + $0x68] sm:$0xff]
      %v602 = vld [vmem:[%s215 + $0x70] sm:$0xff]
      %v603 = vld [vmem:[%s215 + $0x78] sm:$0xff]
      %v604 = vld [vmem:[%s215 + $0x80] sm:$0xff]
      %v605 = vld [vmem:[%s215 + $0x88] sm:$0xff]
      %v606 = vld [vmem:[%s215 + $0x90] sm:$0xff]
      %v607 = vld [vmem:[%s215 + $0x98] sm:$0xff]
      %v608 = vld [vmem:[%s215 + $0xa0] sm:$0xff]
      %v609 = vld [vmem:[%s215 + $0xa8] sm:$0xff]
      %v610 = vld [vmem:[%s215 + $0xb0] sm:$0xff]
      %v611 = vld [vmem:[%s215 + $0xb8] sm:$0xff]
      %v612 = vld [vmem:[%s215 + $0xc0] sm:$0xff]
      %v613 = vld [vmem:[%s215 + $0xc8] sm:$0xff]
      %v614 = vld [vmem:[%s215 + $0xd0] sm:$0xff]
      %v615 = vld [vmem:[%s215 + $0xd8] sm:$0xff]
      %v616 = vld [vmem:[%s215 + $0xe0] sm:$0xff]
      %v617 = vld [vmem:[%s215 + $0xe8] sm:$0xff]
      %v618 = vld [vmem:[%s215 + $0xf0] sm:$0xff]
      %v619 = vld [vmem:[%s215 + $0xf8] sm:$0xff]
      %v620 = vadd.f32 %v430, %v588
      %v621 = vadd.f32 %v435, %v589
      %v622 = vadd.f32 %v440, %v590
      %v623 = vadd.f32 %v445, %v591
      %v624 = vadd.f32 %v450, %v592
      %v625 = vadd.f32 %v455, %v593
      %v626 = vadd.f32 %v460, %v594
      %v627 = vadd.f32 %v465, %v595
      %v628 = vadd.f32 %v470, %v596
      %v629 = vadd.f32 %v475, %v597
      %v630 = vadd.f32 %v480, %v598
      %v631 = vadd.f32 %v485, %v599
      %v632 = vadd.f32 %v490, %v600
      %v633 = vadd.f32 %v495, %v601
      %v634 = vadd.f32 %v500, %v602
      %v635 = vadd.f32 %v505, %v603
      %v636 = vadd.f32 %v510, %v604
      %v637 = vadd.f32 %v515, %v605
      %v638 = vadd.f32 %v520, %v606
      %v639 = vadd.f32 %v525, %v607
      %v640 = vadd.f32 %v530, %v608
      %v641 = vadd.f32 %v535, %v609
      %v642 = vadd.f32 %v540, %v610
      %v643 = vadd.f32 %v545, %v611
      %v644 = vadd.f32 %v550, %v612
      %v645 = vadd.f32 %v555, %v613
      %v646 = vadd.f32 %v560, %v614
      %v647 = vadd.f32 %v565, %v615
      %v648 = vadd.f32 %v570, %v616
      %v649 = vadd.f32 %v575, %v617
      %v650 = vadd.f32 %v580, %v618
      %v651 = vadd.f32 %v585, %v619
      %v652 = vmul.f32 %v620, 0.5
      %v653 = vmul.f32 %v621, 0.5
      %v654 = vmul.f32 %v622, 0.5
      %v655 = vmul.f32 %v623, 0.5
      %v656 = vmul.f32 %v624, 0.5
      %v657 = vmul.f32 %v625, 0.5
      %v658 = vmul.f32 %v626, 0.5
      %v659 = vmul.f32 %v627, 0.5
      %v660 = vmul.f32 %v628, 0.5
      %v661 = vmul.f32 %v629, 0.5
      %v662 = vmul.f32 %v630, 0.5
      %v663 = vmul.f32 %v631, 0.5
      %v664 = vmul.f32 %v632, 0.5
      %v665 = vmul.f32 %v633, 0.5
      %v666 = vmul.f32 %v634, 0.5
      %v667 = vmul.f32 %v635, 0.5
      %v668 = vmul.f32 %v636, 0.5
      %v669 = vmul.f32 %v637, 0.5
      %v670 = vmul.f32 %v638, 0.5
      %v671 = vmul.f32 %v639, 0.5
      %v672 = vmul.f32 %v640, 0.5
      %v673 = vmul.f32 %v641, 0.5
      %v674 = vmul.f32 %v642, 0.5
      %v675 = vmul.f32 %v643, 0.5
      %v676 = vmul.f32 %v644, 0.5
      %v677 = vmul.f32 %v645, 0.5
      %v678 = vmul.f32 %v646, 0.5
      %v679 = vmul.f32 %v647, 0.5
      %v680 = vmul.f32 %v648, 0.5
      %v681 = vmul.f32 %v649, 0.5
      %v682 = vmul.f32 %v650, 0.5
      %v683 = vmul.f32 %v651, 0.5
      %v684 = vmul.f32 %v620, 0.70710677
      %v685 = vmul.f32 %v621, 0.70710677
      %v686 = vmul.f32 %v622, 0.70710677
      %v687 = vmul.f32 %v623, 0.70710677
      %v688 = vmul.f32 %v624, 0.70710677
      %v689 = vmul.f32 %v625, 0.70710677
      %v690 = vmul.f32 %v626, 0.70710677
      %v691 = vmul.f32 %v627, 0.70710677
      %v692 = vmul.f32 %v628, 0.70710677
      %v693 = vmul.f32 %v629, 0.70710677
      %v694 = vmul.f32 %v630, 0.70710677
      %v695 = vmul.f32 %v631, 0.70710677
      %v696 = vmul.f32 %v632, 0.70710677
      %v697 = vmul.f32 %v633, 0.70710677
      %v698 = vmul.f32 %v634, 0.70710677
      %v699 = vmul.f32 %v635, 0.70710677
      %v700 = vmul.f32 %v636, 0.70710677
      %v701 = vmul.f32 %v637, 0.70710677
      %v702 = vmul.f32 %v638, 0.70710677
      %v703 = vmul.f32 %v639, 0.70710677
      %v704 = vmul.f32 %v640, 0.70710677
      %v705 = vmul.f32 %v641, 0.70710677
      %v706 = vmul.f32 %v642, 0.70710677
      %v707 = vmul.f32 %v643, 0.70710677
      %v708 = vmul.f32 %v644, 0.70710677
      %v709 = vmul.f32 %v645, 0.70710677
      %v710 = vmul.f32 %v646, 0.70710677
      %v711 = vmul.f32 %v647, 0.70710677
      %v712 = vmul.f32 %v648, 0.70710677
      %v713 = vmul.f32 %v649, 0.70710677
      %v714 = vmul.f32 %v650, 0.70710677
      %v715 = vmul.f32 %v651, 0.70710677
      %v716 = verf.f32.pop %v684
      %v717 = verf.f32.pop %v685
      %v718 = verf.f32.pop %v686
      %v719 = verf.f32.pop %v687
      %v720 = verf.f32.pop %v688
      %v721 = verf.f32.pop %v689
      %v722 = verf.f32.pop %v690
      %v723 = verf.f32.pop %v691
      %v724 = verf.f32.pop %v692
      %v725 = verf.f32.pop %v693
      %v726 = verf.f32.pop %v694
      %v727 = verf.f32.pop %v695
      %v728 = verf.f32.pop %v696
      %v729 = verf.f32.pop %v697
      %v730 = verf.f32.pop %v698
      %v731 = verf.f32.pop %v699
      %v732 = verf.f32.pop %v700
      %v733 = verf.f32.pop %v701
      %v734 = verf.f32.pop %v702
      %v735 = verf.f32.pop %v703
      %v736 = verf.f32.pop %v704
      %v737 = verf.f32.pop %v705
      %v738 = verf.f32.pop %v706
      %v739 = verf.f32.pop %v707
      %v740 = verf.f32.pop %v708
      %v741 = verf.f32.pop %v709
      %v742 = verf.f32.pop %v710
      %v743 = verf.f32.pop %v711
      %v744 = verf.f32.pop %v712
      %v745 = verf.f32.pop %v713
      %v746 = verf.f32.pop %v714
      %v747 = verf.f32.pop %v715
      %v748 = vadd.f32 %v716, 1.0
      %v749 = vadd.f32 %v717, 1.0
      %v750 = vadd.f32 %v718, 1.0
      %v751 = vadd.f32 %v719, 1.0
      %v752 = vadd.f32 %v720, 1.0
      %v753 = vadd.f32 %v721, 1.0
      %v754 = vadd.f32 %v722, 1.0
      %v755 = vadd.f32 %v723, 1.0
      %v756 = vadd.f32 %v724, 1.0
      %v757 = vadd.f32 %v725, 1.0
      %v758 = vadd.f32 %v726, 1.0
      %v759 = vadd.f32 %v727, 1.0
      %v760 = vadd.f32 %v728, 1.0
      %v761 = vadd.f32 %v729, 1.0
      %v762 = vadd.f32 %v730, 1.0
      %v763 = vadd.f32 %v731, 1.0
      %v764 = vadd.f32 %v732, 1.0
      %v765 = vadd.f32 %v733, 1.0
      %v766 = vadd.f32 %v734, 1.0
      %v767 = vadd.f32 %v735, 1.0
      %v768 = vadd.f32 %v736, 1.0
      %v769 = vadd.f32 %v737, 1.0
      %v770 = vadd.f32 %v738, 1.0
      %v771 = vadd.f32 %v739, 1.0
      %v772 = vadd.f32 %v740, 1.0
      %v773 = vadd.f32 %v741, 1.0
      %v774 = vadd.f32 %v742, 1.0
      %v775 = vadd.f32 %v743, 1.0
      %v776 = vadd.f32 %v744, 1.0
      %v777 = vadd.f32 %v745, 1.0
      %v778 = vadd.f32 %v746, 1.0
      %v779 = vadd.f32 %v747, 1.0
      %v780 = vmul.f32 %v652, %v748
      %v781 = vmul.f32 %v653, %v749
      %v782 = vmul.f32 %v654, %v750
      %v783 = vmul.f32 %v655, %v751
      %v784 = vmul.f32 %v656, %v752
      %v785 = vmul.f32 %v657, %v753
      %v786 = vmul.f32 %v658, %v754
      %v787 = vmul.f32 %v659, %v755
      %v788 = vmul.f32 %v660, %v756
      %v789 = vmul.f32 %v661, %v757
      %v790 = vmul.f32 %v662, %v758
      %v791 = vmul.f32 %v663, %v759
      %v792 = vmul.f32 %v664, %v760
      %v793 = vmul.f32 %v665, %v761
      %v794 = vmul.f32 %v666, %v762
      %v795 = vmul.f32 %v667, %v763
      %v796 = vmul.f32 %v668, %v764
      %v797 = vmul.f32 %v669, %v765
      %v798 = vmul.f32 %v670, %v766
      %v799 = vmul.f32 %v671, %v767
      %v800 = vmul.f32 %v672, %v768
      %v801 = vmul.f32 %v673, %v769
      %v802 = vmul.f32 %v674, %v770
      %v803 = vmul.f32 %v675, %v771
      %v804 = vmul.f32 %v676, %v772
      %v805 = vmul.f32 %v677, %v773
      %v806 = vmul.f32 %v678, %v774
      %v807 = vmul.f32 %v679, %v775
      %v808 = vmul.f32 %v680, %v776
      %v809 = vmul.f32 %v681, %v777
      %v810 = vmul.f32 %v682, %v778
      %v811 = vmul.f32 %v683, %v779
      %812 = vst.msk [vmem:[%s221] sm:$0xff] %vm266, %v780
      %813 = vst.msk [vmem:[%s221 + $0x8] sm:$0xff] %vm266, %v781
      %814 = vst.msk [vmem:[%s221 + $0x10] sm:$0xff] %vm266, %v782
      %815 = vst.msk [vmem:[%s221 + $0x18] sm:$0xff] %vm266, %v783
      %816 = vst.msk [vmem:[%s221 + $0x20] sm:$0xff] %vm266, %v784
      %817 = vst.msk [vmem:[%s221 + $0x28] sm:$0xff] %vm266, %v785
      %818 = vst.msk [vmem:[%s221 + $0x30] sm:$0xff] %vm266, %v786
      %819 = vst.msk [vmem:[%s221 + $0x38] sm:$0xff] %vm266, %v787
      %820 = vst.msk [vmem:[%s221 + $0x40] sm:$0xff] %vm266, %v788
      %821 = vst.msk [vmem:[%s221 + $0x48] sm:$0xff] %vm266, %v789
      %822 = vst.msk [vmem:[%s221 + $0x50] sm:$0xff] %vm266, %v790
      %823 = vst.msk [vmem:[%s221 + $0x58] sm:$0xff] %vm266, %v791
      %824 = vst.msk [vmem:[%s221 + $0x60] sm:$0xff] %vm266, %v792
      %825 = vst.msk [vmem:[%s221 + $0x68] sm:$0xff] %vm266, %v793
      %826 = vst.msk [vmem:[%s221 + $0x70] sm:$0xff] %vm266, %v794
      %827 = vst.msk [vmem:[%s221 + $0x78] sm:$0xff] %vm266, %v795
      %828 = vst.msk [vmem:[%s221 + $0x80] sm:$0xff] %vm266, %v796
      %829 = vst.msk [vmem:[%s221 + $0x88] sm:$0xff] %vm266, %v797
      %830 = vst.msk [vmem:[%s221 + $0x90] sm:$0xff] %vm266, %v798
      %831 = vst.msk [vmem:[%s221 + $0x98] sm:$0xff] %vm266, %v799
      %832 = vst.msk [vmem:[%s221 + $0xa0] sm:$0xff] %vm266, %v800
      %833 = vst.msk [vmem:[%s221 + $0xa8] sm:$0xff] %vm266, %v801
      %834 = vst.msk [vmem:[%s221 + $0xb0] sm:$0xff] %vm266, %v802
      %835 = vst.msk [vmem:[%s221 + $0xb8] sm:$0xff] %vm266, %v803
      %836 = vst.msk [vmem:[%s221 + $0xc0] sm:$0xff] %vm266, %v804
      %837 = vst.msk [vmem:[%s221 + $0xc8] sm:$0xff] %vm266, %v805
      %838 = vst.msk [vmem:[%s221 + $0xd0] sm:$0xff] %vm266, %v806
      %839 = vst.msk [vmem:[%s221 + $0xd8] sm:$0xff] %vm266, %v807
      %840 = vst.msk [vmem:[%s221 + $0xe0] sm:$0xff] %vm266, %v808
      %841 = vst.msk [vmem:[%s221 + $0xe8] sm:$0xff] %vm266, %v809
      %842 = vst.msk [vmem:[%s221 + $0xf0] sm:$0xff] %vm266, %v810
      %843 = vst.msk [vmem:[%s221 + $0xf8] sm:$0xff] %vm266, %v811
      %s844 = smul.u32 32, %s15
      %p845 = scmp.lt.s32.totalorder %s844, 63
      %s846 = scalar_select %p845, %s844, 63
      %s847 = smul.addr %s846, 8
      %s848 = scalar_lea.vmem %s4, %s847
      // Predicated region
      $region37: #{fno2d_forward.12} parent=35 // pred_check
        %p849 = pneg %p127
      $region38: #{fno2d_forward.12} parent=35 // pred_check_branch
        %851 = sbr.rel (%p849) target = $region40
      $region39: #{fno2d_forward.12} parent=35 // pred_region
        %s852 = smul.u32 32, %s15
      $region40: #{fno2d_forward.12} parent=35 // pred_fallthru
        _
    $region36: #{fno2d_forward.12} parent=5 // pred_fallthru
      _
    %p853 = scmp.le.s32.totalorder 2, %s10
    // Predicated region
    $region41: #{fno2d_forward.12} parent=5 // pred_check
      %p854 = pneg %p853
    $region42: #{fno2d_forward.12} parent=5 // pred_check_branch
      %856 = sbr.rel (%p854) target = $region44
    $region43: #{fno2d_forward.12} parent=5 // pred_region
      %s857 = ssub.s32 %s10, 2
      // Predicated region
      $region45: #{fno2d_forward.12} parent=43 // pred_check
        %p858 = pneg %p133
      $region46: #{fno2d_forward.12} parent=43 // pred_check_branch
        %860 = sbr.rel (%p858) target = $region48
      $region47: #{fno2d_forward.12} parent=43 // pred_region
        %s861 = smul.u32 32, %s16
        %p862 = scmp.lt.s32.totalorder %s861, 63
        %s863 = scalar_select %p862, %s861, 63
        %s864 = smul.addr %s863, 8
        %s865 = scalar_lea.vmem %s4, %s864
      $region48: #{fno2d_forward.12} parent=43 // pred_fallthru
        _
    $region44: #{fno2d_forward.12} parent=5 // pred_fallthru
      _
  $region6: #{fno2d_forward.12} parent=0 // loop_footer
    %s14 = sadd.s32 1, %s10
  $region7: #{fno2d_forward.12} parent=0 // loop_footer_branch
    %9 = sbr.rel target = $region3
  $region8: #{fno2d_forward.12} parent=0 // loop_exit
    _

// kernel: fno2d_forward.19
$region0: #{fno2d_forward.19}
  #allocation0 [shape = 'u32[]', space=smem, size = 0x4, offset = 0x4, fixed_abs, tag = 'smem constant byte address 0x4 - core index']
  #allocation1 [shape = 'u32[144,128]{1,0:T(1,128)}', space=vmem, size = 0x12000, scoped, tag = 'internal scratch']
  #allocation2 [shape = 'f32[256,128]{1,0:T(8,128)}', space=vmem, size = 0x20000, scoped, tag = 'scratch operand']
  #allocation3 [shape = 'f32[1,1]{1,0:T(1,128)S(1)}', space=vmem, size = 0x200, scoped, tag = 'scoped memory for fno2d_forward.19']
  %s0 = inlined_call_operand.vmem [shape: f32[512,32], index: 0, kind: input, shape index: {}]
  %s1 = inlined_call_operand.vmem [shape: f32[32,128], index: 1, kind: input, shape index: {}]
  %s2 = inlined_call_operand.vmem [shape: f32[1,128], index: 2, kind: input, shape index: {}]
  %s3 = inlined_call_operand.vmem [shape: f32[128,1], index: 3, kind: input, shape index: {}]
  %s4 = inlined_call_operand.<no memory space> [shape: f32[1,1], index: 4, kind: input, shape index: {}]
  %s5 = inlined_call_operand.vmem [shape: f32[512,1], index: 5, kind: output, shape index: {}]
  %s6 = sld [smem:[#allocation0]]
  $region53: #{fno2d_forward.19} parent=0
    _
  %s8 = ssub.s32 1, %s6
  %s9 = scalar_select 0, %s8, %s6
  %v10 = vstv %s4
  %11 = vst [vmem:[#allocation3] sm:$0x1] %v10
  loop: start=0, step=1, limit=4
  $region2: #{fno2d_forward.19} parent=0 // loop_pre_header
    _
  $region3: #{fno2d_forward.19} parent=0 // loop_header
    %s13 = sphi 0, %s17
    %p14 = scmp.ge.s32.totalorder %s13, 4
    %s23 = sphi 0, %s25
    %s26 = sphi 0, %s23
    %s27 = sphi 0, %s26
    %s43 = sphi 0, %s27
    %s47 = sphi 0, %s47
    %s49 = sphi 0, %s47
    %s50 = sphi 0, %s49
    %s64 = sphi 0, %s50
    %s68 = sphi 0, %s68
    %s70 = sphi 0, %s68
    %s71 = sphi 0, %s70
    %s85 = sphi 0, %s71
    %s89 = sphi 0, %s89
    %s91 = sphi 0, %s89
    %s92 = sphi 0, %s91
    %s106 = sphi 0, %s92
    %s110 = sphi 0, %s110
    %s112 = sphi 0, %s110
    %s113 = sphi 0, %s112
    %s127 = sphi 0, %s113
    %s133 = sphi 0, %s135
    %s136 = sphi 0, %s133
    %s137 = sphi 0, %s136
    %s153 = sphi 0, %s137
  $region4: #{fno2d_forward.19} parent=0 // loop_header_branch
    %16 = sbr.rel (%p14) target = $region8
  $region5: #{fno2d_forward.19} parent=0 // loop_body
    %s18 = ssub.s32 %s13, 1
    %s19 = ssub.s32 %s13, 2
    %s20 = sadd.s32 %s13, 1
    %s21 = ssub.s32 %s13, %s20
    %p22 = scmp.eq.s32.totalorder %s21, 0
    %s24 = sadd.s32 %s23, 1
    %s25 = scalar_select %p22, %s23, %s24
    %p28 = pneg %p22
    %p29 = scmp.eq.s32.totalorder %s13, 1
    %p30 = por %p28, %p29
    %p31 = scmp.ne.s32.totalorder %s23, %s26
    %p32 = scmp.eq.s32.totalorder %s13, 0
    %p33 = por %p31, %p32
    %p34 = scmp.ne.s32.totalorder %s23, %s26
    %p35 = scmp.eq.s32.totalorder %s18, 1
    %p36 = por %p34, %p35
    %p37 = scmp.ne.s32.totalorder %s26, %s27
    %p38 = scmp.eq.s32.totalorder %s18, 0
    %p39 = por %p37, %p38
    %p40 = scmp.ne.s32.totalorder %s26, %s27
    %p41 = scmp.eq.s32.totalorder %s19, 1
    %p42 = por %p40, %p41
    %p44 = scmp.ne.s32.totalorder %s27, %s43
    %p45 = scmp.eq.s32.totalorder %s19, 0
    %p46 = por %p44, %p45
    %s48 = sadd.s32 %s47, 1
    %p51 = scmp.eq.s32.totalorder %s13, 1
    %p52 = scmp.ne.s32.totalorder %s47, %s49
    %p53 = scmp.eq.s32.totalorder %s13, 0
    %p54 = por %p52, %p53
    %p55 = scmp.ne.s32.totalorder %s47, %s49
    %p56 = scmp.eq.s32.totalorder %s18, 1
    %p57 = por %p55, %p56
    %p58 = scmp.ne.s32.totalorder %s49, %s50
    %p59 = scmp.eq.s32.totalorder %s18, 0
    %p60 = por %p58, %p59
    %p61 = scmp.ne.s32.totalorder %s49, %s50
    %p62 = scmp.eq.s32.totalorder %s19, 1
    %p63 = por %p61, %p62
    %p65 = scmp.ne.s32.totalorder %s50, %s64
    %p66 = scmp.eq.s32.totalorder %s19, 0
    %p67 = por %p65, %p66
    %s69 = sadd.s32 %s68, 1
    %p72 = scmp.eq.s32.totalorder %s13, 1
    %p73 = scmp.ne.s32.totalorder %s68, %s70
    %p74 = scmp.eq.s32.totalorder %s13, 0
    %p75 = por %p73, %p74
    %p76 = scmp.ne.s32.totalorder %s68, %s70
    %p77 = scmp.eq.s32.totalorder %s18, 1
    %p78 = por %p76, %p77
    %p79 = scmp.ne.s32.totalorder %s70, %s71
    %p80 = scmp.eq.s32.totalorder %s18, 0
    %p81 = por %p79, %p80
    %p82 = scmp.ne.s32.totalorder %s70, %s71
    %p83 = scmp.eq.s32.totalorder %s19, 1
    %p84 = por %p82, %p83
    %p86 = scmp.ne.s32.totalorder %s71, %s85
    %p87 = scmp.eq.s32.totalorder %s19, 0
    %p88 = por %p86, %p87
    %s90 = sadd.s32 %s89, 1
    %p93 = scmp.eq.s32.totalorder %s13, 1
    %p94 = scmp.ne.s32.totalorder %s89, %s91
    %p95 = scmp.eq.s32.totalorder %s13, 0
    %p96 = por %p94, %p95
    %p97 = scmp.ne.s32.totalorder %s89, %s91
    %p98 = scmp.eq.s32.totalorder %s18, 1
    %p99 = por %p97, %p98
    %p100 = scmp.ne.s32.totalorder %s91, %s92
    %p101 = scmp.eq.s32.totalorder %s18, 0
    %p102 = por %p100, %p101
    %p103 = scmp.ne.s32.totalorder %s91, %s92
    %p104 = scmp.eq.s32.totalorder %s19, 1
    %p105 = por %p103, %p104
    %p107 = scmp.ne.s32.totalorder %s92, %s106
    %p108 = scmp.eq.s32.totalorder %s19, 0
    %p109 = por %p107, %p108
    %s111 = sadd.s32 %s110, 1
    %p114 = scmp.eq.s32.totalorder %s13, 1
    %p115 = scmp.ne.s32.totalorder %s110, %s112
    %p116 = scmp.eq.s32.totalorder %s13, 0
    %p117 = por %p115, %p116
    %p118 = scmp.ne.s32.totalorder %s110, %s112
    %p119 = scmp.eq.s32.totalorder %s18, 1
    %p120 = por %p118, %p119
    %p121 = scmp.ne.s32.totalorder %s112, %s113
    %p122 = scmp.eq.s32.totalorder %s18, 0
    %p123 = por %p121, %p122
    %p124 = scmp.ne.s32.totalorder %s112, %s113
    %p125 = scmp.eq.s32.totalorder %s19, 1
    %p126 = por %p124, %p125
    %p128 = scmp.ne.s32.totalorder %s113, %s127
    %p129 = scmp.eq.s32.totalorder %s19, 0
    %p130 = por %p128, %p129
    %s131 = ssub.s32 %s13, %s20
    %p132 = scmp.eq.s32.totalorder %s131, 0
    %s134 = sadd.s32 %s133, 1
    %s135 = scalar_select %p132, %s133, %s134
    %p138 = pneg %p132
    %p139 = scmp.eq.s32.totalorder %s13, 1
    %p140 = por %p138, %p139
    %p141 = scmp.ne.s32.totalorder %s133, %s136
    %p142 = scmp.eq.s32.totalorder %s13, 0
    %p143 = por %p141, %p142
    %p144 = scmp.ne.s32.totalorder %s133, %s136
    %p145 = scmp.eq.s32.totalorder %s18, 1
    %p146 = por %p144, %p145
    %p147 = scmp.ne.s32.totalorder %s136, %s137
    %p148 = scmp.eq.s32.totalorder %s18, 0
    %p149 = por %p147, %p148
    %p150 = scmp.ne.s32.totalorder %s136, %s137
    %p151 = scmp.eq.s32.totalorder %s19, 1
    %p152 = por %p150, %p151
    %p154 = scmp.ne.s32.totalorder %s137, %s153
    %p155 = scmp.eq.s32.totalorder %s19, 0
    %p156 = por %p154, %p155
    %p157 = scmp.le.s32.totalorder 1, %s13
    %p158 = scmp.lt.s32.totalorder %s13, 3
    %p159 = pnand %p157, %p158
    %p160 = pneg %p159
    // Predicated region
    $region9: #{fno2d_forward.19} parent=5 // pred_check
      _
    $region10: #{fno2d_forward.19} parent=5 // pred_check_branch
      %162 = sbr.rel (%p159) target = $region12
    $region11: #{fno2d_forward.19} parent=5 // pred_region
      %s163 = ssub.s32 %s13, 1
      // Predicated region
      $region13: #{fno2d_forward.19} parent=11 // pred_check
        %p164 = pneg %p60
      $region14: #{fno2d_forward.19} parent=11 // pred_check_branch
        %166 = sbr.rel (%p164) target = $region16
      $region15: #{fno2d_forward.19} parent=11 // pred_region
        _
      $region16: #{fno2d_forward.19} parent=11 // pred_fallthru
        _
      // Predicated region
      $region17: #{fno2d_forward.19} parent=11 // pred_check
        %p167 = pneg %p81
      $region18: #{fno2d_forward.19} parent=11 // pred_check_branch
        %169 = sbr.rel (%p167) target = $region20
      $region19: #{fno2d_forward.19} parent=11 // pred_region
        _
      $region20: #{fno2d_forward.19} parent=11 // pred_fallthru
        _
      // Predicated region
      $region21: #{fno2d_forward.19} parent=11 // pred_check
        %p170 = pneg %p102
      $region22: #{fno2d_forward.19} parent=11 // pred_check_branch
        %172 = sbr.rel (%p170) target = $region24
      $region23: #{fno2d_forward.19} parent=11 // pred_region
        _
      $region24: #{fno2d_forward.19} parent=11 // pred_fallthru
        _
      // Predicated region
      $region25: #{fno2d_forward.19} parent=11 // pred_check
        %p173 = pneg %p123
      $region26: #{fno2d_forward.19} parent=11 // pred_check_branch
        %175 = sbr.rel (%p173) target = $region28
      $region27: #{fno2d_forward.19} parent=11 // pred_region
        _
      $region28: #{fno2d_forward.19} parent=11 // pred_fallthru
        _
    $region12: #{fno2d_forward.19} parent=5 // pred_fallthru
      _
    %p176 = scmp.lt.s32.totalorder %s13, 2
    // Predicated region
    $region29: #{fno2d_forward.19} parent=5 // pred_check
      %p177 = pneg %p176
    $region30: #{fno2d_forward.19} parent=5 // pred_check_branch
      %179 = sbr.rel (%p177) target = $region32
    $region31: #{fno2d_forward.19} parent=5 // pred_region
      // Predicated region
      $region33: #{fno2d_forward.19} parent=31 // pred_check
        %p180 = pneg %p33
      $region34: #{fno2d_forward.19} parent=31 // pred_check_branch
        %182 = sbr.rel (%p180) target = $region36
      $region35: #{fno2d_forward.19} parent=31 // pred_region
        %s183 = smul.u32 32, %s13
        %p184 = scmp.lt.s32.totalorder %s183, 63
        %s185 = scalar_select %p184, %s183, 63
        %s186 = smul.addr %s185, 8
        %s187 = scalar_lea.vmem %s0, %s186
        %s188 = smul.u32 32, %s13
      $region36: #{fno2d_forward.19} parent=31 // pred_fallthru
        _
    $region32: #{fno2d_forward.19} parent=5 // pred_fallthru
      _
    %p189 = scmp.le.s32.totalorder 1, %s13
    %p190 = scmp.lt.s32.totalorder %s13, 3
    %p191 = pnand %p189, %p190
    %p192 = pneg %p191
    // Predicated region
    $region37: #{fno2d_forward.19} parent=5 // pred_check
      _
    $region38: #{fno2d_forward.19} parent=5 // pred_check_branch
      %194 = sbr.rel (%p191) target = $region40
    $region39: #{fno2d_forward.19} parent=5 // pred_region
      %s195 = ssub.s32 %s13, 1
      %s196 = smul.u32 32, %s18
      %p197 = scmp.lt.s32.totalorder %s196, 63
      %s198 = scalar_select %p197, %s196, 63
      %s199 = smul.addr %s198, 8
      %s200 = scalar_lea.vmem %s0, %s199
      %p201 = pneg %p39
      %p202 = pneg %p36
      %p203 = pneg %p60
      %p204 = pneg %p57
      %p205 = pneg %p81
      %p206 = pneg %p78
      %p207 = pneg %p102
      %p208 = pneg %p99
      %p209 = pneg %p123
      %p210 = pneg %p120
      %p211 = pneg %p149
      %p212 = pneg %p146
      %s213 = smul.u32 32, %s18
      %p214 = scmp.lt.s32.totalorder %s213, 63
      %s215 = scalar_select %p214, %s213, 63
      %s216 = smul.addr %s215, 8
      %s217 = scalar_lea.vmem %s5, %s216
      %s218 = smul.u32 32, %s18
      %p219 = scmp.lt.s32.totalorder %s218, 63
      %s220 = scalar_select %p219, %s218, 63
      %s221 = smul.addr %s220, 8
      %s222 = scalar_lea.vmem %s0, %s221
      %s223 = smul.u32 32, %s18
      %s224 = smul.u32 32, %s18
      %p225 = scmp.lt.s32.totalorder %s224, 63
      %s226 = scalar_select %p225, %s224, 63
      %s227 = smul.addr %s226, 8
      %s228 = scalar_lea.vmem %s5, %s227
      %s229 = smul.u32 32, %s18
      %v230 = vld [vmem:[%s222] sm:$0xff]
      %v231 = vld [vmem:[%s222 + $0x8] sm:$0xff]
      %v232 = vld [vmem:[%s222 + $0x10] sm:$0xff]
      %v233 = vld [vmem:[%s222 + $0x18] sm:$0xff]
      %v234 = vld [vmem:[%s222 + $0x20] sm:$0xff]
      %v235 = vld [vmem:[%s222 + $0x28] sm:$0xff]
      %v236 = vld [vmem:[%s222 + $0x30] sm:$0xff]
      %v237 = vld [vmem:[%s222 + $0x38] sm:$0xff]
      %v238 = vld [vmem:[%s222 + $0x40] sm:$0xff]
      %v239 = vld [vmem:[%s222 + $0x48] sm:$0xff]
      %v240 = vld [vmem:[%s222 + $0x50] sm:$0xff]
      %v241 = vld [vmem:[%s222 + $0x58] sm:$0xff]
      %v242 = vld [vmem:[%s222 + $0x60] sm:$0xff]
      %v243 = vld [vmem:[%s222 + $0x68] sm:$0xff]
      %v244 = vld [vmem:[%s222 + $0x70] sm:$0xff]
      %v245 = vld [vmem:[%s222 + $0x78] sm:$0xff]
      %v246 = vld [vmem:[%s222 + $0x80] sm:$0xff]
      %v247 = vld [vmem:[%s222 + $0x88] sm:$0xff]
      %v248 = vld [vmem:[%s222 + $0x90] sm:$0xff]
      %v249 = vld [vmem:[%s222 + $0x98] sm:$0xff]
      %v250 = vld [vmem:[%s222 + $0xa0] sm:$0xff]
      %v251 = vld [vmem:[%s222 + $0xa8] sm:$0xff]
      %v252 = vld [vmem:[%s222 + $0xb0] sm:$0xff]
      %v253 = vld [vmem:[%s222 + $0xb8] sm:$0xff]
      %v254 = vld [vmem:[%s222 + $0xc0] sm:$0xff]
      %v255 = vld [vmem:[%s222 + $0xc8] sm:$0xff]
      %v256 = vld [vmem:[%s222 + $0xd0] sm:$0xff]
      %v257 = vld [vmem:[%s222 + $0xd8] sm:$0xff]
      %v258 = vld [vmem:[%s222 + $0xe0] sm:$0xff]
      %v259 = vld [vmem:[%s222 + $0xe8] sm:$0xff]
      %v260 = vld [vmem:[%s222 + $0xf0] sm:$0xff]
      %v261 = vld [vmem:[%s222 + $0xf8] sm:$0xff]
      %v262 = vld [vmem:[%s1] sm:$0xff]
      %v263 = vld [vmem:[%s1 + $0x8] sm:$0xff]
      %v264 = vld [vmem:[%s1 + $0x10] sm:$0xff]
      %v265 = vld [vmem:[%s1 + $0x18] sm:$0xff]
      %v266 = vld [vmem:[%s2] sm:$0x1]
      %v268 = vlaneseq
      %v269 = vshrl.u32 %v268, 7
      %v270 = vsub.s32 0, %v269
      %v271 = vrot.slane %v266, %v270
      %vm273 = vcmask 261120
      %v275 = vsel %vm273, %v230, 0
      %v278 = vsel %vm273, %v231, 0
      %v281 = vsel %vm273, %v232, 0
      %v284 = vsel %vm273, %v233, 0
      %v287 = vsel %vm273, %v234, 0
      %v290 = vsel %vm273, %v235, 0
      %v293 = vsel %vm273, %v236, 0
      %v296 = vsel %vm273, %v237, 0
      %v299 = vsel %vm273, %v238, 0
      %v302 = vsel %vm273, %v239, 0
      %v305 = vsel %vm273, %v240, 0
      %v308 = vsel %vm273, %v241, 0
      %v311 = vsel %vm273, %v242, 0
      %v314 = vsel %vm273, %v243, 0
      %v317 = vsel %vm273, %v244, 0
      %v320 = vsel %vm273, %v245, 0
      %v323 = vsel %vm273, %v246, 0
      %v326 = vsel %vm273, %v247, 0
      %v329 = vsel %vm273, %v248, 0
      %v332 = vsel %vm273, %v249, 0
      %v335 = vsel %vm273, %v250, 0
      %v338 = vsel %vm273, %v251, 0
      %v341 = vsel %vm273, %v252, 0
      %v344 = vsel %vm273, %v253, 0
      %v347 = vsel %vm273, %v254, 0
      %v350 = vsel %vm273, %v255, 0
      %v353 = vsel %vm273, %v256, 0
      %v356 = vsel %vm273, %v257, 0
      %v359 = vsel %vm273, %v258, 0
      %v362 = vsel %vm273, %v259, 0
      %v365 = vsel %vm273, %v260, 0
      %v368 = vsel %vm273, %v261, 0
      %370 = vmatprep.subr.mxu0 0.0
      %371 = vmatpush1.msra.mxu0 %v262
      %372 = vmatprep.subr.mxu0 0.0
      %373 = vmatpush1.msra.mxu0 %v263
      %374 = vmatprep.subr.mxu0 0.0
      %375 = vmatpush1.msra.mxu0 %v264
      %376 = vmatprep.subr.mxu0 0.0
      %377 = vmatpush1.msra.mxu0 %v265
      %378 = vmatprep.subr.mxu0 0.0
      %379 = vmatpush1.msra.mxu0 0.0
      %380 = vmatprep.subr.mxu0 0.0
      %381 = vmatpush1.msra.mxu0 0.0
      %382 = vmatprep.subr.mxu0 0.0
      %383 = vmatpush1.msra.mxu0 0.0
      %384 = vmatprep.subr.mxu0 0.0
      %385 = vmatpush1.msra.mxu0 0.0
      %386 = vmatprep.subr.mxu0 0.0
      %387 = vmatpush1.msra.mxu0 0.0
      %388 = vmatprep.subr.mxu0 0.0
      %389 = vmatpush1.msra.mxu0 0.0
      %390 = vmatprep.subr.mxu0 0.0
      %391 = vmatpush1.msra.mxu0 0.0
      %392 = vmatprep.subr.mxu0 0.0
      %393 = vmatpush1.msra.mxu0 0.0
      %394 = vmatprep.subr.mxu0 0.0
      %395 = vmatpush1.msra.mxu0 0.0
      %396 = vmatprep.subr.mxu0 0.0
      %397 = vmatpush1.msra.mxu0 0.0
      %398 = vmatprep.subr.mxu0 0.0
      %399 = vmatpush1.msra.mxu0 0.0
      %400 = vmatprep.subr.mxu0 0.0
      %401 = vmatpush1.msra.mxu0 0.0
      %402 = vmatprep.subr.mxu0 0.0
      %403 = vmatpush1.msra.mxu0 0.0
      %404 = vmatprep.subr.mxu0 0.0
      %405 = vmatpush1.msra.mxu0 0.0
      %406 = vmatprep.subr.mxu0 0.0
      %407 = vmatpush1.msra.mxu0 0.0
      %408 = vmatprep.subr.mxu0 0.0
      %409 = vmatpush1.msra.mxu0 0.0
      %410 = vmatprep.subr.mxu0 0.0
      %411 = vmatpush1.msra.mxu0 0.0
      %412 = vmatprep.subr.mxu0 0.0
      %413 = vmatpush1.msra.mxu0 0.0
      %414 = vmatprep.subr.mxu0 0.0
      %415 = vmatpush1.msra.mxu0 0.0
      %416 = vmatprep.subr.mxu0 0.0
      %417 = vmatpush1.msra.mxu0 0.0
      %418 = vmatprep.subr.mxu0 0.0
      %419 = vmatpush1.msra.mxu0 0.0
      %420 = vmatprep.subr.mxu0 0.0
      %421 = vmatpush1.msra.mxu0 0.0
      %422 = vmatprep.subr.mxu0 0.0
      %423 = vmatpush1.msra.mxu0 0.0
      %424 = vmatprep.subr.mxu0 0.0
      %425 = vmatpush1.msra.mxu0 0.0
      %426 = vmatprep.subr.mxu0 0.0
      %427 = vmatpush1.msra.mxu0 0.0
      %428 = vmatprep.subr.mxu0 0.0
      %429 = vmatpush1.msra.mxu0 0.0
      %430 = vmatprep.subr.mxu0 0.0
      %431 = vmatpush1.msra.mxu0 0.0
      %432 = vmatprep.subr.mxu0 0.0
      %433 = vmatpush1.msra.mxu0 0.0
      %434 = vmatprep.mubr.f32.mxu0 0.0
      %435 = vmatmul.mubr.f32.gmra.mrb[0].mxu0 %v275
      %v436 = vpop.f32.mrb[0].mxu0
      %v437 = vadd.f32 %v271, %v436
      %v438 = vpop.f32.mrb[0].mxu0
      %439 = vmatprep.mubr.f32.mxu0 0.0
      %440 = vmatmul.mubr.f32.gmra.mrb[0].mxu0 %v278
      %v441 = vpop.f32.mrb[0].mxu0
      %v442 = vadd.f32 %v271, %v441
      %v443 = vpop.f32.mrb[0].mxu0
      %444 = vmatprep.mubr.f32.mxu0 0.0
      %445 = vmatmul.mubr.f32.gmra.mrb[0].mxu0 %v281
      %v446 = vpop.f32.mrb[0].mxu0
      %v447 = vadd.f32 %v271, %v446
      %v448 = vpop.f32.mrb[0].mxu0
      %449 = vmatprep.mubr.f32.mxu0 0.0
      %450 = vmatmul.mubr.f32.gmra.mrb[0].mxu0 %v284
      %v451 = vpop.f32.mrb[0].mxu0
      %v452 = vadd.f32 %v271, %v451
      %v453 = vpop.f32.mrb[0].mxu0
      %454 = vmatprep.mubr.f32.mxu0 0.0
      %455 = vmatmul.mubr.f32.gmra.mrb[0].mxu0 %v287
      %v456 = vpop.f32.mrb[0].mxu0
      %v457 = vadd.f32 %v271, %v456
      %v458 = vpop.f32.mrb[0].mxu0
      %459 = vmatprep.mubr.f32.mxu0 0.0
      %460 = vmatmul.mubr.f32.gmra.mrb[0].mxu0 %v290
      %v461 = vpop.f32.mrb[0].mxu0
      %v462 = vadd.f32 %v271, %v461
      %v463 = vpop.f32.mrb[0].mxu0
      %464 = vmatprep.mubr.f32.mxu0 0.0
      %465 = vmatmul.mubr.f32.gmra.mrb[0].mxu0 %v293
      %v466 = vpop.f32.mrb[0].mxu0
      %v467 = vadd.f32 %v271, %v466
      %v468 = vpop.f32.mrb[0].mxu0
      %469 = vmatprep.mubr.f32.mxu0 0.0
      %470 = vmatmul.mubr.f32.gmra.mrb[0].mxu0 %v296
      %v471 = vpop.f32.mrb[0].mxu0
      %v472 = vadd.f32 %v271, %v471
      %v473 = vpop.f32.mrb[0].mxu0
      %474 = vmatprep.mubr.f32.mxu0 0.0
      %475 = vmatmul.mubr.f32.gmra.mrb[0].mxu0 %v299
      %v476 = vpop.f32.mrb[0].mxu0
      %v477 = vadd.f32 %v271, %v476
      %v478 = vpop.f32.mrb[0].mxu0
      %479 = vmatprep.mubr.f32.mxu0 0.0
      %480 = vmatmul.mubr.f32.gmra.mrb[0].mxu0 %v302
      %v481 = vpop.f32.mrb[0].mxu0
      %v482 = vadd.f32 %v271, %v481
      %v483 = vpop.f32.mrb[0].mxu0
      %484 = vmatprep.mubr.f32.mxu0 0.0
      %485 = vmatmul.mubr.f32.gmra.mrb[0].mxu0 %v305
      %v486 = vpop.f32.mrb[0].mxu0
      %v487 = vadd.f32 %v271, %v486
      %v488 = vpop.f32.mrb[0].mxu0
      %489 = vmatprep.mubr.f32.mxu0 0.0
      %490 = vmatmul.mubr.f32.gmra.mrb[0].mxu0 %v308
      %v491 = vpop.f32.mrb[0].mxu0
      %v492 = vadd.f32 %v271, %v491
      %v493 = vpop.f32.mrb[0].mxu0
      %494 = vmatprep.mubr.f32.mxu0 0.0
      %495 = vmatmul.mubr.f32.gmra.mrb[0].mxu0 %v311
      %v496 = vpop.f32.mrb[0].mxu0
      %v497 = vadd.f32 %v271, %v496
      %v498 = vpop.f32.mrb[0].mxu0
      %499 = vmatprep.mubr.f32.mxu0 0.0
      %500 = vmatmul.mubr.f32.gmra.mrb[0].mxu0 %v314
      %v501 = vpop.f32.mrb[0].mxu0
      %v502 = vadd.f32 %v271, %v501
      %v503 = vpop.f32.mrb[0].mxu0
      %504 = vmatprep.mubr.f32.mxu0 0.0
      %505 = vmatmul.mubr.f32.gmra.mrb[0].mxu0 %v317
      %v506 = vpop.f32.mrb[0].mxu0
      %v507 = vadd.f32 %v271, %v506
      %v508 = vpop.f32.mrb[0].mxu0
      %509 = vmatprep.mubr.f32.mxu0 0.0
      %510 = vmatmul.mubr.f32.gmra.mrb[0].mxu0 %v320
      %v511 = vpop.f32.mrb[0].mxu0
      %v512 = vadd.f32 %v271, %v511
      %v513 = vpop.f32.mrb[0].mxu0
      %514 = vmatprep.mubr.f32.mxu0 0.0
      %515 = vmatmul.mubr.f32.gmra.mrb[0].mxu0 %v323
      %v516 = vpop.f32.mrb[0].mxu0
      %v517 = vadd.f32 %v271, %v516
      %v518 = vpop.f32.mrb[0].mxu0
      %519 = vmatprep.mubr.f32.mxu0 0.0
      %520 = vmatmul.mubr.f32.gmra.mrb[0].mxu0 %v326
      %v521 = vpop.f32.mrb[0].mxu0
      %v522 = vadd.f32 %v271, %v521
      %v523 = vpop.f32.mrb[0].mxu0
      %524 = vmatprep.mubr.f32.mxu0 0.0
      %525 = vmatmul.mubr.f32.gmra.mrb[0].mxu0 %v329
      %v526 = vpop.f32.mrb[0].mxu0
      %v527 = vadd.f32 %v271, %v526
      %v528 = vpop.f32.mrb[0].mxu0
      %529 = vmatprep.mubr.f32.mxu0 0.0
      %530 = vmatmul.mubr.f32.gmra.mrb[0].mxu0 %v332
      %v531 = vpop.f32.mrb[0].mxu0
      %v532 = vadd.f32 %v271, %v531
      %v533 = vpop.f32.mrb[0].mxu0
      %534 = vmatprep.mubr.f32.mxu0 0.0
      %535 = vmatmul.mubr.f32.gmra.mrb[0].mxu0 %v335
      %v536 = vpop.f32.mrb[0].mxu0
      %v537 = vadd.f32 %v271, %v536
      %v538 = vpop.f32.mrb[0].mxu0
      %539 = vmatprep.mubr.f32.mxu0 0.0
      %540 = vmatmul.mubr.f32.gmra.mrb[0].mxu0 %v338
      %v541 = vpop.f32.mrb[0].mxu0
      %v542 = vadd.f32 %v271, %v541
      %v543 = vpop.f32.mrb[0].mxu0
      %544 = vmatprep.mubr.f32.mxu0 0.0
      %545 = vmatmul.mubr.f32.gmra.mrb[0].mxu0 %v341
      %v546 = vpop.f32.mrb[0].mxu0
      %v547 = vadd.f32 %v271, %v546
      %v548 = vpop.f32.mrb[0].mxu0
      %549 = vmatprep.mubr.f32.mxu0 0.0
      %550 = vmatmul.mubr.f32.gmra.mrb[0].mxu0 %v344
      %v551 = vpop.f32.mrb[0].mxu0
      %v552 = vadd.f32 %v271, %v551
      %v553 = vpop.f32.mrb[0].mxu0
      %554 = vmatprep.mubr.f32.mxu0 0.0
      %555 = vmatmul.mubr.f32.gmra.mrb[0].mxu0 %v347
      %v556 = vpop.f32.mrb[0].mxu0
      %v557 = vadd.f32 %v271, %v556
      %v558 = vpop.f32.mrb[0].mxu0
      %559 = vmatprep.mubr.f32.mxu0 0.0
      %560 = vmatmul.mubr.f32.gmra.mrb[0].mxu0 %v350
      %v561 = vpop.f32.mrb[0].mxu0
      %v562 = vadd.f32 %v271, %v561
      %v563 = vpop.f32.mrb[0].mxu0
      %564 = vmatprep.mubr.f32.mxu0 0.0
      %565 = vmatmul.mubr.f32.gmra.mrb[0].mxu0 %v353
      %v566 = vpop.f32.mrb[0].mxu0
      %v567 = vadd.f32 %v271, %v566
      %v568 = vpop.f32.mrb[0].mxu0
      %569 = vmatprep.mubr.f32.mxu0 0.0
      %570 = vmatmul.mubr.f32.gmra.mrb[0].mxu0 %v356
      %v571 = vpop.f32.mrb[0].mxu0
      %v572 = vadd.f32 %v271, %v571
      %v573 = vpop.f32.mrb[0].mxu0
      %574 = vmatprep.mubr.f32.mxu0 0.0
      %575 = vmatmul.mubr.f32.gmra.mrb[0].mxu0 %v359
      %v576 = vpop.f32.mrb[0].mxu0
      %v577 = vadd.f32 %v271, %v576
      %v578 = vpop.f32.mrb[0].mxu0
      %579 = vmatprep.mubr.f32.mxu0 0.0
      %580 = vmatmul.mubr.f32.gmra.mrb[0].mxu0 %v362
      %v581 = vpop.f32.mrb[0].mxu0
      %v582 = vadd.f32 %v271, %v581
      %v583 = vpop.f32.mrb[0].mxu0
      %584 = vmatprep.mubr.f32.mxu0 0.0
      %585 = vmatmul.mubr.f32.gmra.mrb[0].mxu0 %v365
      %v586 = vpop.f32.mrb[0].mxu0
      %v587 = vadd.f32 %v271, %v586
      %v588 = vpop.f32.mrb[0].mxu0
      %589 = vmatprep.mubr.f32.mxu0 0.0
      %590 = vmatmul.mubr.f32.gmra.mrb[0].mxu0 %v368
      %v591 = vpop.f32.mrb[0].mxu0
      %v592 = vadd.f32 %v271, %v591
      %v593 = vpop.f32.mrb[0].mxu0
      %594 = vdwg.mxu0
      %v595 = vmul.f32 %v437, 0.5
      %v596 = vmul.f32 %v442, 0.5
      %v597 = vmul.f32 %v447, 0.5
      %v598 = vmul.f32 %v452, 0.5
      %v599 = vmul.f32 %v457, 0.5
      %v600 = vmul.f32 %v462, 0.5
      %v601 = vmul.f32 %v467, 0.5
      %v602 = vmul.f32 %v472, 0.5
      %v603 = vmul.f32 %v477, 0.5
      %v604 = vmul.f32 %v482, 0.5
      %v605 = vmul.f32 %v487, 0.5
      %v606 = vmul.f32 %v492, 0.5
      %v607 = vmul.f32 %v497, 0.5
      %v608 = vmul.f32 %v502, 0.5
      %v609 = vmul.f32 %v507, 0.5
      %v610 = vmul.f32 %v512, 0.5
      %v611 = vmul.f32 %v517, 0.5
      %v612 = vmul.f32 %v522, 0.5
      %v613 = vmul.f32 %v527, 0.5
      %v614 = vmul.f32 %v532, 0.5
      %v615 = vmul.f32 %v537, 0.5
      %v616 = vmul.f32 %v542, 0.5
      %v617 = vmul.f32 %v547, 0.5
      %v618 = vmul.f32 %v552, 0.5
      %v619 = vmul.f32 %v557, 0.5
      %v620 = vmul.f32 %v562, 0.5
      %v621 = vmul.f32 %v567, 0.5
      %v622 = vmul.f32 %v572, 0.5
      %v623 = vmul.f32 %v577, 0.5
      %v624 = vmul.f32 %v582, 0.5
      %v625 = vmul.f32 %v587, 0.5
      %v626 = vmul.f32 %v592, 0.5
      %v627 = vmul.f32 %v437, 0.70710677
      %v628 = vmul.f32 %v442, 0.70710677
      %v629 = vmul.f32 %v447, 0.70710677
      %v630 = vmul.f32 %v452, 0.70710677
      %v631 = vmul.f32 %v457, 0.70710677
      %v632 = vmul.f32 %v462, 0.70710677
      %v633 = vmul.f32 %v467, 0.70710677
      %v634 = vmul.f32 %v472, 0.70710677
      %v635 = vmul.f32 %v477, 0.70710677
      %v636 = vmul.f32 %v482, 0.70710677
      %v637 = vmul.f32 %v487, 0.70710677
      %v638 = vmul.f32 %v492, 0.70710677
      %v639 = vmul.f32 %v497, 0.70710677
      %v640 = vmul.f32 %v502, 0.70710677
      %v641 = vmul.f32 %v507, 0.70710677
      %v642 = vmul.f32 %v512, 0.70710677
      %v643 = vmul.f32 %v517, 0.70710677
      %v644 = vmul.f32 %v522, 0.70710677
      %v645 = vmul.f32 %v527, 0.70710677
      %v646 = vmul.f32 %v532, 0.70710677
      %v647 = vmul.f32 %v537, 0.70710677
      %v648 = vmul.f32 %v542, 0.70710677
      %v649 = vmul.f32 %v547, 0.70710677
      %v650 = vmul.f32 %v552, 0.70710677
      %v651 = vmul.f32 %v557, 0.70710677
      %v652 = vmul.f32 %v562, 0.70710677
      %v653 = vmul.f32 %v567, 0.70710677
      %v654 = vmul.f32 %v572, 0.70710677
      %v655 = vmul.f32 %v577, 0.70710677
      %v656 = vmul.f32 %v582, 0.70710677
      %v657 = vmul.f32 %v587, 0.70710677
      %v658 = vmul.f32 %v592, 0.70710677
      %v659 = verf.f32.pop %v627
      %v660 = verf.f32.pop %v628
      %v661 = verf.f32.pop %v629
      %v662 = verf.f32.pop %v630
      %v663 = verf.f32.pop %v631
      %v664 = verf.f32.pop %v632
      %v665 = verf.f32.pop %v633
      %v666 = verf.f32.pop %v634
      %v667 = verf.f32.pop %v635
      %v668 = verf.f32.pop %v636
      %v669 = verf.f32.pop %v637
      %v670 = verf.f32.pop %v638
      %v671 = verf.f32.pop %v639
      %v672 = verf.f32.pop %v640
      %v673 = verf.f32.pop %v641
      %v674 = verf.f32.pop %v642
      %v675 = verf.f32.pop %v643
      %v676 = verf.f32.pop %v644
      %v677 = verf.f32.pop %v645
      %v678 = verf.f32.pop %v646
      %v679 = verf.f32.pop %v647
      %v680 = verf.f32.pop %v648
      %v681 = verf.f32.pop %v649
      %v682 = verf.f32.pop %v650
      %v683 = verf.f32.pop %v651
      %v684 = verf.f32.pop %v652
      %v685 = verf.f32.pop %v653
      %v686 = verf.f32.pop %v654
      %v687 = verf.f32.pop %v655
      %v688 = verf.f32.pop %v656
      %v689 = verf.f32.pop %v657
      %v690 = verf.f32.pop %v658
      %v691 = vadd.f32 %v659, 1.0
      %v692 = vadd.f32 %v660, 1.0
      %v693 = vadd.f32 %v661, 1.0
      %v694 = vadd.f32 %v662, 1.0
      %v695 = vadd.f32 %v663, 1.0
      %v696 = vadd.f32 %v664, 1.0
      %v697 = vadd.f32 %v665, 1.0
      %v698 = vadd.f32 %v666, 1.0
      %v699 = vadd.f32 %v667, 1.0
      %v700 = vadd.f32 %v668, 1.0
      %v701 = vadd.f32 %v669, 1.0
      %v702 = vadd.f32 %v670, 1.0
      %v703 = vadd.f32 %v671, 1.0
      %v704 = vadd.f32 %v672, 1.0
      %v705 = vadd.f32 %v673, 1.0
      %v706 = vadd.f32 %v674, 1.0
      %v707 = vadd.f32 %v675, 1.0
      %v708 = vadd.f32 %v676, 1.0
      %v709 = vadd.f32 %v677, 1.0
      %v710 = vadd.f32 %v678, 1.0
      %v711 = vadd.f32 %v679, 1.0
      %v712 = vadd.f32 %v680, 1.0
      %v713 = vadd.f32 %v681, 1.0
      %v714 = vadd.f32 %v682, 1.0
      %v715 = vadd.f32 %v683, 1.0
      %v716 = vadd.f32 %v684, 1.0
      %v717 = vadd.f32 %v685, 1.0
      %v718 = vadd.f32 %v686, 1.0
      %v719 = vadd.f32 %v687, 1.0
      %v720 = vadd.f32 %v688, 1.0
      %v721 = vadd.f32 %v689, 1.0
      %v722 = vadd.f32 %v690, 1.0
      %v723 = vmul.f32 %v595, %v691
      %v724 = vmul.f32 %v596, %v692
      %v725 = vmul.f32 %v597, %v693
      %v726 = vmul.f32 %v598, %v694
      %v727 = vmul.f32 %v599, %v695
      %v728 = vmul.f32 %v600, %v696
      %v729 = vmul.f32 %v601, %v697
      %v730 = vmul.f32 %v602, %v698
      %v731 = vmul.f32 %v603, %v699
      %v732 = vmul.f32 %v604, %v700
      %v733 = vmul.f32 %v605, %v701
      %v734 = vmul.f32 %v606, %v702
      %v735 = vmul.f32 %v607, %v703
      %v736 = vmul.f32 %v608, %v704
      %v737 = vmul.f32 %v609, %v705
      %v738 = vmul.f32 %v610, %v706
      %v739 = vmul.f32 %v611, %v707
      %v740 = vmul.f32 %v612, %v708
      %v741 = vmul.f32 %v613, %v709
      %v742 = vmul.f32 %v614, %v710
      %v743 = vmul.f32 %v615, %v711
      %v744 = vmul.f32 %v616, %v712
      %v745 = vmul.f32 %v617, %v713
      %v746 = vmul.f32 %v618, %v714
      %v747 = vmul.f32 %v619, %v715
      %v748 = vmul.f32 %v620, %v716
      %v749 = vmul.f32 %v621, %v717
      %v750 = vmul.f32 %v622, %v718
      %v751 = vmul.f32 %v623, %v719
      %v752 = vmul.f32 %v624, %v720
      %v753 = vmul.f32 %v625, %v721
      %v754 = vmul.f32 %v626, %v722
      %755 = vst [vmem:[#allocation2] sm:$0xff] %v723
      %756 = vst [vmem:[#allocation2 + $0x8] sm:$0xff] %v724
      %757 = vst [vmem:[#allocation2 + $0x10] sm:$0xff] %v725
      %758 = vst [vmem:[#allocation2 + $0x18] sm:$0xff] %v726
      %759 = vst [vmem:[#allocation2 + $0x20] sm:$0xff] %v727
      %760 = vst [vmem:[#allocation2 + $0x28] sm:$0xff] %v728
      %761 = vst [vmem:[#allocation2 + $0x30] sm:$0xff] %v729
      %762 = vst [vmem:[#allocation2 + $0x38] sm:$0xff] %v730
      %763 = vst [vmem:[#allocation2 + $0x40] sm:$0xff] %v731
      %764 = vst [vmem:[#allocation2 + $0x48] sm:$0xff] %v732
      %765 = vst [vmem:[#allocation2 + $0x50] sm:$0xff] %v733
      %766 = vst [vmem:[#allocation2 + $0x58] sm:$0xff] %v734
      %767 = vst [vmem:[#allocation2 + $0x60] sm:$0xff] %v735
      %768 = vst [vmem:[#allocation2 + $0x68] sm:$0xff] %v736
      %769 = vst [vmem:[#allocation2 + $0x70] sm:$0xff] %v737
      %770 = vst [vmem:[#allocation2 + $0x78] sm:$0xff] %v738
      %771 = vst [vmem:[#allocation2 + $0x80] sm:$0xff] %v739
      %772 = vst [vmem:[#allocation2 + $0x88] sm:$0xff] %v740
      %773 = vst [vmem:[#allocation2 + $0x90] sm:$0xff] %v741
      %774 = vst [vmem:[#allocation2 + $0x98] sm:$0xff] %v742
      %775 = vst [vmem:[#allocation2 + $0xa0] sm:$0xff] %v743
      %776 = vst [vmem:[#allocation2 + $0xa8] sm:$0xff] %v744
      %777 = vst [vmem:[#allocation2 + $0xb0] sm:$0xff] %v745
      %778 = vst [vmem:[#allocation2 + $0xb8] sm:$0xff] %v746
      %779 = vst [vmem:[#allocation2 + $0xc0] sm:$0xff] %v747
      %780 = vst [vmem:[#allocation2 + $0xc8] sm:$0xff] %v748
      %781 = vst [vmem:[#allocation2 + $0xd0] sm:$0xff] %v749
      %782 = vst [vmem:[#allocation2 + $0xd8] sm:$0xff] %v750
      %783 = vst [vmem:[#allocation2 + $0xe0] sm:$0xff] %v751
      %784 = vst [vmem:[#allocation2 + $0xe8] sm:$0xff] %v752
      %785 = vst [vmem:[#allocation2 + $0xf0] sm:$0xff] %v753
      %786 = vst [vmem:[#allocation2 + $0xf8] sm:$0xff] %v754
      %v787 = vld [vmem:[#allocation2] sm:$0xff]
      %v788 = vld [vmem:[#allocation2 + $0x8] sm:$0xff]
      %v789 = vld [vmem:[#allocation2 + $0x10] sm:$0xff]
      %v790 = vld [vmem:[#allocation2 + $0x18] sm:$0xff]
      %v791 = vld [vmem:[#allocation2 + $0x20] sm:$0xff]
      %v792 = vld [vmem:[#allocation2 + $0x28] sm:$0xff]
      %v793 = vld [vmem:[#allocation2 + $0x30] sm:$0xff]
      %v794 = vld [vmem:[#allocation2 + $0x38] sm:$0xff]
      %v795 = vld [vmem:[#allocation2 + $0x40] sm:$0xff]
      %v796 = vld [vmem:[#allocation2 + $0x48] sm:$0xff]
      %v797 = vld [vmem:[#allocation2 + $0x50] sm:$0xff]
      %v798 = vld [vmem:[#allocation2 + $0x58] sm:$0xff]
      %v799 = vld [vmem:[#allocation2 + $0x60] sm:$0xff]
      %v800 = vld [vmem:[#allocation2 + $0x68] sm:$0xff]
      %v801 = vld [vmem:[#allocation2 + $0x70] sm:$0xff]
      %v802 = vld [vmem:[#allocation2 + $0x78] sm:$0xff]
      %v803 = vld [vmem:[#allocation2 + $0x80] sm:$0xff]
      %v804 = vld [vmem:[#allocation2 + $0x88] sm:$0xff]
      %v805 = vld [vmem:[#allocation2 + $0x90] sm:$0xff]
      %v806 = vld [vmem:[#allocation2 + $0x98] sm:$0xff]
      %v807 = vld [vmem:[#allocation2 + $0xa0] sm:$0xff]
      %v808 = vld [vmem:[#allocation2 + $0xa8] sm:$0xff]
      %v809 = vld [vmem:[#allocation2 + $0xb0] sm:$0xff]
      %v810 = vld [vmem:[#allocation2 + $0xb8] sm:$0xff]
      %v811 = vld [vmem:[#allocation2 + $0xc0] sm:$0xff]
      %v812 = vld [vmem:[#allocation2 + $0xc8] sm:$0xff]
      %v813 = vld [vmem:[#allocation2 + $0xd0] sm:$0xff]
      %v814 = vld [vmem:[#allocation2 + $0xd8] sm:$0xff]
      %v815 = vld [vmem:[#allocation2 + $0xe0] sm:$0xff]
      %v816 = vld [vmem:[#allocation2 + $0xe8] sm:$0xff]
      %v817 = vld [vmem:[#allocation2 + $0xf0] sm:$0xff]
      %v818 = vld [vmem:[#allocation2 + $0xf8] sm:$0xff]
      %v819 = vld [vmem:[%s3] sm:$0xff]
      %v820 = vld [vmem:[%s3 + $0x8] sm:$0xff]
      %v821 = vld [vmem:[%s3 + $0x10] sm:$0xff]
      %v822 = vld [vmem:[%s3 + $0x18] sm:$0xff]
      %v823 = vld [vmem:[%s3 + $0x20] sm:$0xff]
      %v824 = vld [vmem:[%s3 + $0x28] sm:$0xff]
      %v825 = vld [vmem:[%s3 + $0x30] sm:$0xff]
      %v826 = vld [vmem:[%s3 + $0x38] sm:$0xff]
      %v827 = vld [vmem:[%s3 + $0x40] sm:$0xff]
      %v828 = vld [vmem:[%s3 + $0x48] sm:$0xff]
      %v829 = vld [vmem:[%s3 + $0x50] sm:$0xff]
      %v830 = vld [vmem:[%s3 + $0x58] sm:$0xff]
      %v831 = vld [vmem:[%s3 + $0x60] sm:$0xff]
      %v832 = vld [vmem:[%s3 + $0x68] sm:$0xff]
      %v833 = vld [vmem:[%s3 + $0x70] sm:$0xff]
      %v834 = vld [vmem:[%s3 + $0x78] sm:$0xff]
      %v835 = vld [vmem:[#allocation3] sm:$0x1]
      %v837 = vlaneseq
      %v838 = vshrl.u32 %v837, 7
      %v839 = vsub.s32 0, %v838
      %v840 = vrot.slane %v835, %v839
      %842 = vmatprep.subr.mxu0 0.0
      %843 = vmatpush1.msra.mxu0 %v819
      %844 = vmatprep.subr.mxu0 0.0
      %845 = vmatpush1.msra.mxu0 %v820
      %846 = vmatprep.subr.mxu0 0.0
      %847 = vmatpush1.msra.mxu0 %v821
      %848 = vmatprep.subr.mxu0 0.0
      %849 = vmatpush1.msra.mxu0 %v822
      %850 = vmatprep.subr.mxu0 0.0
      %851 = vmatpush1.msra.mxu0 %v823
      %852 = vmatprep.subr.mxu0 0.0
      %853 = vmatpush1.msra.mxu0 %v824
      %854 = vmatprep.subr.mxu0 0.0
      %855 = vmatpush1.msra.mxu0 %v825
      %856 = vmatprep.subr.mxu0 0.0
      %857 = vmatpush1.msra.mxu0 %v826
      %858 = vmatprep.subr.mxu0 0.0
      %859 = vmatpush1.msra.mxu0 %v827
      %860 = vmatprep.subr.mxu0 0.0
      %861 = vmatpush1.msra.mxu0 %v828
      %862 = vmatprep.subr.mxu0 0.0
      %863 = vmatpush1.msra.mxu0 %v829
      %864 = vmatprep.subr.mxu0 0.0
      %865 = vmatpush1.msra.mxu0 %v830
      %866 = vmatprep.subr.mxu0 0.0
      %867 = vmatpush1.msra.mxu0 %v831
      %868 = vmatprep.subr.mxu0 0.0
      %869 = vmatpush1.msra.mxu0 %v832
      %870 = vmatprep.subr.mxu0 0.0
      %871 = vmatpush1.msra.mxu0 %v833
      %872 = vmatprep.subr.mxu0 0.0
      %873 = vmatpush1.msra.mxu0 %v834
      %874 = vmatprep.subr.mxu0 0.0
      %875 = vmatpush1.msra.mxu0 0.0
      %876 = vmatprep.subr.mxu0 0.0
      %877 = vmatpush1.msra.mxu0 0.0
      %878 = vmatprep.subr.mxu0 0.0
      %879 = vmatpush1.msra.mxu0 0.0
      %880 = vmatprep.subr.mxu0 0.0
      %881 = vmatpush1.msra.mxu0 0.0
      %882 = vmatprep.subr.mxu0 0.0
      %883 = vmatpush1.msra.mxu0 0.0
      %884 = vmatprep.subr.mxu0 0.0
      %885 = vmatpush1.msra.mxu0 0.0
      %886 = vmatprep.subr.mxu0 0.0
      %887 = vmatpush1.msra.mxu0 0.0
      %888 = vmatprep.subr.mxu0 0.0
      %889 = vmatpush1.msra.mxu0 0.0
      %890 = vmatprep.subr.mxu0 0.0
      %891 = vmatpush1.msra.mxu0 0.0
      %892 = vmatprep.subr.mxu0 0.0
      %893 = vmatpush1.msra.mxu0 0.0
      %894 = vmatprep.subr.mxu0 0.0
      %895 = vmatpush1.msra.mxu0 0.0
      %896 = vmatprep.subr.mxu0 0.0
      %897 = vmatpush1.msra.mxu0 0.0
      %898 = vmatprep.subr.mxu0 0.0
      %899 = vmatpush1.msra.mxu0 0.0
      %900 = vmatprep.subr.mxu0 0.0
      %901 = vmatpush1.msra.mxu0 0.0
      %902 = vmatprep.subr.mxu0 0.0
      %903 = vmatpush1.msra.mxu0 0.0
      %904 = vmatprep.subr.mxu0 0.0
      %905 = vmatpush1.msra.mxu0 0.0
      %906 = vmatprep.mubr.f32.mxu0 0.0
      %907 = vmatmul.mubr.f32.gmra.mrb[0].mxu0 %v787
      %v908 = vpop.f32.mrb[0].mxu0
      %v909 = vadd.f32 %v840, %v908
      %v910 = vpop.f32.mrb[0].mxu0
      %911 = vmatprep.mubr.f32.mxu0 0.0
      %912 = vmatmul.mubr.f32.gmra.mrb[0].mxu0 %v788
      %v913 = vpop.f32.mrb[0].mxu0
      %v914 = vadd.f32 %v840, %v913
      %v915 = vpop.f32.mrb[0].mxu0
      %916 = vmatprep.mubr.f32.mxu0 0.0
      %917 = vmatmul.mubr.f32.gmra.mrb[0].mxu0 %v789
      %v918 = vpop.f32.mrb[0].mxu0
      %v919 = vadd.f32 %v840, %v918
      %v920 = vpop.f32.mrb[0].mxu0
      %921 = vmatprep.mubr.f32.mxu0 0.0
      %922 = vmatmul.mubr.f32.gmra.mrb[0].mxu0 %v790
      %v923 = vpop.f32.mrb[0].mxu0
      %v924 = vadd.f32 %v840, %v923
      %v925 = vpop.f32.mrb[0].mxu0
      %926 = vmatprep.mubr.f32.mxu0 0.0
      %927 = vmatmul.mubr.f32.gmra.mrb[0].mxu0 %v791
      %v928 = vpop.f32.mrb[0].mxu0
      %v929 = vadd.f32 %v840, %v928
      %v930 = vpop.f32.mrb[0].mxu0
      %931 = vmatprep.mubr.f32.mxu0 0.0
      %932 = vmatmul.mubr.f32.gmra.mrb[0].mxu0 %v792
      %v933 = vpop.f32.mrb[0].mxu0
      %v934 = vadd.f32 %v840, %v933
      %v935 = vpop.f32.mrb[0].mxu0
      %936 = vmatprep.mubr.f32.mxu0 0.0
      %937 = vmatmul.mubr.f32.gmra.mrb[0].mxu0 %v793
      %v938 = vpop.f32.mrb[0].mxu0
      %v939 = vadd.f32 %v840, %v938
      %v940 = vpop.f32.mrb[0].mxu0
      %941 = vmatprep.mubr.f32.mxu0 0.0
      %942 = vmatmul.mubr.f32.gmra.mrb[0].mxu0 %v794
      %v943 = vpop.f32.mrb[0].mxu0
      %v944 = vadd.f32 %v840, %v943
      %v945 = vpop.f32.mrb[0].mxu0
      %946 = vmatprep.mubr.f32.mxu0 0.0
      %947 = vmatmul.mubr.f32.gmra.mrb[0].mxu0 %v795
      %v948 = vpop.f32.mrb[0].mxu0
      %v949 = vadd.f32 %v840, %v948
      %v950 = vpop.f32.mrb[0].mxu0
      %951 = vmatprep.mubr.f32.mxu0 0.0
      %952 = vmatmul.mubr.f32.gmra.mrb[0].mxu0 %v796
      %v953 = vpop.f32.mrb[0].mxu0
      %v954 = vadd.f32 %v840, %v953
      %v955 = vpop.f32.mrb[0].mxu0
      %956 = vmatprep.mubr.f32.mxu0 0.0
      %957 = vmatmul.mubr.f32.gmra.mrb[0].mxu0 %v797
      %v958 = vpop.f32.mrb[0].mxu0
      %v959 = vadd.f32 %v840, %v958
      %v960 = vpop.f32.mrb[0].mxu0
      %961 = vmatprep.mubr.f32.mxu0 0.0
      %962 = vmatmul.mubr.f32.gmra.mrb[0].mxu0 %v798
      %v963 = vpop.f32.mrb[0].mxu0
      %v964 = vadd.f32 %v840, %v963
      %v965 = vpop.f32.mrb[0].mxu0
      %966 = vmatprep.mubr.f32.mxu0 0.0
      %967 = vmatmul.mubr.f32.gmra.mrb[0].mxu0 %v799
      %v968 = vpop.f32.mrb[0].mxu0
      %v969 = vadd.f32 %v840, %v968
      %v970 = vpop.f32.mrb[0].mxu0
      %971 = vmatprep.mubr.f32.mxu0 0.0
      %972 = vmatmul.mubr.f32.gmra.mrb[0].mxu0 %v800
      %v973 = vpop.f32.mrb[0].mxu0
      %v974 = vadd.f32 %v840, %v973
      %v975 = vpop.f32.mrb[0].mxu0
      %976 = vmatprep.mubr.f32.mxu0 0.0
      %977 = vmatmul.mubr.f32.gmra.mrb[0].mxu0 %v801
      %v978 = vpop.f32.mrb[0].mxu0
      %v979 = vadd.f32 %v840, %v978
      %v980 = vpop.f32.mrb[0].mxu0
      %981 = vmatprep.mubr.f32.mxu0 0.0
      %982 = vmatmul.mubr.f32.gmra.mrb[0].mxu0 %v802
      %v983 = vpop.f32.mrb[0].mxu0
      %v984 = vadd.f32 %v840, %v983
      %v985 = vpop.f32.mrb[0].mxu0
      %986 = vmatprep.mubr.f32.mxu0 0.0
      %987 = vmatmul.mubr.f32.gmra.mrb[0].mxu0 %v803
      %v988 = vpop.f32.mrb[0].mxu0
      %v989 = vadd.f32 %v840, %v988
      %v990 = vpop.f32.mrb[0].mxu0
      %991 = vmatprep.mubr.f32.mxu0 0.0
      %992 = vmatmul.mubr.f32.gmra.mrb[0].mxu0 %v804
      %v993 = vpop.f32.mrb[0].mxu0
      %v994 = vadd.f32 %v840, %v993
      %v995 = vpop.f32.mrb[0].mxu0
      %996 = vmatprep.mubr.f32.mxu0 0.0
      %997 = vmatmul.mubr.f32.gmra.mrb[0].mxu0 %v805
      %v998 = vpop.f32.mrb[0].mxu0
      %v999 = vadd.f32 %v840, %v998
      %v1000 = vpop.f32.mrb[0].mxu0
      %1001 = vmatprep.mubr.f32.mxu0 0.0
      %1002 = vmatmul.mubr.f32.gmra.mrb[0].mxu0 %v806
      %v1003 = vpop.f32.mrb[0].mxu0
      %v1004 = vadd.f32 %v840, %v1003
      %v1005 = vpop.f32.mrb[0].mxu0
      %1006 = vmatprep.mubr.f32.mxu0 0.0
      %1007 = vmatmul.mubr.f32.gmra.mrb[0].mxu0 %v807
      %v1008 = vpop.f32.mrb[0].mxu0
      %v1009 = vadd.f32 %v840, %v1008
      %v1010 = vpop.f32.mrb[0].mxu0
      %1011 = vmatprep.mubr.f32.mxu0 0.0
      %1012 = vmatmul.mubr.f32.gmra.mrb[0].mxu0 %v808
      %v1013 = vpop.f32.mrb[0].mxu0
      %v1014 = vadd.f32 %v840, %v1013
      %v1015 = vpop.f32.mrb[0].mxu0
      %1016 = vmatprep.mubr.f32.mxu0 0.0
      %1017 = vmatmul.mubr.f32.gmra.mrb[0].mxu0 %v809
      %v1018 = vpop.f32.mrb[0].mxu0
      %v1019 = vadd.f32 %v840, %v1018
      %v1020 = vpop.f32.mrb[0].mxu0
      %1021 = vmatprep.mubr.f32.mxu0 0.0
      %1022 = vmatmul.mubr.f32.gmra.mrb[0].mxu0 %v810
      %v1023 = vpop.f32.mrb[0].mxu0
      %v1024 = vadd.f32 %v840, %v1023
      %v1025 = vpop.f32.mrb[0].mxu0
      %1026 = vmatprep.mubr.f32.mxu0 0.0
      %1027 = vmatmul.mubr.f32.gmra.mrb[0].mxu0 %v811
      %v1028 = vpop.f32.mrb[0].mxu0
      %v1029 = vadd.f32 %v840, %v1028
      %v1030 = vpop.f32.mrb[0].mxu0
      %1031 = vmatprep.mubr.f32.mxu0 0.0
      %1032 = vmatmul.mubr.f32.gmra.mrb[0].mxu0 %v812
      %v1033 = vpop.f32.mrb[0].mxu0
      %v1034 = vadd.f32 %v840, %v1033
      %v1035 = vpop.f32.mrb[0].mxu0
      %1036 = vmatprep.mubr.f32.mxu0 0.0
      %1037 = vmatmul.mubr.f32.gmra.mrb[0].mxu0 %v813
      %v1038 = vpop.f32.mrb[0].mxu0
      %v1039 = vadd.f32 %v840, %v1038
      %v1040 = vpop.f32.mrb[0].mxu0
      %1041 = vmatprep.mubr.f32.mxu0 0.0
      %1042 = vmatmul.mubr.f32.gmra.mrb[0].mxu0 %v814
      %v1043 = vpop.f32.mrb[0].mxu0
      %v1044 = vadd.f32 %v840, %v1043
      %v1045 = vpop.f32.mrb[0].mxu0
      %1046 = vmatprep.mubr.f32.mxu0 0.0
      %1047 = vmatmul.mubr.f32.gmra.mrb[0].mxu0 %v815
      %v1048 = vpop.f32.mrb[0].mxu0
      %v1049 = vadd.f32 %v840, %v1048
      %v1050 = vpop.f32.mrb[0].mxu0
      %1051 = vmatprep.mubr.f32.mxu0 0.0
      %1052 = vmatmul.mubr.f32.gmra.mrb[0].mxu0 %v816
      %v1053 = vpop.f32.mrb[0].mxu0
      %v1054 = vadd.f32 %v840, %v1053
      %v1055 = vpop.f32.mrb[0].mxu0
      %1056 = vmatprep.mubr.f32.mxu0 0.0
      %1057 = vmatmul.mubr.f32.gmra.mrb[0].mxu0 %v817
      %v1058 = vpop.f32.mrb[0].mxu0
      %v1059 = vadd.f32 %v840, %v1058
      %v1060 = vpop.f32.mrb[0].mxu0
      %1061 = vmatprep.mubr.f32.mxu0 0.0
      %1062 = vmatmul.mubr.f32.gmra.mrb[0].mxu0 %v818
      %v1063 = vpop.f32.mrb[0].mxu0
      %v1064 = vadd.f32 %v840, %v1063
      %v1065 = vpop.f32.mrb[0].mxu0
      %1066 = vdwg.mxu0
      %vm1067 = vcmask 7168
      %1068 = vst.msk [vmem:[%s228] sm:$0xff] %vm1067, %v909
      %1069 = vst.msk [vmem:[%s228 + $0x8] sm:$0xff] %vm1067, %v914
      %1070 = vst.msk [vmem:[%s228 + $0x10] sm:$0xff] %vm1067, %v919
      %1071 = vst.msk [vmem:[%s228 + $0x18] sm:$0xff] %vm1067, %v924
      %1072 = vst.msk [vmem:[%s228 + $0x20] sm:$0xff] %vm1067, %v929
      %1073 = vst.msk [vmem:[%s228 + $0x28] sm:$0xff] %vm1067, %v934
      %1074 = vst.msk [vmem:[%s228 + $0x30] sm:$0xff] %vm1067, %v939
      %1075 = vst.msk [vmem:[%s228 + $0x38] sm:$0xff] %vm1067, %v944
      %1076 = vst.msk [vmem:[%s228 + $0x40] sm:$0xff] %vm1067, %v949
      %1077 = vst.msk [vmem:[%s228 + $0x48] sm:$0xff] %vm1067, %v954
      %1078 = vst.msk [vmem:[%s228 + $0x50] sm:$0xff] %vm1067, %v959
      %1079 = vst.msk [vmem:[%s228 + $0x58] sm:$0xff] %vm1067, %v964
      %1080 = vst.msk [vmem:[%s228 + $0x60] sm:$0xff] %vm1067, %v969
      %1081 = vst.msk [vmem:[%s228 + $0x68] sm:$0xff] %vm1067, %v974
      %1082 = vst.msk [vmem:[%s228 + $0x70] sm:$0xff] %vm1067, %v979
      %1083 = vst.msk [vmem:[%s228 + $0x78] sm:$0xff] %vm1067, %v984
      %1084 = vst.msk [vmem:[%s228 + $0x80] sm:$0xff] %vm1067, %v989
      %1085 = vst.msk [vmem:[%s228 + $0x88] sm:$0xff] %vm1067, %v994
      %1086 = vst.msk [vmem:[%s228 + $0x90] sm:$0xff] %vm1067, %v999
      %1087 = vst.msk [vmem:[%s228 + $0x98] sm:$0xff] %vm1067, %v1004
      %1088 = vst.msk [vmem:[%s228 + $0xa0] sm:$0xff] %vm1067, %v1009
      %1089 = vst.msk [vmem:[%s228 + $0xa8] sm:$0xff] %vm1067, %v1014
      %1090 = vst.msk [vmem:[%s228 + $0xb0] sm:$0xff] %vm1067, %v1019
      %1091 = vst.msk [vmem:[%s228 + $0xb8] sm:$0xff] %vm1067, %v1024
      %1092 = vst.msk [vmem:[%s228 + $0xc0] sm:$0xff] %vm1067, %v1029
      %1093 = vst.msk [vmem:[%s228 + $0xc8] sm:$0xff] %vm1067, %v1034
      %1094 = vst.msk [vmem:[%s228 + $0xd0] sm:$0xff] %vm1067, %v1039
      %1095 = vst.msk [vmem:[%s228 + $0xd8] sm:$0xff] %vm1067, %v1044
      %1096 = vst.msk [vmem:[%s228 + $0xe0] sm:$0xff] %vm1067, %v1049
      %1097 = vst.msk [vmem:[%s228 + $0xe8] sm:$0xff] %vm1067, %v1054
      %1098 = vst.msk [vmem:[%s228 + $0xf0] sm:$0xff] %vm1067, %v1059
      %1099 = vst.msk [vmem:[%s228 + $0xf8] sm:$0xff] %vm1067, %v1064
      %s1100 = smul.u32 32, %s18
      %p1101 = scmp.lt.s32.totalorder %s1100, 63
      %s1102 = scalar_select %p1101, %s1100, 63
      %s1103 = smul.addr %s1102, 8
      %s1104 = scalar_lea.vmem %s5, %s1103
      // Predicated region
      $region41: #{fno2d_forward.19} parent=39 // pred_check
        %p1105 = pneg %p146
      $region42: #{fno2d_forward.19} parent=39 // pred_check_branch
        %1107 = sbr.rel (%p1105) target = $region44
      $region43: #{fno2d_forward.19} parent=39 // pred_region
        %s1108 = smul.u32 32, %s18
      $region44: #{fno2d_forward.19} parent=39 // pred_fallthru
        _
    $region40: #{fno2d_forward.19} parent=5 // pred_fallthru
      _
    %p1109 = scmp.le.s32.totalorder 2, %s13
    // Predicated region
    $region45: #{fno2d_forward.19} parent=5 // pred_check
      %p1110 = pneg %p1109
    $region46: #{fno2d_forward.19} parent=5 // pred_check_branch
      %1112 = sbr.rel (%p1110) target = $region48
    $region47: #{fno2d_forward.19} parent=5 // pred_region
      %s1113 = ssub.s32 %s13, 2
      // Predicated region
      $region49: #{fno2d_forward.19} parent=47 // pred_check
        %p1114 = pneg %p152
      $region50: #{fno2d_forward.19} parent=47 // pred_check_branch
        %1116 = sbr.rel (%p1114) target = $region52
      $region51: #{fno2d_forward.19} parent=47 // pred_region
        %s1117 = smul.u32 32, %s19
        %p1118 = scmp.lt.s32.totalorder %s1117, 63
        %s1119 = scalar_select %p1118, %s1117, 63
        %s1120 = smul.addr %s1119, 8
        %s1121 = scalar_lea.vmem %s5, %s1120
      $region52: #{fno2d_forward.19} parent=47 // pred_fallthru
        _
    $region48: #{fno2d_forward.19} parent=5 // pred_fallthru
      _
  $region6: #{fno2d_forward.19} parent=0 // loop_footer
    %s17 = sadd.s32 1, %s13
  $region7: #{fno2d_forward.19} parent=0 // loop_footer_branch
    %12 = sbr.rel target = $region3
  $region8: #{fno2d_forward.19} parent=0 // loop_exit
    _

</llo_original>
